<compile_context>
chip_gen: v5e
topology: v5e:2x2
jax: 0.10.0
libtpu: 0.0.40
codegen_flags: <defaults>
</compile_context>

<pallas_src>
import jax
import jax.numpy as jnp
from jax.experimental import pallas as pl
from jax.experimental.pallas import tpu as pltpu

# Physical constants (module-level globals l1,l2,m1,m2,g,k1 in the reference repo).
L1, L2, M1, M2, G, K1 = 1.0, 1.0, 1.0, 1.0, 9.81, 0.5

HID = 32                     # hidden width of the learned potential V: 2 -> HID -> 1
LANE = 128                   # TPU lane width
ROWS = 8                     # sublane rows per inner chunk (8*128 = 1024 samples)
MAX_CHUNKS_PER_BLOCK = 16    # block up to (4, 128, 128) f32 (~256 KiB), trivially in VMEM


def _cdiv(a, b):
    return -(-a // b)


def _num_tensorcores():
    """2 for megacore-style chips (v7x / v4), else 1. Fallback 1 is always correct."""
    try:
        kind = jax.devices()[0].device_kind.lower()
    except Exception:
        return 1
    if "v7" in kind or "7x" in kind or "v4" in kind:
        return 2
    return 1


def _dp_kernel(scal_ref, w_ref, x_ref, o_ref):
    # ---- all SMEM scalar reads hoisted out of the chunk loop (issued once per step) ----
    absT = scal_ref[0]
    a_E = scal_ref[1]
    E_des = scal_ref[2]
    b_dmp = scal_ref[3]
    b2 = scal_ref[4]
    S1 = scal_ref[5]          # sum_j w2[j]*W1[0,j]
    S2 = scal_ref[6]          # sum_j w2[j]*W1[1,j]

    # w_ref rows: 0: W1[0,:]  1: W1[1,:]  2: b1  3: w2  4: w2*W1[0,:]  5: w2*W1[1,:]
    W10 = [w_ref[0, j] for j in range(HID)]
    W11 = [w_ref[1, j] for j in range(HID)]
    B1 = [w_ref[2, j] for j in range(HID)]
    W2 = [w_ref[3, j] for j in range(HID)]
    W2W10 = [w_ref[4, j] for j in range(HID)]
    W2W11 = [w_ref[5, j] for j in range(HID)]

    n_chunks = x_ref.shape[1] // ROWS   # static

    @pl.loop(0, n_chunks)
    def _(c):
        r0 = pl.multiple_of(c * ROWS, ROWS)
        q1 = x_ref[0, pl.ds(r0, ROWS), :]        # (ROWS, LANE) = one vreg each
        q2 = x_ref[1, pl.ds(r0, ROWS), :]
        p1 = x_ref[2, pl.ds(r0, ROWS), :]
        p2 = x_ref[3, pl.ds(r0, ROWS), :]

        # ---- learned potential V(q) and analytic gradient (u = -dV/dq) ----
        zero = jnp.zeros_like(q1)
        V = zero
        g1a = zero
        g2a = zero
        for j in range(HID):             # unrolled; scalar weights, VPU FMAs only
            z = q1 * W10[j] + q2 * W11[j] + B1[j]
            h = jnp.tanh(z)
            hh = h * h
            V = V + h * W2[j]
            g1a = g1a + hh * W2W10[j]
            g2a = g2a + hh * W2W11[j]
        V = V + b2
        g1 = S1 - g1a                    # dV/dq1 = sum_j (1-h^2) w2 w1[0]  == S1 - sum h^2 ...
        g2 = S2 - g2a                    # dV/dq2

        # ---- trig once; sums via VPU identities ----
        s1 = jnp.sin(q1)
        c1 = jnp.cos(q1)
        s2 = jnp.sin(q2)
        c2 = jnp.cos(q2)
        s12 = s1 * c2 + c1 * s2          # sin(q1+q2)
        c12 = c1 * c2 - s1 * s2          # cos(q1+q2)
        cos2q2 = 2.0 * c2 * c2 - 1.0     # cos(2*q2)

        # ---- mass tensor / inverse; DEN == DET == L1^2 L2^2 M2 * A for this system ----
        M11 = 2.0 * c2 * (L1 * L2 * M2) + (L2 * L2 * M2 + L1 * L1 * (M1 + M2))
        M12 = (L2 * M2) * (c2 * L1 + L2)
        M22c = L2 * L2 * M2
        DEN = M11 * M22c - M12 * M12
        r = pl.reciprocal(DEN, approx=True)
        invDEN = r * (2.0 - DEN * r)     # one Newton step -> ~f32 accuracy

        dq1dt = (M22c * p1 - M12 * p2) * invDEN
        dq2dt = (M11 * p2 - M12 * p1) * invDEN
        pMp = p1 * dq1dt + p2 * dq2dt    # p^T M^{-1} p

        pos = pMp > 0.0
        rinv = jax.lax.rsqrt(jnp.where(pos, pMp, 1.0))
        phat1 = jnp.where(pos, p1 * rinv, p1)
        phat2 = jnp.where(pos, p2 * rinv, p2)

        # ---- total energy and energy-based stabilizing control ----
        dq2h = 0.5 * jnp.pi - q2
        Pot = (-G) * (c12 * (L2 * M2) + c1 * (L1 * (M1 + M2))) + K1 * dq2h * dq2h
        E = Pot + 0.5 * pMp + V
        aeDiff = a_E * (E_des - E)

        # TODO(synk): momentum-matching term F_M = a_M * p_des needs the external
        # numJ/cuberoot helpers + data-dependent argmin over x_num; wrapper asserts a_M==0.
        u1 = aeDiff * phat1 - g1
        u2 = aeDiff * phat2 - g2

        # ---- Hamiltonian dynamics ----
        dp1dt = (-G) * (s12 * (L2 * M2) + s1 * (L1 * (M1 + M2))) + u1 - b_dmp * dq1dt

        A = M1 + s2 * s2 * M2
        A2 = A * A
        # -1/(L1^2 L2^2 A^2) == -(L1 L2 M2)^2 * invDEN^2   (no second reciprocal needed)
        neg_pref = -(L1 * L1 * L2 * L2 * M2 * M2) * invDEN * invDEN
        term1 = -(p2 * p2) * s2 * (c2 * L1 + L2) * (c2 * (L2 * M2) + L1 * (M1 + M2))
        term2 = (0.5 * L2) * p1 * p2 * s2 * (
            4.0 * (L2 * M2) * c2 + L1 * (2.0 * M1 + (3.0 + cos2q2) * M2))
        term3 = (L2 * L2) * (-(c2 * s2 * M2) * p1 * p1
                             + (L1 * L1) * A2 * ((G * L2 * M2) * s12
                                                 - K1 * (jnp.pi - 2.0 * q2)))
        dp2dt = neg_pref * (term1 + term2 + term3) + u2 - b_dmp * dq2dt

        # four lane-dense, (8,128)-aligned, unmasked full-tile stores per chunk
        o_ref[0, pl.ds(r0, ROWS), :] = absT * dq1dt
        o_ref[1, pl.ds(r0, ROWS), :] = absT * dq2dt
        o_ref[2, pl.ds(r0, ROWS), :] = absT * dp1dt
        o_ref[3, pl.ds(r0, ROWS), :] = absT * dp2dt


def _e_des(params):
    # E_des at x0 = x_fun(0) = (0,0,0,0): autonomous energy + V(q0).
    b1, w2, b2 = params["b1"], params["w2"], params["b2"]
    V0 = jnp.sum(w2 * jnp.tanh(b1)) + b2          # W1 q0 vanishes at q0 = 0
    Pot0 = -G * (L2 * M2 + L1 * (M1 + M2)) + K1 * (0.5 * jnp.pi) ** 2
    return Pot0 + V0


def stabilized_system_forward(t, x, params):
    """forward(t, x) of StabilizedSystemDoublePendulum (V_only=False)."""
    del t  # unused in this branch, kept for API parity
    B = x.shape[0]

    # F_M (momentum matching) is not implemented -> only valid when a_M == 0.
    a_M = params.get("a_M", 0.0)
    try:
        a_M_val = float(a_M)
    except Exception:
        a_M_val = None  # TODO(synk): cannot verify a_M==0 for traced values
    if a_M_val is not None and a_M_val != 0.0:
        raise NotImplementedError("F_M term (a_M != 0) is not implemented in the Pallas kernel")

    w1 = params["w1"].astype(jnp.float32)                    # (2, HID)
    b1 = params["b1"].reshape(HID).astype(jnp.float32)
    w2 = params["w2"].reshape(HID).astype(jnp.float32)

    absT = jnp.abs(params["T"][0])
    S1 = jnp.sum(w2 * w1[0])
    S2 = jnp.sum(w2 * w1[1])
    scalars = jnp.stack([
        absT,
        jnp.asarray(params["a_E"], jnp.float32),
        jnp.asarray(_e_des(params), jnp.float32),
        jnp.asarray(params["b_damp"], jnp.float32),
        jnp.asarray(params["b2"], jnp.float32),
        S1, S2,
        jnp.float32(0.0),
    ]).astype(jnp.float32)

    wstack = jnp.stack([w1[0], w1[1], b1, w2, w2 * w1[0], w2 * w1[1]], axis=0)  # (6, HID)

    # ---- batch-along-lanes layout + block/grid heuristic ----
    n_rows = _cdiv(B, LANE)
    n_chunks = _cdiv(n_rows, ROWS)
    n_tc = _num_tensorcores()

    if n_chunks <= MAX_CHUNKS_PER_BLOCK and (n_tc == 1 or n_chunks < 2):
        # single largest block (1-TC chips, or tiny batches where splitting is pointless)
        grid = 1
        cpb = n_chunks
    else:
        grid = max(n_tc, _cdiv(n_chunks, MAX_CHUNKS_PER_BLOCK))
        grid = _cdiv(grid, n_tc) * n_tc          # multiple of #TensorCores (even on v7x)
        cpb = _cdiv(n_chunks, grid)

    sub = cpb * ROWS                             # sublane rows per block (multiple of 8)
    n_rows_p = grid * sub
    Bp = n_rows_p * LANE

    xt = jnp.transpose(x.astype(jnp.float32))                # (4, B)
    xt = jnp.pad(xt, ((0, 0), (0, Bp - B)))                  # (4, Bp)
    x3 = xt.reshape(4, n_rows_p, LANE)

    out3 = pl.pallas_call(
        _dp_kernel,
        out_shape=jax.ShapeDtypeStruct((4, n_rows_p, LANE), jnp.float32),
        grid_spec=pltpu.PrefetchScalarGridSpec(
            num_scalar_prefetch=0,
            grid=(grid,),
            in_specs=[
                pl.BlockSpec(memory_space=pltpu.MemorySpace.SMEM),   # scalars (8,)
                pl.BlockSpec(memory_space=pltpu.MemorySpace.SMEM),   # weights (6, HID)
                pl.BlockSpec((4, sub, LANE), lambda i: (0, i, 0)),   # x, batch in lanes
            ],
            out_specs=pl.BlockSpec((4, sub, LANE), lambda i: (0, i, 0)),
        ),
        compiler_params=pltpu.CompilerParams(
            dimension_semantics=("parallel",)),
    )(scalars, wstack, x3)

    return jnp.transpose(out3.reshape(4, Bp)[:, :B])          # (B, 4)


def _reference_forward(t, x, params):
    """Pure-JAX reference with identical semantics (for validation)."""
    del t
    w1, b1, w2, b2 = params["w1"], params["b1"], params["w2"], params["b2"]
    absT = jnp.abs(params["T"][0])
    a_E = params["a_E"]
    b_dmp = params["b_damp"]
    E_des = _e_des(params)

    q1, q2, p1, p2 = x[:, 0:1], x[:, 1:2], x[:, 2:3], x[:, 3:4]
    h = jnp.tanh(q1 * w1[0] + q2 * w1[1] + b1)
    V = jnp.sum(h * w2, axis=-1, keepdims=True) + b2
    gh = (1.0 - h * h) * w2
    dVdq1 = jnp.sum(gh * w1[0], axis=-1, keepdims=True)
    dVdq2 = jnp.sum(gh * w1[1], axis=-1, keepdims=True)

    c2, s2 = jnp.cos(q2), jnp.sin(q2)
    M11 = 2.0 * c2 * L1 * L2 * M2 + L2 ** 2 * M2 + L1 ** 2 * (M1 + M2)
    M12 = L2 * (c2 * L1 + L2) * M2
    M22 = L2 ** 2 * M2
    DEN = M11 * M22 - M12 * M12
    iM11, iM12, iM22 = M22 / DEN, -M12 / DEN, M11 / DEN
    pMp = iM11 * p1 * p1 + 2.0 * iM12 * p1 * p2 + iM22 * p2 * p2
    pnorm = jnp.sqrt(pMp)
    safe = jnp.where(pnorm > 0.0, pnorm, 1.0)
    phat1 = jnp.where(pnorm > 0.0, p1 / safe, p1)
    phat2 = jnp.where(pnorm > 0.0, p2 / safe, p2)
    Pot = (-G * (jnp.cos(q1 + q2) * L2 * M2 + jnp.cos(q1) * L1 * (M1 + M2))
           + K1 * (0.5 * jnp.pi - q2) ** 2)
    E = Pot + 0.5 * pMp + V
    Diff_E = E_des - E
    u1 = -dVdq1 + a_E * Diff_E * phat1
    u2 = -dVdq2 + a_E * Diff_E * phat2

    DET = (L1 ** 2 * L2 ** 2 * M2 ** 2 * (-(c2 * c2))
           + L1 ** 2 * L2 ** 2 * M2 ** 2 + L1 ** 2 * L2 ** 2 * M1 * M2)
    dq1dt = L2 ** 2 * M2 * p1 / DET - L2 * M2 * p2 * (L1 * c2 + L2) / DET
    dq2dt = (p2 * (2.0 * L2 * L1 * M2 * c2 + L1 ** 2 * (M1 + M2) + L2 ** 2 * M2) / DET
             - L2 * M2 * p1 * (L1 * c2 + L2) / DET)
    dp1dt = (-G * (jnp.sin(q1 + q2) * L2 * M2 + jnp.sin(q1) * L1 * (M1 + M2))
             + u1 - b_dmp * dq1dt)
    A = M1 + s2 * s2 * M2
    term1 = -p2 * p2 * s2 * (c2 * L1 + L2) * (c2 * L2 * M2 + L1 * (M1 + M2))
    term2 = (0.5 * p1 * p2 * s2 * L2
             * (4.0 * c2 * L2 * M2 + L1 * (2.0 * M1 + (3.0 + jnp.cos(2.0 * q2)) * M2)))
    term3 = (L2 ** 2 * (-c2 * p1 * p1 * s2 * M2
                        + L1 ** 2 * A * A * (G * jnp.sin(q1 + q2) * L2 * M2
                                             - K1 * (jnp.pi - 2.0 * q2))))
    dp2dt = (-(1.0 / (L1 ** 2 * L2 ** 2 * A * A)) * (term1 + term2 + term3)
             + u2 - b_dmp * dq2dt)
    return absT * jnp.concatenate([dq1dt, dq2dt, dp1dt, dp2dt], axis=1)


if __name__ == "__main__":
    key = jax.random.PRNGKey(0)
    kx, k1_, k2_, k3_, kx2 = jax.random.split(key, 5)

    params = {
        # learned potential V: 2 -> HID -> 1 (deterministic synthetic weights)
        "w1": (0.5 * jax.random.normal(k1_, (2, HID))).astype(jnp.float32),
        "b1": (0.1 * jax.random.normal(k2_, (HID,))).astype(jnp.float32),
        "w2": (0.5 * jax.random.normal(k3_, (HID,))).astype(jnp.float32),
        "b2": jnp.float32(0.0),
        # nn.Parameter T initialized to 1.0 in __init__
        "T": jnp.array([1.0], dtype=jnp.float32),
        # controller gains (module defaults are 0.0; a_E > 0 exercises the F_E branch)
        "a_E": jnp.float32(0.5),
        "a_M": 0.0,
        # damping self.b = 0
        "b_damp": jnp.float32(0.0),
    }

    t = jnp.float32(0.0)

    # small batch (single-block, single-chunk path)
    x_small = jax.random.normal(kx, (8, 4), dtype=jnp.float32)
    out_small = stabilized_system_forward(t, x_small, params)
    jax.block_until_ready(out_small)
    ref_small = _reference_forward(t, x_small, params)
    assert out_small.shape == (8, 4) and out_small.dtype == jnp.float32
    assert jnp.allclose(out_small, ref_small, rtol=2e-4, atol=2e-4), "small-batch mismatch"

    # larger ragged batch (exercises padding + multi-chunk inner loop / multi-block grid)
    x_big = jax.random.normal(kx2, (1200, 4), dtype=jnp.float32)
    out_big = stabilized_system_forward(t, x_big, params)
    jax.block_until_ready(out_big)
    ref_big = _reference_forward(t, x_big, params)
    assert out_big.shape == (1200, 4)
    assert jnp.allclose(out_big, ref_big, rtol=2e-4, atol=2e-4), "large-batch mismatch"

    print("KERNEL_OK")
</pallas_src>

<mosaic_0001>
module attributes {stable_mosaic.version = 11 : i64} {
  func.func @_dp_kernel(%arg0: i32, %arg1: memref<8xf32, #tpu.memory_space<smem>>, %arg2: memref<6x32xf32, #tpu.memory_space<smem>>, %arg3: memref<4x8x128xf32, #tpu.memory_space<vmem>>, %arg4: memref<4x8x128xf32, #tpu.memory_space<vmem>>) attributes {dimension_semantics = [#tpu.dimension_semantics<parallel>], iteration_bounds = array<i64: 1>, scalar_prefetch = 0 : i64, scratch_operands = 0 : i64, tpu.core_type = #tpu.core_type<tc>, window_params = [{transform_indices = @transform_0, window_bounds = array<i64: 8>}, {transform_indices = @transform_1, window_bounds = array<i64: 6, 32>}, {transform_indices = @transform_2, window_bounds = array<i64: 4, 8, 128>}, {transform_indices = @transform_3, window_bounds = array<i64: 4, 8, 128>}]} {
    %c0 = arith.constant 0 : index
    %0 = memref.load %arg1[%c0] : memref<8xf32, #tpu.memory_space<smem>>
    %c1 = arith.constant 1 : index
    %1 = memref.load %arg1[%c1] : memref<8xf32, #tpu.memory_space<smem>>
    %c2 = arith.constant 2 : index
    %2 = memref.load %arg1[%c2] : memref<8xf32, #tpu.memory_space<smem>>
    %c3 = arith.constant 3 : index
    %3 = memref.load %arg1[%c3] : memref<8xf32, #tpu.memory_space<smem>>
    %c4 = arith.constant 4 : index
    %4 = memref.load %arg1[%c4] : memref<8xf32, #tpu.memory_space<smem>>
    %c5 = arith.constant 5 : index
    %5 = memref.load %arg1[%c5] : memref<8xf32, #tpu.memory_space<smem>>
    %c6 = arith.constant 6 : index
    %6 = memref.load %arg1[%c6] : memref<8xf32, #tpu.memory_space<smem>>
    %c0_0 = arith.constant 0 : index
    %c0_1 = arith.constant 0 : index
    %7 = memref.load %arg2[%c0_0, %c0_1] : memref<6x32xf32, #tpu.memory_space<smem>>
    %c0_2 = arith.constant 0 : index
    %c1_3 = arith.constant 1 : index
    %8 = memref.load %arg2[%c0_2, %c1_3] : memref<6x32xf32, #tpu.memory_space<smem>>
    %c0_4 = arith.constant 0 : index
    %c2_5 = arith.constant 2 : index
    %9 = memref.load %arg2[%c0_4, %c2_5] : memref<6x32xf32, #tpu.memory_space<smem>>
    %c0_6 = arith.constant 0 : index
    %c3_7 = arith.constant 3 : index
    %10 = memref.load %arg2[%c0_6, %c3_7] : memref<6x32xf32, #tpu.memory_space<smem>>
    %c0_8 = arith.constant 0 : index
    %c4_9 = arith.constant 4 : index
    %11 = memref.load %arg2[%c0_8, %c4_9] : memref<6x32xf32, #tpu.memory_space<smem>>
    %c0_10 = arith.constant 0 : index
    %c5_11 = arith.constant 5 : index
    %12 = memref.load %arg2[%c0_10, %c5_11] : memref<6x32xf32, #tpu.memory_space<smem>>
    %c0_12 = arith.constant 0 : index
    %c6_13 = arith.constant 6 : index
    %13 = memref.load %arg2[%c0_12, %c6_13] : memref<6x32xf32, #tpu.memory_space<smem>>
    %c0_14 = arith.constant 0 : index
    %c7 = arith.constant 7 : index
    %14 = memref.load %arg2[%c0_14, %c7] : memref<6x32xf32, #tpu.memory_space<smem>>
    %c0_15 = arith.constant 0 : index
    %c8 = arith.constant 8 : index
    %15 = memref.load %arg2[%c0_15, %c8] : memref<6x32xf32, #tpu.memory_space<smem>>
    %c0_16 = arith.constant 0 : index
    %c9 = arith.constant 9 : index
    %16 = memref.load %arg2[%c0_16, %c9] : memref<6x32xf32, #tpu.memory_space<smem>>
    %c0_17 = arith.constant 0 : index
    %c10 = arith.constant 10 : index
    %17 = memref.load %arg2[%c0_17, %c10] : memref<6x32xf32, #tpu.memory_space<smem>>
    %c0_18 = arith.constant 0 : index
    %c11 = arith.constant 11 : index
    %18 = memref.load %arg2[%c0_18, %c11] : memref<6x32xf32, #tpu.memory_space<smem>>
    %c0_19 = arith.constant 0 : index
    %c12 = arith.constant 12 : index
    %19 = memref.load %arg2[%c0_19, %c12] : memref<6x32xf32, #tpu.memory_space<smem>>
    %c0_20 = arith.constant 0 : index
    %c13 = arith.constant 13 : index
    %20 = memref.load %arg2[%c0_20, %c13] : memref<6x32xf32, #tpu.memory_space<smem>>
    %c0_21 = arith.constant 0 : index
    %c14 = arith.constant 14 : index
    %21 = memref.load %arg2[%c0_21, %c14] : memref<6x32xf32, #tpu.memory_space<smem>>
    %c0_22 = arith.constant 0 : index
    %c15 = arith.constant 15 : index
    %22 = memref.load %arg2[%c0_22, %c15] : memref<6x32xf32, #tpu.memory_space<smem>>
    %c0_23 = arith.constant 0 : index
    %c16 = arith.constant 16 : index
    %23 = memref.load %arg2[%c0_23, %c16] : memref<6x32xf32, #tpu.memory_space<smem>>
    %c0_24 = arith.constant 0 : index
    %c17 = arith.constant 17 : index
    %24 = memref.load %arg2[%c0_24, %c17] : memref<6x32xf32, #tpu.memory_space<smem>>
    %c0_25 = arith.constant 0 : index
    %c18 = arith.constant 18 : index
    %25 = memref.load %arg2[%c0_25, %c18] : memref<6x32xf32, #tpu.memory_space<smem>>
    %c0_26 = arith.constant 0 : index
    %c19 = arith.constant 19 : index
    %26 = memref.load %arg2[%c0_26, %c19] : memref<6x32xf32, #tpu.memory_space<smem>>
    %c0_27 = arith.constant 0 : index
    %c20 = arith.constant 20 : index
    %27 = memref.load %arg2[%c0_27, %c20] : memref<6x32xf32, #tpu.memory_space<smem>>
    %c0_28 = arith.constant 0 : index
    %c21 = arith.constant 21 : index
    %28 = memref.load %arg2[%c0_28, %c21] : memref<6x32xf32, #tpu.memory_space<smem>>
    %c0_29 = arith.constant 0 : index
    %c22 = arith.constant 22 : index
    %29 = memref.load %arg2[%c0_29, %c22] : memref<6x32xf32, #tpu.memory_space<smem>>
    %c0_30 = arith.constant 0 : index
    %c23 = arith.constant 23 : index
    %30 = memref.load %arg2[%c0_30, %c23] : memref<6x32xf32, #tpu.memory_space<smem>>
    %c0_31 = arith.constant 0 : index
    %c24 = arith.constant 24 : index
    %31 = memref.load %arg2[%c0_31, %c24] : memref<6x32xf32, #tpu.memory_space<smem>>
    %c0_32 = arith.constant 0 : index
    %c25 = arith.constant 25 : index
    %32 = memref.load %arg2[%c0_32, %c25] : memref<6x32xf32, #tpu.memory_space<smem>>
    %c0_33 = arith.constant 0 : index
    %c26 = arith.constant 26 : index
    %33 = memref.load %arg2[%c0_33, %c26] : memref<6x32xf32, #tpu.memory_space<smem>>
    %c0_34 = arith.constant 0 : index
    %c27 = arith.constant 27 : index
    %34 = memref.load %arg2[%c0_34, %c27] : memref<6x32xf32, #tpu.memory_space<smem>>
    %c0_35 = arith.constant 0 : index
    %c28 = arith.constant 28 : index
    %35 = memref.load %arg2[%c0_35, %c28] : memref<6x32xf32, #tpu.memory_space<smem>>
    %c0_36 = arith.constant 0 : index
    %c29 = arith.constant 29 : index
    %36 = memref.load %arg2[%c0_36, %c29] : memref<6x32xf32, #tpu.memory_space<smem>>
    %c0_37 = arith.constant 0 : index
    %c30 = arith.constant 30 : index
    %37 = memref.load %arg2[%c0_37, %c30] : memref<6x32xf32, #tpu.memory_space<smem>>
    %c0_38 = arith.constant 0 : index
    %c31 = arith.constant 31 : index
    %38 = memref.load %arg2[%c0_38, %c31] : memref<6x32xf32, #tpu.memory_space<smem>>
    %c1_39 = arith.constant 1 : index
    %c0_40 = arith.constant 0 : index
    %39 = memref.load %arg2[%c1_39, %c0_40] : memref<6x32xf32, #tpu.memory_space<smem>>
    %c1_41 = arith.constant 1 : index
    %c1_42 = arith.constant 1 : index
    %40 = memref.load %arg2[%c1_41, %c1_42] : memref<6x32xf32, #tpu.memory_space<smem>>
    %c1_43 = arith.constant 1 : index
    %c2_44 = arith.constant 2 : index
    %41 = memref.load %arg2[%c1_43, %c2_44] : memref<6x32xf32, #tpu.memory_space<smem>>
    %c1_45 = arith.constant 1 : index
    %c3_46 = arith.constant 3 : index
    %42 = memref.load %arg2[%c1_45, %c3_46] : memref<6x32xf32, #tpu.memory_space<smem>>
    %c1_47 = arith.constant 1 : index
    %c4_48 = arith.constant 4 : index
    %43 = memref.load %arg2[%c1_47, %c4_48] : memref<6x32xf32, #tpu.memory_space<smem>>
    %c1_49 = arith.constant 1 : index
    %c5_50 = arith.constant 5 : index
    %44 = memref.load %arg2[%c1_49, %c5_50] : memref<6x32xf32, #tpu.memory_space<smem>>
    %c1_51 = arith.constant 1 : index
    %c6_52 = arith.constant 6 : index
    %45 = memref.load %arg2[%c1_51, %c6_52] : memref<6x32xf32, #tpu.memory_space<smem>>
    %c1_53 = arith.constant 1 : index
    %c7_54 = arith.constant 7 : index
    %46 = memref.load %arg2[%c1_53, %c7_54] : memref<6x32xf32, #tpu.memory_space<smem>>
    %c1_55 = arith.constant 1 : index
    %c8_56 = arith.constant 8 : index
    %47 = memref.load %arg2[%c1_55, %c8_56] : memref<6x32xf32, #tpu.memory_space<smem>>
    %c1_57 = arith.constant 1 : index
    %c9_58 = arith.constant 9 : index
    %48 = memref.load %arg2[%c1_57, %c9_58] : memref<6x32xf32, #tpu.memory_space<smem>>
    %c1_59 = arith.constant 1 : index
    %c10_60 = arith.constant 10 : index
    %49 = memref.load %arg2[%c1_59, %c10_60] : memref<6x32xf32, #tpu.memory_space<smem>>
    %c1_61 = arith.constant 1 : index
    %c11_62 = arith.constant 11 : index
    %50 = memref.load %arg2[%c1_61, %c11_62] : memref<6x32xf32, #tpu.memory_space<smem>>
    %c1_63 = arith.constant 1 : index
    %c12_64 = arith.constant 12 : index
    %51 = memref.load %arg2[%c1_63, %c12_64] : memref<6x32xf32, #tpu.memory_space<smem>>
    %c1_65 = arith.constant 1 : index
    %c13_66 = arith.constant 13 : index
    %52 = memref.load %arg2[%c1_65, %c13_66] : memref<6x32xf32, #tpu.memory_space<smem>>
    %c1_67 = arith.constant 1 : index
    %c14_68 = arith.constant 14 : index
    %53 = memref.load %arg2[%c1_67, %c14_68] : memref<6x32xf32, #tpu.memory_space<smem>>
    %c1_69 = arith.constant 1 : index
    %c15_70 = arith.constant 15 : index
    %54 = memref.load %arg2[%c1_69, %c15_70] : memref<6x32xf32, #tpu.memory_space<smem>>
    %c1_71 = arith.constant 1 : index
    %c16_72 = arith.constant 16 : index
    %55 = memref.load %arg2[%c1_71, %c16_72] : memref<6x32xf32, #tpu.memory_space<smem>>
    %c1_73 = arith.constant 1 : index
    %c17_74 = arith.constant 17 : index
    %56 = memref.load %arg2[%c1_73, %c17_74] : memref<6x32xf32, #tpu.memory_space<smem>>
    %c1_75 = arith.constant 1 : index
    %c18_76 = arith.constant 18 : index
    %57 = memref.load %arg2[%c1_75, %c18_76] : memref<6x32xf32, #tpu.memory_space<smem>>
    %c1_77 = arith.constant 1 : index
    %c19_78 = arith.constant 19 : index
    %58 = memref.load %arg2[%c1_77, %c19_78] : memref<6x32xf32, #tpu.memory_space<smem>>
    %c1_79 = arith.constant 1 : index
    %c20_80 = arith.constant 20 : index
    %59 = memref.load %arg2[%c1_79, %c20_80] : memref<6x32xf32, #tpu.memory_space<smem>>
    %c1_81 = arith.constant 1 : index
    %c21_82 = arith.constant 21 : index
    %60 = memref.load %arg2[%c1_81, %c21_82] : memref<6x32xf32, #tpu.memory_space<smem>>
    %c1_83 = arith.constant 1 : index
    %c22_84 = arith.constant 22 : index
    %61 = memref.load %arg2[%c1_83, %c22_84] : memref<6x32xf32, #tpu.memory_space<smem>>
    %c1_85 = arith.constant 1 : index
    %c23_86 = arith.constant 23 : index
    %62 = memref.load %arg2[%c1_85, %c23_86] : memref<6x32xf32, #tpu.memory_space<smem>>
    %c1_87 = arith.constant 1 : index
    %c24_88 = arith.constant 24 : index
    %63 = memref.load %arg2[%c1_87, %c24_88] : memref<6x32xf32, #tpu.memory_space<smem>>
    %c1_89 = arith.constant 1 : index
    %c25_90 = arith.constant 25 : index
    %64 = memref.load %arg2[%c1_89, %c25_90] : memref<6x32xf32, #tpu.memory_space<smem>>
    %c1_91 = arith.constant 1 : index
    %c26_92 = arith.constant 26 : index
    %65 = memref.load %arg2[%c1_91, %c26_92] : memref<6x32xf32, #tpu.memory_space<smem>>
    %c1_93 = arith.constant 1 : index
    %c27_94 = arith.constant 27 : index
    %66 = memref.load %arg2[%c1_93, %c27_94] : memref<6x32xf32, #tpu.memory_space<smem>>
    %c1_95 = arith.constant 1 : index
    %c28_96 = arith.constant 28 : index
    %67 = memref.load %arg2[%c1_95, %c28_96] : memref<6x32xf32, #tpu.memory_space<smem>>
    %c1_97 = arith.constant 1 : index
    %c29_98 = arith.constant 29 : index
    %68 = memref.load %arg2[%c1_97, %c29_98] : memref<6x32xf32, #tpu.memory_space<smem>>
    %c1_99 = arith.constant 1 : index
    %c30_100 = arith.constant 30 : index
    %69 = memref.load %arg2[%c1_99, %c30_100] : memref<6x32xf32, #tpu.memory_space<smem>>
    %c1_101 = arith.constant 1 : index
    %c31_102 = arith.constant 31 : index
    %70 = memref.load %arg2[%c1_101, %c31_102] : memref<6x32xf32, #tpu.memory_space<smem>>
    %c2_103 = arith.constant 2 : index
    %c0_104 = arith.constant 0 : index
    %71 = memref.load %arg2[%c2_103, %c0_104] : memref<6x32xf32, #tpu.memory_space<smem>>
    %c2_105 = arith.constant 2 : index
    %c1_106 = arith.constant 1 : index
    %72 = memref.load %arg2[%c2_105, %c1_106] : memref<6x32xf32, #tpu.memory_space<smem>>
    %c2_107 = arith.constant 2 : index
    %c2_108 = arith.constant 2 : index
    %73 = memref.load %arg2[%c2_107, %c2_108] : memref<6x32xf32, #tpu.memory_space<smem>>
    %c2_109 = arith.constant 2 : index
    %c3_110 = arith.constant 3 : index
    %74 = memref.load %arg2[%c2_109, %c3_110] : memref<6x32xf32, #tpu.memory_space<smem>>
    %c2_111 = arith.constant 2 : index
    %c4_112 = arith.constant 4 : index
    %75 = memref.load %arg2[%c2_111, %c4_112] : memref<6x32xf32, #tpu.memory_space<smem>>
    %c2_113 = arith.constant 2 : index
    %c5_114 = arith.constant 5 : index
    %76 = memref.load %arg2[%c2_113, %c5_114] : memref<6x32xf32, #tpu.memory_space<smem>>
    %c2_115 = arith.constant 2 : index
    %c6_116 = arith.constant 6 : index
    %77 = memref.load %arg2[%c2_115, %c6_116] : memref<6x32xf32, #tpu.memory_space<smem>>
    %c2_117 = arith.constant 2 : index
    %c7_118 = arith.constant 7 : index
    %78 = memref.load %arg2[%c2_117, %c7_118] : memref<6x32xf32, #tpu.memory_space<smem>>
    %c2_119 = arith.constant 2 : index
    %c8_120 = arith.constant 8 : index
    %79 = memref.load %arg2[%c2_119, %c8_120] : memref<6x32xf32, #tpu.memory_space<smem>>
    %c2_121 = arith.constant 2 : index
    %c9_122 = arith.constant 9 : index
    %80 = memref.load %arg2[%c2_121, %c9_122] : memref<6x32xf32, #tpu.memory_space<smem>>
    %c2_123 = arith.constant 2 : index
    %c10_124 = arith.constant 10 : index
    %81 = memref.load %arg2[%c2_123, %c10_124] : memref<6x32xf32, #tpu.memory_space<smem>>
    %c2_125 = arith.constant 2 : index
    %c11_126 = arith.constant 11 : index
    %82 = memref.load %arg2[%c2_125, %c11_126] : memref<6x32xf32, #tpu.memory_space<smem>>
    %c2_127 = arith.constant 2 : index
    %c12_128 = arith.constant 12 : index
    %83 = memref.load %arg2[%c2_127, %c12_128] : memref<6x32xf32, #tpu.memory_space<smem>>
    %c2_129 = arith.constant 2 : index
    %c13_130 = arith.constant 13 : index
    %84 = memref.load %arg2[%c2_129, %c13_130] : memref<6x32xf32, #tpu.memory_space<smem>>
    %c2_131 = arith.constant 2 : index
    %c14_132 = arith.constant 14 : index
    %85 = memref.load %arg2[%c2_131, %c14_132] : memref<6x32xf32, #tpu.memory_space<smem>>
    %c2_133 = arith.constant 2 : index
    %c15_134 = arith.constant 15 : index
    %86 = memref.load %arg2[%c2_133, %c15_134] : memref<6x32xf32, #tpu.memory_space<smem>>
    %c2_135 = arith.constant 2 : index
    %c16_136 = arith.constant 16 : index
    %87 = memref.load %arg2[%c2_135, %c16_136] : memref<6x32xf32, #tpu.memory_space<smem>>
    %c2_137 = arith.constant 2 : index
    %c17_138 = arith.constant 17 : index
    %88 = memref.load %arg2[%c2_137, %c17_138] : memref<6x32xf32, #tpu.memory_space<smem>>
    %c2_139 = arith.constant 2 : index
    %c18_140 = arith.constant 18 : index
    %89 = memref.load %arg2[%c2_139, %c18_140] : memref<6x32xf32, #tpu.memory_space<smem>>
    %c2_141 = arith.constant 2 : index
    %c19_142 = arith.constant 19 : index
    %90 = memref.load %arg2[%c2_141, %c19_142] : memref<6x32xf32, #tpu.memory_space<smem>>
    %c2_143 = arith.constant 2 : index
    %c20_144 = arith.constant 20 : index
    %91 = memref.load %arg2[%c2_143, %c20_144] : memref<6x32xf32, #tpu.memory_space<smem>>
    %c2_145 = arith.constant 2 : index
    %c21_146 = arith.constant 21 : index
    %92 = memref.load %arg2[%c2_145, %c21_146] : memref<6x32xf32, #tpu.memory_space<smem>>
    %c2_147 = arith.constant 2 : index
    %c22_148 = arith.constant 22 : index
    %93 = memref.load %arg2[%c2_147, %c22_148] : memref<6x32xf32, #tpu.memory_space<smem>>
    %c2_149 = arith.constant 2 : index
    %c23_150 = arith.constant 23 : index
    %94 = memref.load %arg2[%c2_149, %c23_150] : memref<6x32xf32, #tpu.memory_space<smem>>
    %c2_151 = arith.constant 2 : index
    %c24_152 = arith.constant 24 : index
    %95 = memref.load %arg2[%c2_151, %c24_152] : memref<6x32xf32, #tpu.memory_space<smem>>
    %c2_153 = arith.constant 2 : index
    %c25_154 = arith.constant 25 : index
    %96 = memref.load %arg2[%c2_153, %c25_154] : memref<6x32xf32, #tpu.memory_space<smem>>
    %c2_155 = arith.constant 2 : index
    %c26_156 = arith.constant 26 : index
    %97 = memref.load %arg2[%c2_155, %c26_156] : memref<6x32xf32, #tpu.memory_space<smem>>
    %c2_157 = arith.constant 2 : index
    %c27_158 = arith.constant 27 : index
    %98 = memref.load %arg2[%c2_157, %c27_158] : memref<6x32xf32, #tpu.memory_space<smem>>
    %c2_159 = arith.constant 2 : index
    %c28_160 = arith.constant 28 : index
    %99 = memref.load %arg2[%c2_159, %c28_160] : memref<6x32xf32, #tpu.memory_space<smem>>
    %c2_161 = arith.constant 2 : index
    %c29_162 = arith.constant 29 : index
    %100 = memref.load %arg2[%c2_161, %c29_162] : memref<6x32xf32, #tpu.memory_space<smem>>
    %c2_163 = arith.constant 2 : index
    %c30_164 = arith.constant 30 : index
    %101 = memref.load %arg2[%c2_163, %c30_164] : memref<6x32xf32, #tpu.memory_space<smem>>
    %c2_165 = arith.constant 2 : index
    %c31_166 = arith.constant 31 : index
    %102 = memref.load %arg2[%c2_165, %c31_166] : memref<6x32xf32, #tpu.memory_space<smem>>
    %c3_167 = arith.constant 3 : index
    %c0_168 = arith.constant 0 : index
    %103 = memref.load %arg2[%c3_167, %c0_168] : memref<6x32xf32, #tpu.memory_space<smem>>
    %c3_169 = arith.constant 3 : index
    %c1_170 = arith.constant 1 : index
    %104 = memref.load %arg2[%c3_169, %c1_170] : memref<6x32xf32, #tpu.memory_space<smem>>
    %c3_171 = arith.constant 3 : index
    %c2_172 = arith.constant 2 : index
    %105 = memref.load %arg2[%c3_171, %c2_172] : memref<6x32xf32, #tpu.memory_space<smem>>
    %c3_173 = arith.constant 3 : index
    %c3_174 = arith.constant 3 : index
    %106 = memref.load %arg2[%c3_173, %c3_174] : memref<6x32xf32, #tpu.memory_space<smem>>
    %c3_175 = arith.constant 3 : index
    %c4_176 = arith.constant 4 : index
    %107 = memref.load %arg2[%c3_175, %c4_176] : memref<6x32xf32, #tpu.memory_space<smem>>
    %c3_177 = arith.constant 3 : index
    %c5_178 = arith.constant 5 : index
    %108 = memref.load %arg2[%c3_177, %c5_178] : memref<6x32xf32, #tpu.memory_space<smem>>
    %c3_179 = arith.constant 3 : index
    %c6_180 = arith.constant 6 : index
    %109 = memref.load %arg2[%c3_179, %c6_180] : memref<6x32xf32, #tpu.memory_space<smem>>
    %c3_181 = arith.constant 3 : index
    %c7_182 = arith.constant 7 : index
    %110 = memref.load %arg2[%c3_181, %c7_182] : memref<6x32xf32, #tpu.memory_space<smem>>
    %c3_183 = arith.constant 3 : index
    %c8_184 = arith.constant 8 : index
    %111 = memref.load %arg2[%c3_183, %c8_184] : memref<6x32xf32, #tpu.memory_space<smem>>
    %c3_185 = arith.constant 3 : index
    %c9_186 = arith.constant 9 : index
    %112 = memref.load %arg2[%c3_185, %c9_186] : memref<6x32xf32, #tpu.memory_space<smem>>
    %c3_187 = arith.constant 3 : index
    %c10_188 = arith.constant 10 : index
    %113 = memref.load %arg2[%c3_187, %c10_188] : memref<6x32xf32, #tpu.memory_space<smem>>
    %c3_189 = arith.constant 3 : index
    %c11_190 = arith.constant 11 : index
    %114 = memref.load %arg2[%c3_189, %c11_190] : memref<6x32xf32, #tpu.memory_space<smem>>
    %c3_191 = arith.constant 3 : index
    %c12_192 = arith.constant 12 : index
    %115 = memref.load %arg2[%c3_191, %c12_192] : memref<6x32xf32, #tpu.memory_space<smem>>
    %c3_193 = arith.constant 3 : index
    %c13_194 = arith.constant 13 : index
    %116 = memref.load %arg2[%c3_193, %c13_194] : memref<6x32xf32, #tpu.memory_space<smem>>
    %c3_195 = arith.constant 3 : index
    %c14_196 = arith.constant 14 : index
    %117 = memref.load %arg2[%c3_195, %c14_196] : memref<6x32xf32, #tpu.memory_space<smem>>
    %c3_197 = arith.constant 3 : index
    %c15_198 = arith.constant 15 : index
    %118 = memref.load %arg2[%c3_197, %c15_198] : memref<6x32xf32, #tpu.memory_space<smem>>
    %c3_199 = arith.constant 3 : index
    %c16_200 = arith.constant 16 : index
    %119 = memref.load %arg2[%c3_199, %c16_200] : memref<6x32xf32, #tpu.memory_space<smem>>
    %c3_201 = arith.constant 3 : index
    %c17_202 = arith.constant 17 : index
    %120 = memref.load %arg2[%c3_201, %c17_202] : memref<6x32xf32, #tpu.memory_space<smem>>
    %c3_203 = arith.constant 3 : index
    %c18_204 = arith.constant 18 : index
    %121 = memref.load %arg2[%c3_203, %c18_204] : memref<6x32xf32, #tpu.memory_space<smem>>
    %c3_205 = arith.constant 3 : index
    %c19_206 = arith.constant 19 : index
    %122 = memref.load %arg2[%c3_205, %c19_206] : memref<6x32xf32, #tpu.memory_space<smem>>
    %c3_207 = arith.constant 3 : index
    %c20_208 = arith.constant 20 : index
    %123 = memref.load %arg2[%c3_207, %c20_208] : memref<6x32xf32, #tpu.memory_space<smem>>
    %c3_209 = arith.constant 3 : index
    %c21_210 = arith.constant 21 : index
    %124 = memref.load %arg2[%c3_209, %c21_210] : memref<6x32xf32, #tpu.memory_space<smem>>
    %c3_211 = arith.constant 3 : index
    %c22_212 = arith.constant 22 : index
    %125 = memref.load %arg2[%c3_211, %c22_212] : memref<6x32xf32, #tpu.memory_space<smem>>
    %c3_213 = arith.constant 3 : index
    %c23_214 = arith.constant 23 : index
    %126 = memref.load %arg2[%c3_213, %c23_214] : memref<6x32xf32, #tpu.memory_space<smem>>
    %c3_215 = arith.constant 3 : index
    %c24_216 = arith.constant 24 : index
    %127 = memref.load %arg2[%c3_215, %c24_216] : memref<6x32xf32, #tpu.memory_space<smem>>
    %c3_217 = arith.constant 3 : index
    %c25_218 = arith.constant 25 : index
    %128 = memref.load %arg2[%c3_217, %c25_218] : memref<6x32xf32, #tpu.memory_space<smem>>
    %c3_219 = arith.constant 3 : index
    %c26_220 = arith.constant 26 : index
    %129 = memref.load %arg2[%c3_219, %c26_220] : memref<6x32xf32, #tpu.memory_space<smem>>
    %c3_221 = arith.constant 3 : index
    %c27_222 = arith.constant 27 : index
    %130 = memref.load %arg2[%c3_221, %c27_222] : memref<6x32xf32, #tpu.memory_space<smem>>
    %c3_223 = arith.constant 3 : index
    %c28_224 = arith.constant 28 : index
    %131 = memref.load %arg2[%c3_223, %c28_224] : memref<6x32xf32, #tpu.memory_space<smem>>
    %c3_225 = arith.constant 3 : index
    %c29_226 = arith.constant 29 : index
    %132 = memref.load %arg2[%c3_225, %c29_226] : memref<6x32xf32, #tpu.memory_space<smem>>
    %c3_227 = arith.constant 3 : index
    %c30_228 = arith.constant 30 : index
    %133 = memref.load %arg2[%c3_227, %c30_228] : memref<6x32xf32, #tpu.memory_space<smem>>
    %c3_229 = arith.constant 3 : index
    %c31_230 = arith.constant 31 : index
    %134 = memref.load %arg2[%c3_229, %c31_230] : memref<6x32xf32, #tpu.memory_space<smem>>
    %c4_231 = arith.constant 4 : index
    %c0_232 = arith.constant 0 : index
    %135 = memref.load %arg2[%c4_231, %c0_232] : memref<6x32xf32, #tpu.memory_space<smem>>
    %c4_233 = arith.constant 4 : index
    %c1_234 = arith.constant 1 : index
    %136 = memref.load %arg2[%c4_233, %c1_234] : memref<6x32xf32, #tpu.memory_space<smem>>
    %c4_235 = arith.constant 4 : index
    %c2_236 = arith.constant 2 : index
    %137 = memref.load %arg2[%c4_235, %c2_236] : memref<6x32xf32, #tpu.memory_space<smem>>
    %c4_237 = arith.constant 4 : index
    %c3_238 = arith.constant 3 : index
    %138 = memref.load %arg2[%c4_237, %c3_238] : memref<6x32xf32, #tpu.memory_space<smem>>
    %c4_239 = arith.constant 4 : index
    %c4_240 = arith.constant 4 : index
    %139 = memref.load %arg2[%c4_239, %c4_240] : memref<6x32xf32, #tpu.memory_space<smem>>
    %c4_241 = arith.constant 4 : index
    %c5_242 = arith.constant 5 : index
    %140 = memref.load %arg2[%c4_241, %c5_242] : memref<6x32xf32, #tpu.memory_space<smem>>
    %c4_243 = arith.constant 4 : index
    %c6_244 = arith.constant 6 : index
    %141 = memref.load %arg2[%c4_243, %c6_244] : memref<6x32xf32, #tpu.memory_space<smem>>
    %c4_245 = arith.constant 4 : index
    %c7_246 = arith.constant 7 : index
    %142 = memref.load %arg2[%c4_245, %c7_246] : memref<6x32xf32, #tpu.memory_space<smem>>
    %c4_247 = arith.constant 4 : index
    %c8_248 = arith.constant 8 : index
    %143 = memref.load %arg2[%c4_247, %c8_248] : memref<6x32xf32, #tpu.memory_space<smem>>
    %c4_249 = arith.constant 4 : index
    %c9_250 = arith.constant 9 : index
    %144 = memref.load %arg2[%c4_249, %c9_250] : memref<6x32xf32, #tpu.memory_space<smem>>
    %c4_251 = arith.constant 4 : index
    %c10_252 = arith.constant 10 : index
    %145 = memref.load %arg2[%c4_251, %c10_252] : memref<6x32xf32, #tpu.memory_space<smem>>
    %c4_253 = arith.constant 4 : index
    %c11_254 = arith.constant 11 : index
    %146 = memref.load %arg2[%c4_253, %c11_254] : memref<6x32xf32, #tpu.memory_space<smem>>
    %c4_255 = arith.constant 4 : index
    %c12_256 = arith.constant 12 : index
    %147 = memref.load %arg2[%c4_255, %c12_256] : memref<6x32xf32, #tpu.memory_space<smem>>
    %c4_257 = arith.constant 4 : index
    %c13_258 = arith.constant 13 : index
    %148 = memref.load %arg2[%c4_257, %c13_258] : memref<6x32xf32, #tpu.memory_space<smem>>
    %c4_259 = arith.constant 4 : index
    %c14_260 = arith.constant 14 : index
    %149 = memref.load %arg2[%c4_259, %c14_260] : memref<6x32xf32, #tpu.memory_space<smem>>
    %c4_261 = arith.constant 4 : index
    %c15_262 = arith.constant 15 : index
    %150 = memref.load %arg2[%c4_261, %c15_262] : memref<6x32xf32, #tpu.memory_space<smem>>
    %c4_263 = arith.constant 4 : index
    %c16_264 = arith.constant 16 : index
    %151 = memref.load %arg2[%c4_263, %c16_264] : memref<6x32xf32, #tpu.memory_space<smem>>
    %c4_265 = arith.constant 4 : index
    %c17_266 = arith.constant 17 : index
    %152 = memref.load %arg2[%c4_265, %c17_266] : memref<6x32xf32, #tpu.memory_space<smem>>
    %c4_267 = arith.constant 4 : index
    %c18_268 = arith.constant 18 : index
    %153 = memref.load %arg2[%c4_267, %c18_268] : memref<6x32xf32, #tpu.memory_space<smem>>
    %c4_269 = arith.constant 4 : index
    %c19_270 = arith.constant 19 : index
    %154 = memref.load %arg2[%c4_269, %c19_270] : memref<6x32xf32, #tpu.memory_space<smem>>
    %c4_271 = arith.constant 4 : index
    %c20_272 = arith.constant 20 : index
    %155 = memref.load %arg2[%c4_271, %c20_272] : memref<6x32xf32, #tpu.memory_space<smem>>
    %c4_273 = arith.constant 4 : index
    %c21_274 = arith.constant 21 : index
    %156 = memref.load %arg2[%c4_273, %c21_274] : memref<6x32xf32, #tpu.memory_space<smem>>
    %c4_275 = arith.constant 4 : index
    %c22_276 = arith.constant 22 : index
    %157 = memref.load %arg2[%c4_275, %c22_276] : memref<6x32xf32, #tpu.memory_space<smem>>
    %c4_277 = arith.constant 4 : index
    %c23_278 = arith.constant 23 : index
    %158 = memref.load %arg2[%c4_277, %c23_278] : memref<6x32xf32, #tpu.memory_space<smem>>
    %c4_279 = arith.constant 4 : index
    %c24_280 = arith.constant 24 : index
    %159 = memref.load %arg2[%c4_279, %c24_280] : memref<6x32xf32, #tpu.memory_space<smem>>
    %c4_281 = arith.constant 4 : index
    %c25_282 = arith.constant 25 : index
    %160 = memref.load %arg2[%c4_281, %c25_282] : memref<6x32xf32, #tpu.memory_space<smem>>
    %c4_283 = arith.constant 4 : index
    %c26_284 = arith.constant 26 : index
    %161 = memref.load %arg2[%c4_283, %c26_284] : memref<6x32xf32, #tpu.memory_space<smem>>
    %c4_285 = arith.constant 4 : index
    %c27_286 = arith.constant 27 : index
    %162 = memref.load %arg2[%c4_285, %c27_286] : memref<6x32xf32, #tpu.memory_space<smem>>
    %c4_287 = arith.constant 4 : index
    %c28_288 = arith.constant 28 : index
    %163 = memref.load %arg2[%c4_287, %c28_288] : memref<6x32xf32, #tpu.memory_space<smem>>
    %c4_289 = arith.constant 4 : index
    %c29_290 = arith.constant 29 : index
    %164 = memref.load %arg2[%c4_289, %c29_290] : memref<6x32xf32, #tpu.memory_space<smem>>
    %c4_291 = arith.constant 4 : index
    %c30_292 = arith.constant 30 : index
    %165 = memref.load %arg2[%c4_291, %c30_292] : memref<6x32xf32, #tpu.memory_space<smem>>
    %c4_293 = arith.constant 4 : index
    %c31_294 = arith.constant 31 : index
    %166 = memref.load %arg2[%c4_293, %c31_294] : memref<6x32xf32, #tpu.memory_space<smem>>
    %c5_295 = arith.constant 5 : index
    %c0_296 = arith.constant 0 : index
    %167 = memref.load %arg2[%c5_295, %c0_296] : memref<6x32xf32, #tpu.memory_space<smem>>
    %c5_297 = arith.constant 5 : index
    %c1_298 = arith.constant 1 : index
    %168 = memref.load %arg2[%c5_297, %c1_298] : memref<6x32xf32, #tpu.memory_space<smem>>
    %c5_299 = arith.constant 5 : index
    %c2_300 = arith.constant 2 : index
    %169 = memref.load %arg2[%c5_299, %c2_300] : memref<6x32xf32, #tpu.memory_space<smem>>
    %c5_301 = arith.constant 5 : index
    %c3_302 = arith.constant 3 : index
    %170 = memref.load %arg2[%c5_301, %c3_302] : memref<6x32xf32, #tpu.memory_space<smem>>
    %c5_303 = arith.constant 5 : index
    %c4_304 = arith.constant 4 : index
    %171 = memref.load %arg2[%c5_303, %c4_304] : memref<6x32xf32, #tpu.memory_space<smem>>
    %c5_305 = arith.constant 5 : index
    %c5_306 = arith.constant 5 : index
    %172 = memref.load %arg2[%c5_305, %c5_306] : memref<6x32xf32, #tpu.memory_space<smem>>
    %c5_307 = arith.constant 5 : index
    %c6_308 = arith.constant 6 : index
    %173 = memref.load %arg2[%c5_307, %c6_308] : memref<6x32xf32, #tpu.memory_space<smem>>
    %c5_309 = arith.constant 5 : index
    %c7_310 = arith.constant 7 : index
    %174 = memref.load %arg2[%c5_309, %c7_310] : memref<6x32xf32, #tpu.memory_space<smem>>
    %c5_311 = arith.constant 5 : index
    %c8_312 = arith.constant 8 : index
    %175 = memref.load %arg2[%c5_311, %c8_312] : memref<6x32xf32, #tpu.memory_space<smem>>
    %c5_313 = arith.constant 5 : index
    %c9_314 = arith.constant 9 : index
    %176 = memref.load %arg2[%c5_313, %c9_314] : memref<6x32xf32, #tpu.memory_space<smem>>
    %c5_315 = arith.constant 5 : index
    %c10_316 = arith.constant 10 : index
    %177 = memref.load %arg2[%c5_315, %c10_316] : memref<6x32xf32, #tpu.memory_space<smem>>
    %c5_317 = arith.constant 5 : index
    %c11_318 = arith.constant 11 : index
    %178 = memref.load %arg2[%c5_317, %c11_318] : memref<6x32xf32, #tpu.memory_space<smem>>
    %c5_319 = arith.constant 5 : index
    %c12_320 = arith.constant 12 : index
    %179 = memref.load %arg2[%c5_319, %c12_320] : memref<6x32xf32, #tpu.memory_space<smem>>
    %c5_321 = arith.constant 5 : index
    %c13_322 = arith.constant 13 : index
    %180 = memref.load %arg2[%c5_321, %c13_322] : memref<6x32xf32, #tpu.memory_space<smem>>
    %c5_323 = arith.constant 5 : index
    %c14_324 = arith.constant 14 : index
    %181 = memref.load %arg2[%c5_323, %c14_324] : memref<6x32xf32, #tpu.memory_space<smem>>
    %c5_325 = arith.constant 5 : index
    %c15_326 = arith.constant 15 : index
    %182 = memref.load %arg2[%c5_325, %c15_326] : memref<6x32xf32, #tpu.memory_space<smem>>
    %c5_327 = arith.constant 5 : index
    %c16_328 = arith.constant 16 : index
    %183 = memref.load %arg2[%c5_327, %c16_328] : memref<6x32xf32, #tpu.memory_space<smem>>
    %c5_329 = arith.constant 5 : index
    %c17_330 = arith.constant 17 : index
    %184 = memref.load %arg2[%c5_329, %c17_330] : memref<6x32xf32, #tpu.memory_space<smem>>
    %c5_331 = arith.constant 5 : index
    %c18_332 = arith.constant 18 : index
    %185 = memref.load %arg2[%c5_331, %c18_332] : memref<6x32xf32, #tpu.memory_space<smem>>
    %c5_333 = arith.constant 5 : index
    %c19_334 = arith.constant 19 : index
    %186 = memref.load %arg2[%c5_333, %c19_334] : memref<6x32xf32, #tpu.memory_space<smem>>
    %c5_335 = arith.constant 5 : index
    %c20_336 = arith.constant 20 : index
    %187 = memref.load %arg2[%c5_335, %c20_336] : memref<6x32xf32, #tpu.memory_space<smem>>
    %c5_337 = arith.constant 5 : index
    %c21_338 = arith.constant 21 : index
    %188 = memref.load %arg2[%c5_337, %c21_338] : memref<6x32xf32, #tpu.memory_space<smem>>
    %c5_339 = arith.constant 5 : index
    %c22_340 = arith.constant 22 : index
    %189 = memref.load %arg2[%c5_339, %c22_340] : memref<6x32xf32, #tpu.memory_space<smem>>
    %c5_341 = arith.constant 5 : index
    %c23_342 = arith.constant 23 : index
    %190 = memref.load %arg2[%c5_341, %c23_342] : memref<6x32xf32, #tpu.memory_space<smem>>
    %c5_343 = arith.constant 5 : index
    %c24_344 = arith.constant 24 : index
    %191 = memref.load %arg2[%c5_343, %c24_344] : memref<6x32xf32, #tpu.memory_space<smem>>
    %c5_345 = arith.constant 5 : index
    %c25_346 = arith.constant 25 : index
    %192 = memref.load %arg2[%c5_345, %c25_346] : memref<6x32xf32, #tpu.memory_space<smem>>
    %c5_347 = arith.constant 5 : index
    %c26_348 = arith.constant 26 : index
    %193 = memref.load %arg2[%c5_347, %c26_348] : memref<6x32xf32, #tpu.memory_space<smem>>
    %c5_349 = arith.constant 5 : index
    %c27_350 = arith.constant 27 : index
    %194 = memref.load %arg2[%c5_349, %c27_350] : memref<6x32xf32, #tpu.memory_space<smem>>
    %c5_351 = arith.constant 5 : index
    %c28_352 = arith.constant 28 : index
    %195 = memref.load %arg2[%c5_351, %c28_352] : memref<6x32xf32, #tpu.memory_space<smem>>
    %c5_353 = arith.constant 5 : index
    %c29_354 = arith.constant 29 : index
    %196 = memref.load %arg2[%c5_353, %c29_354] : memref<6x32xf32, #tpu.memory_space<smem>>
    %c5_355 = arith.constant 5 : index
    %c30_356 = arith.constant 30 : index
    %197 = memref.load %arg2[%c5_355, %c30_356] : memref<6x32xf32, #tpu.memory_space<smem>>
    %c5_357 = arith.constant 5 : index
    %c31_358 = arith.constant 31 : index
    %198 = memref.load %arg2[%c5_357, %c31_358] : memref<6x32xf32, #tpu.memory_space<smem>>
    %c0_i32 = arith.constant 0 : i32
    %c1_i32 = arith.constant 1 : i32
    %199 = arith.muli %c0_i32, %c1_i32 : i32
    %c0_i32_359 = arith.constant 0 : i32
    %200 = arith.addi %c0_i32_359, %199 : i32
    %c8_i32 = arith.constant 8 : i32
    %201 = arith.muli %200, %c8_i32 : i32
    %202 = tpu.assume_multiple %201, 8 : i32
    %c0_360 = arith.constant 0 : index
    %203 = arith.index_cast %202 : i32 to index
    %c0_361 = arith.constant 0 : index
    %204 = vector.load %arg3[%c0_360, %203, %c0_361] : memref<4x8x128xf32, #tpu.memory_space<vmem>>, vector<1x8x128xf32>
    %205 = vector.shape_cast %204 : vector<1x8x128xf32> to vector<8x128xf32>
    %c1_362 = arith.constant 1 : index
    %206 = arith.index_cast %202 : i32 to index
    %c0_363 = arith.constant 0 : index
    %207 = vector.load %arg3[%c1_362, %206, %c0_363] : memref<4x8x128xf32, #tpu.memory_space<vmem>>, vector<1x8x128xf32>
    %208 = vector.shape_cast %207 : vector<1x8x128xf32> to vector<8x128xf32>
    %c2_364 = arith.constant 2 : index
    %209 = arith.index_cast %202 : i32 to index
    %c0_365 = arith.constant 0 : index
    %210 = vector.load %arg3[%c2_364, %209, %c0_365] : memref<4x8x128xf32, #tpu.memory_space<vmem>>, vector<1x8x128xf32>
    %211 = vector.shape_cast %210 : vector<1x8x128xf32> to vector<8x128xf32>
    %c3_366 = arith.constant 3 : index
    %212 = arith.index_cast %202 : i32 to index
    %c0_367 = arith.constant 0 : index
    %213 = vector.load %arg3[%c3_366, %212, %c0_367] : memref<4x8x128xf32, #tpu.memory_space<vmem>>, vector<1x8x128xf32>
    %214 = vector.shape_cast %213 : vector<1x8x128xf32> to vector<8x128xf32>
    %cst = arith.constant 0.000000e+00 : f32
    %215 = vector.broadcast %cst : f32 to vector<8x128xf32>
    %216 = vector.broadcast %7 : f32 to vector<8x128xf32>
    %217 = arith.mulf %205, %216 : vector<8x128xf32>
    %218 = vector.broadcast %39 : f32 to vector<8x128xf32>
    %219 = arith.mulf %208, %218 : vector<8x128xf32>
    %220 = arith.addf %217, %219 : vector<8x128xf32>
    %221 = vector.broadcast %71 : f32 to vector<8x128xf32>
    %222 = arith.addf %220, %221 : vector<8x128xf32>
    %223 = math.tanh %222 : vector<8x128xf32>
    %224 = arith.mulf %223, %223 : vector<8x128xf32>
    %225 = vector.broadcast %103 : f32 to vector<8x128xf32>
    %226 = arith.mulf %223, %225 : vector<8x128xf32>
    %227 = arith.addf %215, %226 : vector<8x128xf32>
    %228 = vector.broadcast %135 : f32 to vector<8x128xf32>
    %229 = arith.mulf %224, %228 : vector<8x128xf32>
    %230 = arith.addf %215, %229 : vector<8x128xf32>
    %231 = vector.broadcast %167 : f32 to vector<8x128xf32>
    %232 = arith.mulf %224, %231 : vector<8x128xf32>
    %233 = arith.addf %215, %232 : vector<8x128xf32>
    %234 = vector.broadcast %8 : f32 to vector<8x128xf32>
    %235 = arith.mulf %205, %234 : vector<8x128xf32>
    %236 = vector.broadcast %40 : f32 to vector<8x128xf32>
    %237 = arith.mulf %208, %236 : vector<8x128xf32>
    %238 = arith.addf %235, %237 : vector<8x128xf32>
    %239 = vector.broadcast %72 : f32 to vector<8x128xf32>
    %240 = arith.addf %238, %239 : vector<8x128xf32>
    %241 = math.tanh %240 : vector<8x128xf32>
    %242 = arith.mulf %241, %241 : vector<8x128xf32>
    %243 = vector.broadcast %104 : f32 to vector<8x128xf32>
    %244 = arith.mulf %241, %243 : vector<8x128xf32>
    %245 = arith.addf %227, %244 : vector<8x128xf32>
    %246 = vector.broadcast %136 : f32 to vector<8x128xf32>
    %247 = arith.mulf %242, %246 : vector<8x128xf32>
    %248 = arith.addf %230, %247 : vector<8x128xf32>
    %249 = vector.broadcast %168 : f32 to vector<8x128xf32>
    %250 = arith.mulf %242, %249 : vector<8x128xf32>
    %251 = arith.addf %233, %250 : vector<8x128xf32>
    %252 = vector.broadcast %9 : f32 to vector<8x128xf32>
    %253 = arith.mulf %205, %252 : vector<8x128xf32>
    %254 = vector.broadcast %41 : f32 to vector<8x128xf32>
    %255 = arith.mulf %208, %254 : vector<8x128xf32>
    %256 = arith.addf %253, %255 : vector<8x128xf32>
    %257 = vector.broadcast %73 : f32 to vector<8x128xf32>
    %258 = arith.addf %256, %257 : vector<8x128xf32>
    %259 = math.tanh %258 : vector<8x128xf32>
    %260 = arith.mulf %259, %259 : vector<8x128xf32>
    %261 = vector.broadcast %105 : f32 to vector<8x128xf32>
    %262 = arith.mulf %259, %261 : vector<8x128xf32>
    %263 = arith.addf %245, %262 : vector<8x128xf32>
    %264 = vector.broadcast %137 : f32 to vector<8x128xf32>
    %265 = arith.mulf %260, %264 : vector<8x128xf32>
    %266 = arith.addf %248, %265 : vector<8x128xf32>
    %267 = vector.broadcast %169 : f32 to vector<8x128xf32>
    %268 = arith.mulf %260, %267 : vector<8x128xf32>
    %269 = arith.addf %251, %268 : vector<8x128xf32>
    %270 = vector.broadcast %10 : f32 to vector<8x128xf32>
    %271 = arith.mulf %205, %270 : vector<8x128xf32>
    %272 = vector.broadcast %42 : f32 to vector<8x128xf32>
    %273 = arith.mulf %208, %272 : vector<8x128xf32>
    %274 = arith.addf %271, %273 : vector<8x128xf32>
    %275 = vector.broadcast %74 : f32 to vector<8x128xf32>
    %276 = arith.addf %274, %275 : vector<8x128xf32>
    %277 = math.tanh %276 : vector<8x128xf32>
    %278 = arith.mulf %277, %277 : vector<8x128xf32>
    %279 = vector.broadcast %106 : f32 to vector<8x128xf32>
    %280 = arith.mulf %277, %279 : vector<8x128xf32>
    %281 = arith.addf %263, %280 : vector<8x128xf32>
    %282 = vector.broadcast %138 : f32 to vector<8x128xf32>
    %283 = arith.mulf %278, %282 : vector<8x128xf32>
    %284 = arith.addf %266, %283 : vector<8x128xf32>
    %285 = vector.broadcast %170 : f32 to vector<8x128xf32>
    %286 = arith.mulf %278, %285 : vector<8x128xf32>
    %287 = arith.addf %269, %286 : vector<8x128xf32>
    %288 = vector.broadcast %11 : f32 to vector<8x128xf32>
    %289 = arith.mulf %205, %288 : vector<8x128xf32>
    %290 = vector.broadcast %43 : f32 to vector<8x128xf32>
    %291 = arith.mulf %208, %290 : vector<8x128xf32>
    %292 = arith.addf %289, %291 : vector<8x128xf32>
    %293 = vector.broadcast %75 : f32 to vector<8x128xf32>
    %294 = arith.addf %292, %293 : vector<8x128xf32>
    %295 = math.tanh %294 : vector<8x128xf32>
    %296 = arith.mulf %295, %295 : vector<8x128xf32>
    %297 = vector.broadcast %107 : f32 to vector<8x128xf32>
    %298 = arith.mulf %295, %297 : vector<8x128xf32>
    %299 = arith.addf %281, %298 : vector<8x128xf32>
    %300 = vector.broadcast %139 : f32 to vector<8x128xf32>
    %301 = arith.mulf %296, %300 : vector<8x128xf32>
    %302 = arith.addf %284, %301 : vector<8x128xf32>
    %303 = vector.broadcast %171 : f32 to vector<8x128xf32>
    %304 = arith.mulf %296, %303 : vector<8x128xf32>
    %305 = arith.addf %287, %304 : vector<8x128xf32>
    %306 = vector.broadcast %12 : f32 to vector<8x128xf32>
    %307 = arith.mulf %205, %306 : vector<8x128xf32>
    %308 = vector.broadcast %44 : f32 to vector<8x128xf32>
    %309 = arith.mulf %208, %308 : vector<8x128xf32>
    %310 = arith.addf %307, %309 : vector<8x128xf32>
    %311 = vector.broadcast %76 : f32 to vector<8x128xf32>
    %312 = arith.addf %310, %311 : vector<8x128xf32>
    %313 = math.tanh %312 : vector<8x128xf32>
    %314 = arith.mulf %313, %313 : vector<8x128xf32>
    %315 = vector.broadcast %108 : f32 to vector<8x128xf32>
    %316 = arith.mulf %313, %315 : vector<8x128xf32>
    %317 = arith.addf %299, %316 : vector<8x128xf32>
    %318 = vector.broadcast %140 : f32 to vector<8x128xf32>
    %319 = arith.mulf %314, %318 : vector<8x128xf32>
    %320 = arith.addf %302, %319 : vector<8x128xf32>
    %321 = vector.broadcast %172 : f32 to vector<8x128xf32>
    %322 = arith.mulf %314, %321 : vector<8x128xf32>
    %323 = arith.addf %305, %322 : vector<8x128xf32>
    %324 = vector.broadcast %13 : f32 to vector<8x128xf32>
    %325 = arith.mulf %205, %324 : vector<8x128xf32>
    %326 = vector.broadcast %45 : f32 to vector<8x128xf32>
    %327 = arith.mulf %208, %326 : vector<8x128xf32>
    %328 = arith.addf %325, %327 : vector<8x128xf32>
    %329 = vector.broadcast %77 : f32 to vector<8x128xf32>
    %330 = arith.addf %328, %329 : vector<8x128xf32>
    %331 = math.tanh %330 : vector<8x128xf32>
    %332 = arith.mulf %331, %331 : vector<8x128xf32>
    %333 = vector.broadcast %109 : f32 to vector<8x128xf32>
    %334 = arith.mulf %331, %333 : vector<8x128xf32>
    %335 = arith.addf %317, %334 : vector<8x128xf32>
    %336 = vector.broadcast %141 : f32 to vector<8x128xf32>
    %337 = arith.mulf %332, %336 : vector<8x128xf32>
    %338 = arith.addf %320, %337 : vector<8x128xf32>
    %339 = vector.broadcast %173 : f32 to vector<8x128xf32>
    %340 = arith.mulf %332, %339 : vector<8x128xf32>
    %341 = arith.addf %323, %340 : vector<8x128xf32>
    %342 = vector.broadcast %14 : f32 to vector<8x128xf32>
    %343 = arith.mulf %205, %342 : vector<8x128xf32>
    %344 = vector.broadcast %46 : f32 to vector<8x128xf32>
    %345 = arith.mulf %208, %344 : vector<8x128xf32>
    %346 = arith.addf %343, %345 : vector<8x128xf32>
    %347 = vector.broadcast %78 : f32 to vector<8x128xf32>
    %348 = arith.addf %346, %347 : vector<8x128xf32>
    %349 = math.tanh %348 : vector<8x128xf32>
    %350 = arith.mulf %349, %349 : vector<8x128xf32>
    %351 = vector.broadcast %110 : f32 to vector<8x128xf32>
    %352 = arith.mulf %349, %351 : vector<8x128xf32>
    %353 = arith.addf %335, %352 : vector<8x128xf32>
    %354 = vector.broadcast %142 : f32 to vector<8x128xf32>
    %355 = arith.mulf %350, %354 : vector<8x128xf32>
    %356 = arith.addf %338, %355 : vector<8x128xf32>
    %357 = vector.broadcast %174 : f32 to vector<8x128xf32>
    %358 = arith.mulf %350, %357 : vector<8x128xf32>
    %359 = arith.addf %341, %358 : vector<8x128xf32>
    %360 = vector.broadcast %15 : f32 to vector<8x128xf32>
    %361 = arith.mulf %205, %360 : vector<8x128xf32>
    %362 = vector.broadcast %47 : f32 to vector<8x128xf32>
    %363 = arith.mulf %208, %362 : vector<8x128xf32>
    %364 = arith.addf %361, %363 : vector<8x128xf32>
    %365 = vector.broadcast %79 : f32 to vector<8x128xf32>
    %366 = arith.addf %364, %365 : vector<8x128xf32>
    %367 = math.tanh %366 : vector<8x128xf32>
    %368 = arith.mulf %367, %367 : vector<8x128xf32>
    %369 = vector.broadcast %111 : f32 to vector<8x128xf32>
    %370 = arith.mulf %367, %369 : vector<8x128xf32>
    %371 = arith.addf %353, %370 : vector<8x128xf32>
    %372 = vector.broadcast %143 : f32 to vector<8x128xf32>
    %373 = arith.mulf %368, %372 : vector<8x128xf32>
    %374 = arith.addf %356, %373 : vector<8x128xf32>
    %375 = vector.broadcast %175 : f32 to vector<8x128xf32>
    %376 = arith.mulf %368, %375 : vector<8x128xf32>
    %377 = arith.addf %359, %376 : vector<8x128xf32>
    %378 = vector.broadcast %16 : f32 to vector<8x128xf32>
    %379 = arith.mulf %205, %378 : vector<8x128xf32>
    %380 = vector.broadcast %48 : f32 to vector<8x128xf32>
    %381 = arith.mulf %208, %380 : vector<8x128xf32>
    %382 = arith.addf %379, %381 : vector<8x128xf32>
    %383 = vector.broadcast %80 : f32 to vector<8x128xf32>
    %384 = arith.addf %382, %383 : vector<8x128xf32>
    %385 = math.tanh %384 : vector<8x128xf32>
    %386 = arith.mulf %385, %385 : vector<8x128xf32>
    %387 = vector.broadcast %112 : f32 to vector<8x128xf32>
    %388 = arith.mulf %385, %387 : vector<8x128xf32>
    %389 = arith.addf %371, %388 : vector<8x128xf32>
    %390 = vector.broadcast %144 : f32 to vector<8x128xf32>
    %391 = arith.mulf %386, %390 : vector<8x128xf32>
    %392 = arith.addf %374, %391 : vector<8x128xf32>
    %393 = vector.broadcast %176 : f32 to vector<8x128xf32>
    %394 = arith.mulf %386, %393 : vector<8x128xf32>
    %395 = arith.addf %377, %394 : vector<8x128xf32>
    %396 = vector.broadcast %17 : f32 to vector<8x128xf32>
    %397 = arith.mulf %205, %396 : vector<8x128xf32>
    %398 = vector.broadcast %49 : f32 to vector<8x128xf32>
    %399 = arith.mulf %208, %398 : vector<8x128xf32>
    %400 = arith.addf %397, %399 : vector<8x128xf32>
    %401 = vector.broadcast %81 : f32 to vector<8x128xf32>
    %402 = arith.addf %400, %401 : vector<8x128xf32>
    %403 = math.tanh %402 : vector<8x128xf32>
    %404 = arith.mulf %403, %403 : vector<8x128xf32>
    %405 = vector.broadcast %113 : f32 to vector<8x128xf32>
    %406 = arith.mulf %403, %405 : vector<8x128xf32>
    %407 = arith.addf %389, %406 : vector<8x128xf32>
    %408 = vector.broadcast %145 : f32 to vector<8x128xf32>
    %409 = arith.mulf %404, %408 : vector<8x128xf32>
    %410 = arith.addf %392, %409 : vector<8x128xf32>
    %411 = vector.broadcast %177 : f32 to vector<8x128xf32>
    %412 = arith.mulf %404, %411 : vector<8x128xf32>
    %413 = arith.addf %395, %412 : vector<8x128xf32>
    %414 = vector.broadcast %18 : f32 to vector<8x128xf32>
    %415 = arith.mulf %205, %414 : vector<8x128xf32>
    %416 = vector.broadcast %50 : f32 to vector<8x128xf32>
    %417 = arith.mulf %208, %416 : vector<8x128xf32>
    %418 = arith.addf %415, %417 : vector<8x128xf32>
    %419 = vector.broadcast %82 : f32 to vector<8x128xf32>
    %420 = arith.addf %418, %419 : vector<8x128xf32>
    %421 = math.tanh %420 : vector<8x128xf32>
    %422 = arith.mulf %421, %421 : vector<8x128xf32>
    %423 = vector.broadcast %114 : f32 to vector<8x128xf32>
    %424 = arith.mulf %421, %423 : vector<8x128xf32>
    %425 = arith.addf %407, %424 : vector<8x128xf32>
    %426 = vector.broadcast %146 : f32 to vector<8x128xf32>
    %427 = arith.mulf %422, %426 : vector<8x128xf32>
    %428 = arith.addf %410, %427 : vector<8x128xf32>
    %429 = vector.broadcast %178 : f32 to vector<8x128xf32>
    %430 = arith.mulf %422, %429 : vector<8x128xf32>
    %431 = arith.addf %413, %430 : vector<8x128xf32>
    %432 = vector.broadcast %19 : f32 to vector<8x128xf32>
    %433 = arith.mulf %205, %432 : vector<8x128xf32>
    %434 = vector.broadcast %51 : f32 to vector<8x128xf32>
    %435 = arith.mulf %208, %434 : vector<8x128xf32>
    %436 = arith.addf %433, %435 : vector<8x128xf32>
    %437 = vector.broadcast %83 : f32 to vector<8x128xf32>
    %438 = arith.addf %436, %437 : vector<8x128xf32>
    %439 = math.tanh %438 : vector<8x128xf32>
    %440 = arith.mulf %439, %439 : vector<8x128xf32>
    %441 = vector.broadcast %115 : f32 to vector<8x128xf32>
    %442 = arith.mulf %439, %441 : vector<8x128xf32>
    %443 = arith.addf %425, %442 : vector<8x128xf32>
    %444 = vector.broadcast %147 : f32 to vector<8x128xf32>
    %445 = arith.mulf %440, %444 : vector<8x128xf32>
    %446 = arith.addf %428, %445 : vector<8x128xf32>
    %447 = vector.broadcast %179 : f32 to vector<8x128xf32>
    %448 = arith.mulf %440, %447 : vector<8x128xf32>
    %449 = arith.addf %431, %448 : vector<8x128xf32>
    %450 = vector.broadcast %20 : f32 to vector<8x128xf32>
    %451 = arith.mulf %205, %450 : vector<8x128xf32>
    %452 = vector.broadcast %52 : f32 to vector<8x128xf32>
    %453 = arith.mulf %208, %452 : vector<8x128xf32>
    %454 = arith.addf %451, %453 : vector<8x128xf32>
    %455 = vector.broadcast %84 : f32 to vector<8x128xf32>
    %456 = arith.addf %454, %455 : vector<8x128xf32>
    %457 = math.tanh %456 : vector<8x128xf32>
    %458 = arith.mulf %457, %457 : vector<8x128xf32>
    %459 = vector.broadcast %116 : f32 to vector<8x128xf32>
    %460 = arith.mulf %457, %459 : vector<8x128xf32>
    %461 = arith.addf %443, %460 : vector<8x128xf32>
    %462 = vector.broadcast %148 : f32 to vector<8x128xf32>
    %463 = arith.mulf %458, %462 : vector<8x128xf32>
    %464 = arith.addf %446, %463 : vector<8x128xf32>
    %465 = vector.broadcast %180 : f32 to vector<8x128xf32>
    %466 = arith.mulf %458, %465 : vector<8x128xf32>
    %467 = arith.addf %449, %466 : vector<8x128xf32>
    %468 = vector.broadcast %21 : f32 to vector<8x128xf32>
    %469 = arith.mulf %205, %468 : vector<8x128xf32>
    %470 = vector.broadcast %53 : f32 to vector<8x128xf32>
    %471 = arith.mulf %208, %470 : vector<8x128xf32>
    %472 = arith.addf %469, %471 : vector<8x128xf32>
    %473 = vector.broadcast %85 : f32 to vector<8x128xf32>
    %474 = arith.addf %472, %473 : vector<8x128xf32>
    %475 = math.tanh %474 : vector<8x128xf32>
    %476 = arith.mulf %475, %475 : vector<8x128xf32>
    %477 = vector.broadcast %117 : f32 to vector<8x128xf32>
    %478 = arith.mulf %475, %477 : vector<8x128xf32>
    %479 = arith.addf %461, %478 : vector<8x128xf32>
    %480 = vector.broadcast %149 : f32 to vector<8x128xf32>
    %481 = arith.mulf %476, %480 : vector<8x128xf32>
    %482 = arith.addf %464, %481 : vector<8x128xf32>
    %483 = vector.broadcast %181 : f32 to vector<8x128xf32>
    %484 = arith.mulf %476, %483 : vector<8x128xf32>
    %485 = arith.addf %467, %484 : vector<8x128xf32>
    %486 = vector.broadcast %22 : f32 to vector<8x128xf32>
    %487 = arith.mulf %205, %486 : vector<8x128xf32>
    %488 = vector.broadcast %54 : f32 to vector<8x128xf32>
    %489 = arith.mulf %208, %488 : vector<8x128xf32>
    %490 = arith.addf %487, %489 : vector<8x128xf32>
    %491 = vector.broadcast %86 : f32 to vector<8x128xf32>
    %492 = arith.addf %490, %491 : vector<8x128xf32>
    %493 = math.tanh %492 : vector<8x128xf32>
    %494 = arith.mulf %493, %493 : vector<8x128xf32>
    %495 = vector.broadcast %118 : f32 to vector<8x128xf32>
    %496 = arith.mulf %493, %495 : vector<8x128xf32>
    %497 = arith.addf %479, %496 : vector<8x128xf32>
    %498 = vector.broadcast %150 : f32 to vector<8x128xf32>
    %499 = arith.mulf %494, %498 : vector<8x128xf32>
    %500 = arith.addf %482, %499 : vector<8x128xf32>
    %501 = vector.broadcast %182 : f32 to vector<8x128xf32>
    %502 = arith.mulf %494, %501 : vector<8x128xf32>
    %503 = arith.addf %485, %502 : vector<8x128xf32>
    %504 = vector.broadcast %23 : f32 to vector<8x128xf32>
    %505 = arith.mulf %205, %504 : vector<8x128xf32>
    %506 = vector.broadcast %55 : f32 to vector<8x128xf32>
    %507 = arith.mulf %208, %506 : vector<8x128xf32>
    %508 = arith.addf %505, %507 : vector<8x128xf32>
    %509 = vector.broadcast %87 : f32 to vector<8x128xf32>
    %510 = arith.addf %508, %509 : vector<8x128xf32>
    %511 = math.tanh %510 : vector<8x128xf32>
    %512 = arith.mulf %511, %511 : vector<8x128xf32>
    %513 = vector.broadcast %119 : f32 to vector<8x128xf32>
    %514 = arith.mulf %511, %513 : vector<8x128xf32>
    %515 = arith.addf %497, %514 : vector<8x128xf32>
    %516 = vector.broadcast %151 : f32 to vector<8x128xf32>
    %517 = arith.mulf %512, %516 : vector<8x128xf32>
    %518 = arith.addf %500, %517 : vector<8x128xf32>
    %519 = vector.broadcast %183 : f32 to vector<8x128xf32>
    %520 = arith.mulf %512, %519 : vector<8x128xf32>
    %521 = arith.addf %503, %520 : vector<8x128xf32>
    %522 = vector.broadcast %24 : f32 to vector<8x128xf32>
    %523 = arith.mulf %205, %522 : vector<8x128xf32>
    %524 = vector.broadcast %56 : f32 to vector<8x128xf32>
    %525 = arith.mulf %208, %524 : vector<8x128xf32>
    %526 = arith.addf %523, %525 : vector<8x128xf32>
    %527 = vector.broadcast %88 : f32 to vector<8x128xf32>
    %528 = arith.addf %526, %527 : vector<8x128xf32>
    %529 = math.tanh %528 : vector<8x128xf32>
    %530 = arith.mulf %529, %529 : vector<8x128xf32>
    %531 = vector.broadcast %120 : f32 to vector<8x128xf32>
    %532 = arith.mulf %529, %531 : vector<8x128xf32>
    %533 = arith.addf %515, %532 : vector<8x128xf32>
    %534 = vector.broadcast %152 : f32 to vector<8x128xf32>
    %535 = arith.mulf %530, %534 : vector<8x128xf32>
    %536 = arith.addf %518, %535 : vector<8x128xf32>
    %537 = vector.broadcast %184 : f32 to vector<8x128xf32>
    %538 = arith.mulf %530, %537 : vector<8x128xf32>
    %539 = arith.addf %521, %538 : vector<8x128xf32>
    %540 = vector.broadcast %25 : f32 to vector<8x128xf32>
    %541 = arith.mulf %205, %540 : vector<8x128xf32>
    %542 = vector.broadcast %57 : f32 to vector<8x128xf32>
    %543 = arith.mulf %208, %542 : vector<8x128xf32>
    %544 = arith.addf %541, %543 : vector<8x128xf32>
    %545 = vector.broadcast %89 : f32 to vector<8x128xf32>
    %546 = arith.addf %544, %545 : vector<8x128xf32>
    %547 = math.tanh %546 : vector<8x128xf32>
    %548 = arith.mulf %547, %547 : vector<8x128xf32>
    %549 = vector.broadcast %121 : f32 to vector<8x128xf32>
    %550 = arith.mulf %547, %549 : vector<8x128xf32>
    %551 = arith.addf %533, %550 : vector<8x128xf32>
    %552 = vector.broadcast %153 : f32 to vector<8x128xf32>
    %553 = arith.mulf %548, %552 : vector<8x128xf32>
    %554 = arith.addf %536, %553 : vector<8x128xf32>
    %555 = vector.broadcast %185 : f32 to vector<8x128xf32>
    %556 = arith.mulf %548, %555 : vector<8x128xf32>
    %557 = arith.addf %539, %556 : vector<8x128xf32>
    %558 = vector.broadcast %26 : f32 to vector<8x128xf32>
    %559 = arith.mulf %205, %558 : vector<8x128xf32>
    %560 = vector.broadcast %58 : f32 to vector<8x128xf32>
    %561 = arith.mulf %208, %560 : vector<8x128xf32>
    %562 = arith.addf %559, %561 : vector<8x128xf32>
    %563 = vector.broadcast %90 : f32 to vector<8x128xf32>
    %564 = arith.addf %562, %563 : vector<8x128xf32>
    %565 = math.tanh %564 : vector<8x128xf32>
    %566 = arith.mulf %565, %565 : vector<8x128xf32>
    %567 = vector.broadcast %122 : f32 to vector<8x128xf32>
    %568 = arith.mulf %565, %567 : vector<8x128xf32>
    %569 = arith.addf %551, %568 : vector<8x128xf32>
    %570 = vector.broadcast %154 : f32 to vector<8x128xf32>
    %571 = arith.mulf %566, %570 : vector<8x128xf32>
    %572 = arith.addf %554, %571 : vector<8x128xf32>
    %573 = vector.broadcast %186 : f32 to vector<8x128xf32>
    %574 = arith.mulf %566, %573 : vector<8x128xf32>
    %575 = arith.addf %557, %574 : vector<8x128xf32>
    %576 = vector.broadcast %27 : f32 to vector<8x128xf32>
    %577 = arith.mulf %205, %576 : vector<8x128xf32>
    %578 = vector.broadcast %59 : f32 to vector<8x128xf32>
    %579 = arith.mulf %208, %578 : vector<8x128xf32>
    %580 = arith.addf %577, %579 : vector<8x128xf32>
    %581 = vector.broadcast %91 : f32 to vector<8x128xf32>
    %582 = arith.addf %580, %581 : vector<8x128xf32>
    %583 = math.tanh %582 : vector<8x128xf32>
    %584 = arith.mulf %583, %583 : vector<8x128xf32>
    %585 = vector.broadcast %123 : f32 to vector<8x128xf32>
    %586 = arith.mulf %583, %585 : vector<8x128xf32>
    %587 = arith.addf %569, %586 : vector<8x128xf32>
    %588 = vector.broadcast %155 : f32 to vector<8x128xf32>
    %589 = arith.mulf %584, %588 : vector<8x128xf32>
    %590 = arith.addf %572, %589 : vector<8x128xf32>
    %591 = vector.broadcast %187 : f32 to vector<8x128xf32>
    %592 = arith.mulf %584, %591 : vector<8x128xf32>
    %593 = arith.addf %575, %592 : vector<8x128xf32>
    %594 = vector.broadcast %28 : f32 to vector<8x128xf32>
    %595 = arith.mulf %205, %594 : vector<8x128xf32>
    %596 = vector.broadcast %60 : f32 to vector<8x128xf32>
    %597 = arith.mulf %208, %596 : vector<8x128xf32>
    %598 = arith.addf %595, %597 : vector<8x128xf32>
    %599 = vector.broadcast %92 : f32 to vector<8x128xf32>
    %600 = arith.addf %598, %599 : vector<8x128xf32>
    %601 = math.tanh %600 : vector<8x128xf32>
    %602 = arith.mulf %601, %601 : vector<8x128xf32>
    %603 = vector.broadcast %124 : f32 to vector<8x128xf32>
    %604 = arith.mulf %601, %603 : vector<8x128xf32>
    %605 = arith.addf %587, %604 : vector<8x128xf32>
    %606 = vector.broadcast %156 : f32 to vector<8x128xf32>
    %607 = arith.mulf %602, %606 : vector<8x128xf32>
    %608 = arith.addf %590, %607 : vector<8x128xf32>
    %609 = vector.broadcast %188 : f32 to vector<8x128xf32>
    %610 = arith.mulf %602, %609 : vector<8x128xf32>
    %611 = arith.addf %593, %610 : vector<8x128xf32>
    %612 = vector.broadcast %29 : f32 to vector<8x128xf32>
    %613 = arith.mulf %205, %612 : vector<8x128xf32>
    %614 = vector.broadcast %61 : f32 to vector<8x128xf32>
    %615 = arith.mulf %208, %614 : vector<8x128xf32>
    %616 = arith.addf %613, %615 : vector<8x128xf32>
    %617 = vector.broadcast %93 : f32 to vector<8x128xf32>
    %618 = arith.addf %616, %617 : vector<8x128xf32>
    %619 = math.tanh %618 : vector<8x128xf32>
    %620 = arith.mulf %619, %619 : vector<8x128xf32>
    %621 = vector.broadcast %125 : f32 to vector<8x128xf32>
    %622 = arith.mulf %619, %621 : vector<8x128xf32>
    %623 = arith.addf %605, %622 : vector<8x128xf32>
    %624 = vector.broadcast %157 : f32 to vector<8x128xf32>
    %625 = arith.mulf %620, %624 : vector<8x128xf32>
    %626 = arith.addf %608, %625 : vector<8x128xf32>
    %627 = vector.broadcast %189 : f32 to vector<8x128xf32>
    %628 = arith.mulf %620, %627 : vector<8x128xf32>
    %629 = arith.addf %611, %628 : vector<8x128xf32>
    %630 = vector.broadcast %30 : f32 to vector<8x128xf32>
    %631 = arith.mulf %205, %630 : vector<8x128xf32>
    %632 = vector.broadcast %62 : f32 to vector<8x128xf32>
    %633 = arith.mulf %208, %632 : vector<8x128xf32>
    %634 = arith.addf %631, %633 : vector<8x128xf32>
    %635 = vector.broadcast %94 : f32 to vector<8x128xf32>
    %636 = arith.addf %634, %635 : vector<8x128xf32>
    %637 = math.tanh %636 : vector<8x128xf32>
    %638 = arith.mulf %637, %637 : vector<8x128xf32>
    %639 = vector.broadcast %126 : f32 to vector<8x128xf32>
    %640 = arith.mulf %637, %639 : vector<8x128xf32>
    %641 = arith.addf %623, %640 : vector<8x128xf32>
    %642 = vector.broadcast %158 : f32 to vector<8x128xf32>
    %643 = arith.mulf %638, %642 : vector<8x128xf32>
    %644 = arith.addf %626, %643 : vector<8x128xf32>
    %645 = vector.broadcast %190 : f32 to vector<8x128xf32>
    %646 = arith.mulf %638, %645 : vector<8x128xf32>
    %647 = arith.addf %629, %646 : vector<8x128xf32>
    %648 = vector.broadcast %31 : f32 to vector<8x128xf32>
    %649 = arith.mulf %205, %648 : vector<8x128xf32>
    %650 = vector.broadcast %63 : f32 to vector<8x128xf32>
    %651 = arith.mulf %208, %650 : vector<8x128xf32>
    %652 = arith.addf %649, %651 : vector<8x128xf32>
    %653 = vector.broadcast %95 : f32 to vector<8x128xf32>
    %654 = arith.addf %652, %653 : vector<8x128xf32>
    %655 = math.tanh %654 : vector<8x128xf32>
    %656 = arith.mulf %655, %655 : vector<8x128xf32>
    %657 = vector.broadcast %127 : f32 to vector<8x128xf32>
    %658 = arith.mulf %655, %657 : vector<8x128xf32>
    %659 = arith.addf %641, %658 : vector<8x128xf32>
    %660 = vector.broadcast %159 : f32 to vector<8x128xf32>
    %661 = arith.mulf %656, %660 : vector<8x128xf32>
    %662 = arith.addf %644, %661 : vector<8x128xf32>
    %663 = vector.broadcast %191 : f32 to vector<8x128xf32>
    %664 = arith.mulf %656, %663 : vector<8x128xf32>
    %665 = arith.addf %647, %664 : vector<8x128xf32>
    %666 = vector.broadcast %32 : f32 to vector<8x128xf32>
    %667 = arith.mulf %205, %666 : vector<8x128xf32>
    %668 = vector.broadcast %64 : f32 to vector<8x128xf32>
    %669 = arith.mulf %208, %668 : vector<8x128xf32>
    %670 = arith.addf %667, %669 : vector<8x128xf32>
    %671 = vector.broadcast %96 : f32 to vector<8x128xf32>
    %672 = arith.addf %670, %671 : vector<8x128xf32>
    %673 = math.tanh %672 : vector<8x128xf32>
    %674 = arith.mulf %673, %673 : vector<8x128xf32>
    %675 = vector.broadcast %128 : f32 to vector<8x128xf32>
    %676 = arith.mulf %673, %675 : vector<8x128xf32>
    %677 = arith.addf %659, %676 : vector<8x128xf32>
    %678 = vector.broadcast %160 : f32 to vector<8x128xf32>
    %679 = arith.mulf %674, %678 : vector<8x128xf32>
    %680 = arith.addf %662, %679 : vector<8x128xf32>
    %681 = vector.broadcast %192 : f32 to vector<8x128xf32>
    %682 = arith.mulf %674, %681 : vector<8x128xf32>
    %683 = arith.addf %665, %682 : vector<8x128xf32>
    %684 = vector.broadcast %33 : f32 to vector<8x128xf32>
    %685 = arith.mulf %205, %684 : vector<8x128xf32>
    %686 = vector.broadcast %65 : f32 to vector<8x128xf32>
    %687 = arith.mulf %208, %686 : vector<8x128xf32>
    %688 = arith.addf %685, %687 : vector<8x128xf32>
    %689 = vector.broadcast %97 : f32 to vector<8x128xf32>
    %690 = arith.addf %688, %689 : vector<8x128xf32>
    %691 = math.tanh %690 : vector<8x128xf32>
    %692 = arith.mulf %691, %691 : vector<8x128xf32>
    %693 = vector.broadcast %129 : f32 to vector<8x128xf32>
    %694 = arith.mulf %691, %693 : vector<8x128xf32>
    %695 = arith.addf %677, %694 : vector<8x128xf32>
    %696 = vector.broadcast %161 : f32 to vector<8x128xf32>
    %697 = arith.mulf %692, %696 : vector<8x128xf32>
    %698 = arith.addf %680, %697 : vector<8x128xf32>
    %699 = vector.broadcast %193 : f32 to vector<8x128xf32>
    %700 = arith.mulf %692, %699 : vector<8x128xf32>
    %701 = arith.addf %683, %700 : vector<8x128xf32>
    %702 = vector.broadcast %34 : f32 to vector<8x128xf32>
    %703 = arith.mulf %205, %702 : vector<8x128xf32>
    %704 = vector.broadcast %66 : f32 to vector<8x128xf32>
    %705 = arith.mulf %208, %704 : vector<8x128xf32>
    %706 = arith.addf %703, %705 : vector<8x128xf32>
    %707 = vector.broadcast %98 : f32 to vector<8x128xf32>
    %708 = arith.addf %706, %707 : vector<8x128xf32>
    %709 = math.tanh %708 : vector<8x128xf32>
    %710 = arith.mulf %709, %709 : vector<8x128xf32>
    %711 = vector.broadcast %130 : f32 to vector<8x128xf32>
    %712 = arith.mulf %709, %711 : vector<8x128xf32>
    %713 = arith.addf %695, %712 : vector<8x128xf32>
    %714 = vector.broadcast %162 : f32 to vector<8x128xf32>
    %715 = arith.mulf %710, %714 : vector<8x128xf32>
    %716 = arith.addf %698, %715 : vector<8x128xf32>
    %717 = vector.broadcast %194 : f32 to vector<8x128xf32>
    %718 = arith.mulf %710, %717 : vector<8x128xf32>
    %719 = arith.addf %701, %718 : vector<8x128xf32>
    %720 = vector.broadcast %35 : f32 to vector<8x128xf32>
    %721 = arith.mulf %205, %720 : vector<8x128xf32>
    %722 = vector.broadcast %67 : f32 to vector<8x128xf32>
    %723 = arith.mulf %208, %722 : vector<8x128xf32>
    %724 = arith.addf %721, %723 : vector<8x128xf32>
    %725 = vector.broadcast %99 : f32 to vector<8x128xf32>
    %726 = arith.addf %724, %725 : vector<8x128xf32>
    %727 = math.tanh %726 : vector<8x128xf32>
    %728 = arith.mulf %727, %727 : vector<8x128xf32>
    %729 = vector.broadcast %131 : f32 to vector<8x128xf32>
    %730 = arith.mulf %727, %729 : vector<8x128xf32>
    %731 = arith.addf %713, %730 : vector<8x128xf32>
    %732 = vector.broadcast %163 : f32 to vector<8x128xf32>
    %733 = arith.mulf %728, %732 : vector<8x128xf32>
    %734 = arith.addf %716, %733 : vector<8x128xf32>
    %735 = vector.broadcast %195 : f32 to vector<8x128xf32>
    %736 = arith.mulf %728, %735 : vector<8x128xf32>
    %737 = arith.addf %719, %736 : vector<8x128xf32>
    %738 = vector.broadcast %36 : f32 to vector<8x128xf32>
    %739 = arith.mulf %205, %738 : vector<8x128xf32>
    %740 = vector.broadcast %68 : f32 to vector<8x128xf32>
    %741 = arith.mulf %208, %740 : vector<8x128xf32>
    %742 = arith.addf %739, %741 : vector<8x128xf32>
    %743 = vector.broadcast %100 : f32 to vector<8x128xf32>
    %744 = arith.addf %742, %743 : vector<8x128xf32>
    %745 = math.tanh %744 : vector<8x128xf32>
    %746 = arith.mulf %745, %745 : vector<8x128xf32>
    %747 = vector.broadcast %132 : f32 to vector<8x128xf32>
    %748 = arith.mulf %745, %747 : vector<8x128xf32>
    %749 = arith.addf %731, %748 : vector<8x128xf32>
    %750 = vector.broadcast %164 : f32 to vector<8x128xf32>
    %751 = arith.mulf %746, %750 : vector<8x128xf32>
    %752 = arith.addf %734, %751 : vector<8x128xf32>
    %753 = vector.broadcast %196 : f32 to vector<8x128xf32>
    %754 = arith.mulf %746, %753 : vector<8x128xf32>
    %755 = arith.addf %737, %754 : vector<8x128xf32>
    %756 = vector.broadcast %37 : f32 to vector<8x128xf32>
    %757 = arith.mulf %205, %756 : vector<8x128xf32>
    %758 = vector.broadcast %69 : f32 to vector<8x128xf32>
    %759 = arith.mulf %208, %758 : vector<8x128xf32>
    %760 = arith.addf %757, %759 : vector<8x128xf32>
    %761 = vector.broadcast %101 : f32 to vector<8x128xf32>
    %762 = arith.addf %760, %761 : vector<8x128xf32>
    %763 = math.tanh %762 : vector<8x128xf32>
    %764 = arith.mulf %763, %763 : vector<8x128xf32>
    %765 = vector.broadcast %133 : f32 to vector<8x128xf32>
    %766 = arith.mulf %763, %765 : vector<8x128xf32>
    %767 = arith.addf %749, %766 : vector<8x128xf32>
    %768 = vector.broadcast %165 : f32 to vector<8x128xf32>
    %769 = arith.mulf %764, %768 : vector<8x128xf32>
    %770 = arith.addf %752, %769 : vector<8x128xf32>
    %771 = vector.broadcast %197 : f32 to vector<8x128xf32>
    %772 = arith.mulf %764, %771 : vector<8x128xf32>
    %773 = arith.addf %755, %772 : vector<8x128xf32>
    %774 = vector.broadcast %38 : f32 to vector<8x128xf32>
    %775 = arith.mulf %205, %774 : vector<8x128xf32>
    %776 = vector.broadcast %70 : f32 to vector<8x128xf32>
    %777 = arith.mulf %208, %776 : vector<8x128xf32>
    %778 = arith.addf %775, %777 : vector<8x128xf32>
    %779 = vector.broadcast %102 : f32 to vector<8x128xf32>
    %780 = arith.addf %778, %779 : vector<8x128xf32>
    %781 = math.tanh %780 : vector<8x128xf32>
    %782 = arith.mulf %781, %781 : vector<8x128xf32>
    %783 = vector.broadcast %134 : f32 to vector<8x128xf32>
    %784 = arith.mulf %781, %783 : vector<8x128xf32>
    %785 = arith.addf %767, %784 : vector<8x128xf32>
    %786 = vector.broadcast %166 : f32 to vector<8x128xf32>
    %787 = arith.mulf %782, %786 : vector<8x128xf32>
    %788 = arith.addf %770, %787 : vector<8x128xf32>
    %789 = vector.broadcast %198 : f32 to vector<8x128xf32>
    %790 = arith.mulf %782, %789 : vector<8x128xf32>
    %791 = arith.addf %773, %790 : vector<8x128xf32>
    %792 = vector.broadcast %4 : f32 to vector<8x128xf32>
    %793 = arith.addf %785, %792 : vector<8x128xf32>
    %794 = vector.broadcast %5 : f32 to vector<8x128xf32>
    %795 = arith.subf %794, %788 : vector<8x128xf32>
    %796 = vector.broadcast %6 : f32 to vector<8x128xf32>
    %797 = arith.subf %796, %791 : vector<8x128xf32>
    %798 = math.sin %205 : vector<8x128xf32>
    %799 = math.cos %205 : vector<8x128xf32>
    %800 = math.sin %208 : vector<8x128xf32>
    %801 = math.cos %208 : vector<8x128xf32>
    %802 = arith.mulf %798, %801 : vector<8x128xf32>
    %803 = arith.mulf %799, %800 : vector<8x128xf32>
    %804 = arith.addf %802, %803 : vector<8x128xf32>
    %805 = arith.mulf %799, %801 : vector<8x128xf32>
    %806 = arith.mulf %798, %800 : vector<8x128xf32>
    %807 = arith.subf %805, %806 : vector<8x128xf32>
    %cst_368 = arith.constant 2.000000e+00 : f32
    %808 = vector.broadcast %cst_368 : f32 to vector<8x128xf32>
    %809 = arith.mulf %808, %801 : vector<8x128xf32>
    %810 = arith.mulf %809, %801 : vector<8x128xf32>
    %cst_369 = arith.constant 1.000000e+00 : f32
    %811 = vector.broadcast %cst_369 : f32 to vector<8x128xf32>
    %812 = arith.subf %810, %811 : vector<8x128xf32>
    %cst_370 = arith.constant 2.000000e+00 : f32
    %813 = vector.broadcast %cst_370 : f32 to vector<8x128xf32>
    %814 = arith.mulf %813, %801 : vector<8x128xf32>
    %cst_371 = arith.constant 1.000000e+00 : f32
    %815 = vector.broadcast %cst_371 : f32 to vector<8x128xf32>
    %816 = arith.mulf %814, %815 : vector<8x128xf32>
    %cst_372 = arith.constant 3.000000e+00 : f32
    %817 = vector.broadcast %cst_372 : f32 to vector<8x128xf32>
    %818 = arith.addf %816, %817 : vector<8x128xf32>
    %cst_373 = arith.constant 1.000000e+00 : f32
    %819 = vector.broadcast %cst_373 : f32 to vector<8x128xf32>
    %820 = arith.mulf %801, %819 : vector<8x128xf32>
    %cst_374 = arith.constant 1.000000e+00 : f32
    %821 = vector.broadcast %cst_374 : f32 to vector<8x128xf32>
    %822 = arith.addf %820, %821 : vector<8x128xf32>
    %cst_375 = arith.constant 1.000000e+00 : f32
    %823 = vector.broadcast %cst_375 : f32 to vector<8x128xf32>
    %824 = arith.mulf %823, %822 : vector<8x128xf32>
    %cst_376 = arith.constant 1.000000e+00 : f32
    %825 = vector.broadcast %cst_376 : f32 to vector<8x128xf32>
    %826 = arith.mulf %818, %825 : vector<8x128xf32>
    %827 = arith.mulf %824, %824 : vector<8x128xf32>
    %828 = arith.subf %826, %827 : vector<8x128xf32>
    %829 = tpu.reciprocal %828 {approx = true} : vector<8x128xf32> -> vector<8x128xf32>
    %830 = arith.mulf %828, %829 : vector<8x128xf32>
    %cst_377 = arith.constant 2.000000e+00 : f32
    %831 = vector.broadcast %cst_377 : f32 to vector<8x128xf32>
    %832 = arith.subf %831, %830 : vector<8x128xf32>
    %833 = arith.mulf %829, %832 : vector<8x128xf32>
    %cst_378 = arith.constant 1.000000e+00 : f32
    %834 = vector.broadcast %cst_378 : f32 to vector<8x128xf32>
    %835 = arith.mulf %834, %211 : vector<8x128xf32>
    %836 = arith.mulf %824, %214 : vector<8x128xf32>
    %837 = arith.subf %835, %836 : vector<8x128xf32>
    %838 = arith.mulf %837, %833 : vector<8x128xf32>
    %839 = arith.mulf %818, %214 : vector<8x128xf32>
    %840 = arith.mulf %824, %211 : vector<8x128xf32>
    %841 = arith.subf %839, %840 : vector<8x128xf32>
    %842 = arith.mulf %841, %833 : vector<8x128xf32>
    %843 = arith.mulf %211, %838 : vector<8x128xf32>
    %844 = arith.mulf %214, %842 : vector<8x128xf32>
    %845 = arith.addf %843, %844 : vector<8x128xf32>
    %cst_379 = arith.constant 0.000000e+00 : f32
    %846 = vector.broadcast %cst_379 : f32 to vector<8x128xf32>
    %847 = arith.cmpf ogt, %845, %846 : vector<8x128xf32>
    %cst_380 = arith.constant 1.000000e+00 : f32
    %848 = vector.broadcast %cst_380 : f32 to vector<8x128xf32>
    %849 = arith.select %847, %845, %848 : vector<8x128xi1>, vector<8x128xf32>
    %850 = math.rsqrt %849 : vector<8x128xf32>
    %851 = arith.mulf %211, %850 : vector<8x128xf32>
    %852 = arith.select %847, %851, %211 : vector<8x128xi1>, vector<8x128xf32>
    %853 = arith.mulf %214, %850 : vector<8x128xf32>
    %854 = arith.select %847, %853, %214 : vector<8x128xi1>, vector<8x128xf32>
    %cst_381 = arith.constant 1.57079637 : f32
    %855 = vector.broadcast %cst_381 : f32 to vector<8x128xf32>
    %856 = arith.subf %855, %208 : vector<8x128xf32>
    %cst_382 = arith.constant 1.000000e+00 : f32
    %857 = vector.broadcast %cst_382 : f32 to vector<8x128xf32>
    %858 = arith.mulf %807, %857 : vector<8x128xf32>
    %cst_383 = arith.constant 2.000000e+00 : f32
    %859 = vector.broadcast %cst_383 : f32 to vector<8x128xf32>
    %860 = arith.mulf %799, %859 : vector<8x128xf32>
    %861 = arith.addf %858, %860 : vector<8x128xf32>
    %cst_384 = arith.constant -9.810000e+00 : f32
    %862 = vector.broadcast %cst_384 : f32 to vector<8x128xf32>
    %863 = arith.mulf %862, %861 : vector<8x128xf32>
    %cst_385 = arith.constant 5.000000e-01 : f32
    %864 = vector.broadcast %cst_385 : f32 to vector<8x128xf32>
    %865 = arith.mulf %864, %856 : vector<8x128xf32>
    %866 = arith.mulf %865, %856 : vector<8x128xf32>
    %867 = arith.addf %863, %866 : vector<8x128xf32>
    %cst_386 = arith.constant 5.000000e-01 : f32
    %868 = vector.broadcast %cst_386 : f32 to vector<8x128xf32>
    %869 = arith.mulf %868, %845 : vector<8x128xf32>
    %870 = arith.addf %867, %869 : vector<8x128xf32>
    %871 = arith.addf %870, %793 : vector<8x128xf32>
    %872 = vector.broadcast %2 : f32 to vector<8x128xf32>
    %873 = arith.subf %872, %871 : vector<8x128xf32>
    %874 = vector.broadcast %1 : f32 to vector<8x128xf32>
    %875 = arith.mulf %874, %873 : vector<8x128xf32>
    %876 = arith.mulf %875, %852 : vector<8x128xf32>
    %877 = arith.subf %876, %795 : vector<8x128xf32>
    %878 = arith.mulf %875, %854 : vector<8x128xf32>
    %879 = arith.subf %878, %797 : vector<8x128xf32>
    %cst_387 = arith.constant 1.000000e+00 : f32
    %880 = vector.broadcast %cst_387 : f32 to vector<8x128xf32>
    %881 = arith.mulf %804, %880 : vector<8x128xf32>
    %cst_388 = arith.constant 2.000000e+00 : f32
    %882 = vector.broadcast %cst_388 : f32 to vector<8x128xf32>
    %883 = arith.mulf %798, %882 : vector<8x128xf32>
    %884 = arith.addf %881, %883 : vector<8x128xf32>
    %cst_389 = arith.constant -9.810000e+00 : f32
    %885 = vector.broadcast %cst_389 : f32 to vector<8x128xf32>
    %886 = arith.mulf %885, %884 : vector<8x128xf32>
    %887 = arith.addf %886, %877 : vector<8x128xf32>
    %888 = vector.broadcast %3 : f32 to vector<8x128xf32>
    %889 = arith.mulf %888, %838 : vector<8x128xf32>
    %890 = arith.subf %887, %889 : vector<8x128xf32>
    %891 = arith.mulf %800, %800 : vector<8x128xf32>
    %cst_390 = arith.constant 1.000000e+00 : f32
    %892 = vector.broadcast %cst_390 : f32 to vector<8x128xf32>
    %893 = arith.mulf %891, %892 : vector<8x128xf32>
    %cst_391 = arith.constant 1.000000e+00 : f32
    %894 = vector.broadcast %cst_391 : f32 to vector<8x128xf32>
    %895 = arith.addf %894, %893 : vector<8x128xf32>
    %896 = arith.mulf %895, %895 : vector<8x128xf32>
    %cst_392 = arith.constant -1.000000e+00 : f32
    %897 = vector.broadcast %cst_392 : f32 to vector<8x128xf32>
    %898 = arith.mulf %897, %833 : vector<8x128xf32>
    %899 = arith.mulf %898, %833 : vector<8x128xf32>
    %900 = arith.mulf %214, %214 : vector<8x128xf32>
    %cst_393 = arith.constant 0.000000e+00 : f32
    %901 = vector.broadcast %cst_393 : f32 to vector<8x128xf32>
    %902 = arith.subf %901, %900 : vector<8x128xf32>
    %903 = arith.mulf %902, %800 : vector<8x128xf32>
    %cst_394 = arith.constant 1.000000e+00 : f32
    %904 = vector.broadcast %cst_394 : f32 to vector<8x128xf32>
    %905 = arith.mulf %801, %904 : vector<8x128xf32>
    %cst_395 = arith.constant 1.000000e+00 : f32
    %906 = vector.broadcast %cst_395 : f32 to vector<8x128xf32>
    %907 = arith.addf %905, %906 : vector<8x128xf32>
    %908 = arith.mulf %903, %907 : vector<8x128xf32>
    %cst_396 = arith.constant 1.000000e+00 : f32
    %909 = vector.broadcast %cst_396 : f32 to vector<8x128xf32>
    %910 = arith.mulf %801, %909 : vector<8x128xf32>
    %cst_397 = arith.constant 2.000000e+00 : f32
    %911 = vector.broadcast %cst_397 : f32 to vector<8x128xf32>
    %912 = arith.addf %910, %911 : vector<8x128xf32>
    %913 = arith.mulf %908, %912 : vector<8x128xf32>
    %cst_398 = arith.constant 5.000000e-01 : f32
    %914 = vector.broadcast %cst_398 : f32 to vector<8x128xf32>
    %915 = arith.mulf %914, %211 : vector<8x128xf32>
    %916 = arith.mulf %915, %214 : vector<8x128xf32>
    %917 = arith.mulf %916, %800 : vector<8x128xf32>
    %cst_399 = arith.constant 4.000000e+00 : f32
    %918 = vector.broadcast %cst_399 : f32 to vector<8x128xf32>
    %919 = arith.mulf %918, %801 : vector<8x128xf32>
    %cst_400 = arith.constant 3.000000e+00 : f32
    %920 = vector.broadcast %cst_400 : f32 to vector<8x128xf32>
    %921 = arith.addf %920, %812 : vector<8x128xf32>
    %cst_401 = arith.constant 1.000000e+00 : f32
    %922 = vector.broadcast %cst_401 : f32 to vector<8x128xf32>
    %923 = arith.mulf %921, %922 : vector<8x128xf32>
    %cst_402 = arith.constant 2.000000e+00 : f32
    %924 = vector.broadcast %cst_402 : f32 to vector<8x128xf32>
    %925 = arith.addf %924, %923 : vector<8x128xf32>
    %cst_403 = arith.constant 1.000000e+00 : f32
    %926 = vector.broadcast %cst_403 : f32 to vector<8x128xf32>
    %927 = arith.mulf %926, %925 : vector<8x128xf32>
    %928 = arith.addf %919, %927 : vector<8x128xf32>
    %929 = arith.mulf %917, %928 : vector<8x128xf32>
    %930 = arith.mulf %801, %800 : vector<8x128xf32>
    %cst_404 = arith.constant 1.000000e+00 : f32
    %931 = vector.broadcast %cst_404 : f32 to vector<8x128xf32>
    %932 = arith.mulf %930, %931 : vector<8x128xf32>
    %cst_405 = arith.constant 0.000000e+00 : f32
    %933 = vector.broadcast %cst_405 : f32 to vector<8x128xf32>
    %934 = arith.subf %933, %932 : vector<8x128xf32>
    %935 = arith.mulf %934, %211 : vector<8x128xf32>
    %936 = arith.mulf %935, %211 : vector<8x128xf32>
    %cst_406 = arith.constant 1.000000e+00 : f32
    %937 = vector.broadcast %cst_406 : f32 to vector<8x128xf32>
    %938 = arith.mulf %937, %896 : vector<8x128xf32>
    %cst_407 = arith.constant 9.810000e+00 : f32
    %939 = vector.broadcast %cst_407 : f32 to vector<8x128xf32>
    %940 = arith.mulf %939, %804 : vector<8x128xf32>
    %cst_408 = arith.constant 2.000000e+00 : f32
    %941 = vector.broadcast %cst_408 : f32 to vector<8x128xf32>
    %942 = arith.mulf %941, %208 : vector<8x128xf32>
    %cst_409 = arith.constant 3.14159274 : f32
    %943 = vector.broadcast %cst_409 : f32 to vector<8x128xf32>
    %944 = arith.subf %943, %942 : vector<8x128xf32>
    %cst_410 = arith.constant 5.000000e-01 : f32
    %945 = vector.broadcast %cst_410 : f32 to vector<8x128xf32>
    %946 = arith.mulf %945, %944 : vector<8x128xf32>
    %947 = arith.subf %940, %946 : vector<8x128xf32>
    %948 = arith.mulf %938, %947 : vector<8x128xf32>
    %949 = arith.addf %936, %948 : vector<8x128xf32>
    %cst_411 = arith.constant 1.000000e+00 : f32
    %950 = vector.broadcast %cst_411 : f32 to vector<8x128xf32>
    %951 = arith.mulf %950, %949 : vector<8x128xf32>
    %952 = arith.addf %913, %929 : vector<8x128xf32>
    %953 = arith.addf %952, %951 : vector<8x128xf32>
    %954 = arith.mulf %899, %953 : vector<8x128xf32>
    %955 = arith.addf %954, %879 : vector<8x128xf32>
    %956 = vector.broadcast %3 : f32 to vector<8x128xf32>
    %957 = arith.mulf %956, %842 : vector<8x128xf32>
    %958 = arith.subf %955, %957 : vector<8x128xf32>
    %959 = vector.broadcast %0 : f32 to vector<8x128xf32>
    %960 = arith.mulf %959, %838 : vector<8x128xf32>
    %c0_412 = arith.constant 0 : index
    %961 = arith.index_cast %202 : i32 to index
    %c0_413 = arith.constant 0 : index
    %962 = vector.load %arg4[%c0_412, %961, %c0_413] : memref<4x8x128xf32, #tpu.memory_space<vmem>>, vector<1x8x128xf32>
    %963 = vector.shape_cast %962 : vector<1x8x128xf32> to vector<8x128xf32>
    %964 = vector.shape_cast %960 : vector<8x128xf32> to vector<1x8x128xf32>
    tpu.vector_store %arg4[%c0_412, %961, %c0_413], %964 {strides = array<i32>} : memref<4x8x128xf32, #tpu.memory_space<vmem>>, vector<1x8x128xf32>,
    %965 = vector.broadcast %0 : f32 to vector<8x128xf32>
    %966 = arith.mulf %965, %842 : vector<8x128xf32>
    %c1_414 = arith.constant 1 : index
    %967 = arith.index_cast %202 : i32 to index
    %c0_415 = arith.constant 0 : index
    %968 = vector.load %arg4[%c1_414, %967, %c0_415] : memref<4x8x128xf32, #tpu.memory_space<vmem>>, vector<1x8x128xf32>
    %969 = vector.shape_cast %968 : vector<1x8x128xf32> to vector<8x128xf32>
    %970 = vector.shape_cast %966 : vector<8x128xf32> to vector<1x8x128xf32>
    tpu.vector_store %arg4[%c1_414, %967, %c0_415], %970 {strides = array<i32>} : memref<4x8x128xf32, #tpu.memory_space<vmem>>, vector<1x8x128xf32>,
    %971 = vector.broadcast %0 : f32 to vector<8x128xf32>
    %972 = arith.mulf %971, %890 : vector<8x128xf32>
    %c2_416 = arith.constant 2 : index
    %973 = arith.index_cast %202 : i32 to index
    %c0_417 = arith.constant 0 : index
    %974 = vector.load %arg4[%c2_416, %973, %c0_417] : memref<4x8x128xf32, #tpu.memory_space<vmem>>, vector<1x8x128xf32>
    %975 = vector.shape_cast %974 : vector<1x8x128xf32> to vector<8x128xf32>
    %976 = vector.shape_cast %972 : vector<8x128xf32> to vector<1x8x128xf32>
    tpu.vector_store %arg4[%c2_416, %973, %c0_417], %976 {strides = array<i32>} : memref<4x8x128xf32, #tpu.memory_space<vmem>>, vector<1x8x128xf32>,
    %977 = vector.broadcast %0 : f32 to vector<8x128xf32>
    %978 = arith.mulf %977, %958 : vector<8x128xf32>
    %c3_418 = arith.constant 3 : index
    %979 = arith.index_cast %202 : i32 to index
    %c0_419 = arith.constant 0 : index
    %980 = vector.load %arg4[%c3_418, %979, %c0_419] : memref<4x8x128xf32, #tpu.memory_space<vmem>>, vector<1x8x128xf32>
    %981 = vector.shape_cast %980 : vector<1x8x128xf32> to vector<8x128xf32>
    %982 = vector.shape_cast %978 : vector<8x128xf32> to vector<1x8x128xf32>
    tpu.vector_store %arg4[%c3_418, %979, %c0_419], %982 {strides = array<i32>} : memref<4x8x128xf32, #tpu.memory_space<vmem>>, vector<1x8x128xf32>,
    %c1_i32_420 = arith.constant 1 : i32
    return
  }
  func.func @transform_0(%arg0: i32) -> i32 {
    %c0_i32 = arith.constant 0 : i32
    %c0_i32_0 = arith.constant 0 : i32
    return %c0_i32 : i32
  }
  func.func @transform_1(%arg0: i32) -> (i32, i32) {
    %c0_i32 = arith.constant 0 : i32
    %c0_i32_0 = arith.constant 0 : i32
    %c0_i32_1 = arith.constant 0 : i32
    return %c0_i32, %c0_i32_0 : i32, i32
  }
  func.func @transform_2(%arg0: i32) -> (i32, i32, i32) {
    %c0_i32 = arith.constant 0 : i32
    %c0_i32_0 = arith.constant 0 : i32
    %c0_i32_1 = arith.constant 0 : i32
    return %c0_i32, %arg0, %c0_i32_0 : i32, i32, i32
  }
  func.func @transform_3(%arg0: i32) -> (i32, i32, i32) {
    %c0_i32 = arith.constant 0 : i32
    %c0_i32_0 = arith.constant 0 : i32
    %c0_i32_1 = arith.constant 0 : i32
    return %c0_i32, %arg0, %c0_i32_0 : i32, i32, i32
  }
}

</mosaic_0001>

<llo_original>
// kernel: tpu_custom_call.1
$region0: #{tpu_custom_call.1}
  #allocation0 [shape = 'u32[]', space=smem, size = 0x4, offset = 0x4, fixed_abs, tag = 'smem constant byte address 0x4 - core index']
  #allocation1 [shape = 'u32[72,128]{1,0:T(1,128)}', space=vmem, size = 0x9000, scoped, tag = 'internal scratch']
  %s0 = inlined_call_operand.hbm [shape: f32[8], index: 0, kind: input, shape index: {}]
  %s1 = inlined_call_operand.hbm [shape: f32[6,32], index: 1, kind: input, shape index: {}]
  %s2 = inlined_call_operand.hbm [shape: f32[4,8,128], index: 2, kind: input, shape index: {}]
  %s3 = inlined_call_operand.hbm [shape: f32[4,8,128], index: 3, kind: output, shape index: {}]
  %s4 = sld [smem:[#allocation0]]
  $region34: #{tpu_custom_call.1} parent=0
    _
  %s6 = ssub.s32 1, %s4
  %s7 = scalar_select 0, %s6, %s4
  $region1: #{tpu_custom_call.1} parent=0
    #allocation2 [shape = 'u8[512]{0}', space=smem, size = 0x200, scoped, tag = 'input window, operand 0, single buffered']
    #allocation3 [shape = 's32[1]{0}', space=sflag, size = 0x4, scoped, tag = 'scoped memory for tpu_custom_call.1']
    #allocation4 [shape = 's32[1]{0}', space=sflag, size = 0x4, scoped, tag = 'scoped memory for tpu_custom_call.1']
    #allocation5 [shape = 's32[1]{0}', space=sflag, size = 0x4, scoped, tag = 'scoped memory for tpu_custom_call.1']
    #allocation6 [shape = 'u8[4096]{0}', space=smem, size = 0x1000, scoped, tag = 'input window, operand 1, single buffered']
    #allocation7 [shape = 's32[1]{0}', space=sflag, size = 0x4, scoped, tag = 'scoped memory for tpu_custom_call.1']
    #allocation8 [shape = 'u8[16384]{0}', space=vmem, size = 0x4000, scoped, tag = 'input window, operand 2, single buffered']
    #allocation9 [shape = 'u8[16384]{0}', space=vmem, size = 0x4000, scoped, tag = 'output window, operand 0, single buffered']
    %8 = vsyncpa [#allocation5], 0
    %9 = vsyncpa [#allocation7], 0
    %10 = vsyncpa [#allocation3], 0
    %11 = vsyncpa [#allocation4], 0
    // Predicated region
    $region2: #{tpu_custom_call.1} parent=1 // pred_check
      _
    $region3: #{tpu_custom_call.1} parent=1 // pred_check_branch
      %13 = sbr.rel (0) target = $region5
    $region4: #{tpu_custom_call.1} parent=1 // pred_region
      %15 = vsyncadd [#allocation5], 0
      %s17 = sshll.u32 %s0, 4
      %s18 = int_to_ptr.hbm [resolvable:$true] %s17
      %20 = dma.hbm_to_smem %s18, 16, [#allocation2], [#allocation5]
    $region5: #{tpu_custom_call.1} parent=1 // pred_fallthru
      _
    // Predicated region
    $region6: #{tpu_custom_call.1} parent=1 // pred_check
      _
    $region7: #{tpu_custom_call.1} parent=1 // pred_check_branch
      %22 = sbr.rel (0) target = $region9
    $region8: #{tpu_custom_call.1} parent=1 // pred_region
      %24 = vsyncadd [#allocation7], 0
      %s26 = sshll.u32 %s1, 4
      %s27 = int_to_ptr.hbm [resolvable:$true] %s26
      %29 = dma.hbm_to_smem %s27, 128, [#allocation6], [#allocation7]
    $region9: #{tpu_custom_call.1} parent=1 // pred_fallthru
      _
    // Predicated region
    $region10: #{tpu_custom_call.1} parent=1 // pred_check
      _
    $region11: #{tpu_custom_call.1} parent=1 // pred_check_branch
      %31 = sbr.rel (0) target = $region13
    $region12: #{tpu_custom_call.1} parent=1 // pred_region
      %33 = vsyncadd [#allocation3], 0
      %s34 = sshll.u32 %s2, 4
      %s35 = int_to_ptr.hbm [resolvable:$true] %s34
      %s36 = sshll.u32 [#allocation8], 4
      %s37 = int_to_ptr.vmem [resolvable:$true] %s36
      %42 = dma.hbm_to_vmem [thread:$0]  %s35, 512, %s37, [#allocation3], 128, 128, 8
    $region13: #{tpu_custom_call.1} parent=1 // pred_fallthru
      _
    // Predicated region
    $region14: #{tpu_custom_call.1} parent=1 // pred_check
      _
    $region15: #{tpu_custom_call.1} parent=1 // pred_check_branch
      %44 = sbr.rel (0) target = $region17
    $region16: #{tpu_custom_call.1} parent=1 // pred_region
      %46 = dma.done [#allocation5], 16
    $region17: #{tpu_custom_call.1} parent=1 // pred_fallthru
      _
    // Predicated region
    $region18: #{tpu_custom_call.1} parent=1 // pred_check
      _
    $region19: #{tpu_custom_call.1} parent=1 // pred_check_branch
      %48 = sbr.rel (0) target = $region21
    $region20: #{tpu_custom_call.1} parent=1 // pred_region
      %50 = dma.done [#allocation7], 128
    $region21: #{tpu_custom_call.1} parent=1 // pred_fallthru
      _
    // Predicated region
    $region22: #{tpu_custom_call.1} parent=1 // pred_check
      _
    $region23: #{tpu_custom_call.1} parent=1 // pred_check_branch
      %52 = sbr.rel (0) target = $region25
    $region24: #{tpu_custom_call.1} parent=1 // pred_region
      %54 = dma.done [#allocation3], 512
    $region25: #{tpu_custom_call.1} parent=1 // pred_fallthru
      _
    %55 = sfence
    %s56 = sld [smem:[#allocation2]]
    %s57 = sld [smem:[#allocation2 + $0x1]]
    %s58 = sld [smem:[#allocation2 + $0x2]]
    %s59 = sld [smem:[#allocation2 + $0x3]]
    %s60 = sld [smem:[#allocation2 + $0x4]]
    %s61 = sld [smem:[#allocation2 + $0x5]]
    %s62 = sld [smem:[#allocation2 + $0x6]]
    %s63 = sld [smem:[#allocation6]]
    %s64 = sld [smem:[#allocation6 + $0x1]]
    %s65 = sld [smem:[#allocation6 + $0x2]]
    %s66 = sld [smem:[#allocation6 + $0x3]]
    %s67 = sld [smem:[#allocation6 + $0x4]]
    %s68 = sld [smem:[#allocation6 + $0x5]]
    %s69 = sld [smem:[#allocation6 + $0x6]]
    %s70 = sld [smem:[#allocation6 + $0x7]]
    %s71 = sld [smem:[#allocation6 + $0x8]]
    %s72 = sld [smem:[#allocation6 + $0x9]]
    %s73 = sld [smem:[#allocation6 + $0xa]]
    %s74 = sld [smem:[#allocation6 + $0xb]]
    %s75 = sld [smem:[#allocation6 + $0xc]]
    %s76 = sld [smem:[#allocation6 + $0xd]]
    %s77 = sld [smem:[#allocation6 + $0xe]]
    %s78 = sld [smem:[#allocation6 + $0xf]]
    %s79 = sld [smem:[#allocation6 + $0x10]]
    %s80 = sld [smem:[#allocation6 + $0x11]]
    %s81 = sld [smem:[#allocation6 + $0x12]]
    %s82 = sld [smem:[#allocation6 + $0x13]]
    %s83 = sld [smem:[#allocation6 + $0x14]]
    %s84 = sld [smem:[#allocation6 + $0x15]]
    %s85 = sld [smem:[#allocation6 + $0x16]]
    %s86 = sld [smem:[#allocation6 + $0x17]]
    %s87 = sld [smem:[#allocation6 + $0x18]]
    %s88 = sld [smem:[#allocation6 + $0x19]]
    %s89 = sld [smem:[#allocation6 + $0x1a]]
    %s90 = sld [smem:[#allocation6 + $0x1b]]
    %s91 = sld [smem:[#allocation6 + $0x1c]]
    %s92 = sld [smem:[#allocation6 + $0x1d]]
    %s93 = sld [smem:[#allocation6 + $0x1e]]
    %s94 = sld [smem:[#allocation6 + $0x1f]]
    %s95 = sld [smem:[#allocation6 + $0x80]]
    %s96 = sld [smem:[#allocation6 + $0x81]]
    %s97 = sld [smem:[#allocation6 + $0x82]]
    %s98 = sld [smem:[#allocation6 + $0x83]]
    %s99 = sld [smem:[#allocation6 + $0x84]]
    %s100 = sld [smem:[#allocation6 + $0x85]]
    %s101 = sld [smem:[#allocation6 + $0x86]]
    %s102 = sld [smem:[#allocation6 + $0x87]]
    %s103 = sld [smem:[#allocation6 + $0x88]]
    %s104 = sld [smem:[#allocation6 + $0x89]]
    %s105 = sld [smem:[#allocation6 + $0x8a]]
    %s106 = sld [smem:[#allocation6 + $0x8b]]
    %s107 = sld [smem:[#allocation6 + $0x8c]]
    %s108 = sld [smem:[#allocation6 + $0x8d]]
    %s109 = sld [smem:[#allocation6 + $0x8e]]
    %s110 = sld [smem:[#allocation6 + $0x8f]]
    %s111 = sld [smem:[#allocation6 + $0x90]]
    %s112 = sld [smem:[#allocation6 + $0x91]]
    %s113 = sld [smem:[#allocation6 + $0x92]]
    %s114 = sld [smem:[#allocation6 + $0x93]]
    %s115 = sld [smem:[#allocation6 + $0x94]]
    %s116 = sld [smem:[#allocation6 + $0x95]]
    %s117 = sld [smem:[#allocation6 + $0x96]]
    %s118 = sld [smem:[#allocation6 + $0x97]]
    %s119 = sld [smem:[#allocation6 + $0x98]]
    %s120 = sld [smem:[#allocation6 + $0x99]]
    %s121 = sld [smem:[#allocation6 + $0x9a]]
    %s122 = sld [smem:[#allocation6 + $0x9b]]
    %s123 = sld [smem:[#allocation6 + $0x9c]]
    %s124 = sld [smem:[#allocation6 + $0x9d]]
    %s125 = sld [smem:[#allocation6 + $0x9e]]
    %s126 = sld [smem:[#allocation6 + $0x9f]]
    %s127 = sld [smem:[#allocation6 + $0x100]]
    %s128 = sld [smem:[#allocation6 + $0x101]]
    %s129 = sld [smem:[#allocation6 + $0x102]]
    %s130 = sld [smem:[#allocation6 + $0x103]]
    %s131 = sld [smem:[#allocation6 + $0x104]]
    %s132 = sld [smem:[#allocation6 + $0x105]]
    %s133 = sld [smem:[#allocation6 + $0x106]]
    %s134 = sld [smem:[#allocation6 + $0x107]]
    %s135 = sld [smem:[#allocation6 + $0x108]]
    %s136 = sld [smem:[#allocation6 + $0x109]]
    %s137 = sld [smem:[#allocation6 + $0x10a]]
    %s138 = sld [smem:[#allocation6 + $0x10b]]
    %s139 = sld [smem:[#allocation6 + $0x10c]]
    %s140 = sld [smem:[#allocation6 + $0x10d]]
    %s141 = sld [smem:[#allocation6 + $0x10e]]
    %s142 = sld [smem:[#allocation6 + $0x10f]]
    %s143 = sld [smem:[#allocation6 + $0x110]]
    %s144 = sld [smem:[#allocation6 + $0x111]]
    %s145 = sld [smem:[#allocation6 + $0x112]]
    %s146 = sld [smem:[#allocation6 + $0x113]]
    %s147 = sld [smem:[#allocation6 + $0x114]]
    %s148 = sld [smem:[#allocation6 + $0x115]]
    %s149 = sld [smem:[#allocation6 + $0x116]]
    %s150 = sld [smem:[#allocation6 + $0x117]]
    %s151 = sld [smem:[#allocation6 + $0x118]]
    %s152 = sld [smem:[#allocation6 + $0x119]]
    %s153 = sld [smem:[#allocation6 + $0x11a]]
    %s154 = sld [smem:[#allocation6 + $0x11b]]
    %s155 = sld [smem:[#allocation6 + $0x11c]]
    %s156 = sld [smem:[#allocation6 + $0x11d]]
    %s157 = sld [smem:[#allocation6 + $0x11e]]
    %s158 = sld [smem:[#allocation6 + $0x11f]]
    %s159 = sld [smem:[#allocation6 + $0x180]]
    %s160 = sld [smem:[#allocation6 + $0x181]]
    %s161 = sld [smem:[#allocation6 + $0x182]]
    %s162 = sld [smem:[#allocation6 + $0x183]]
    %s163 = sld [smem:[#allocation6 + $0x184]]
    %s164 = sld [smem:[#allocation6 + $0x185]]
    %s165 = sld [smem:[#allocation6 + $0x186]]
    %s166 = sld [smem:[#allocation6 + $0x187]]
    %s167 = sld [smem:[#allocation6 + $0x188]]
    %s168 = sld [smem:[#allocation6 + $0x189]]
    %s169 = sld [smem:[#allocation6 + $0x18a]]
    %s170 = sld [smem:[#allocation6 + $0x18b]]
    %s171 = sld [smem:[#allocation6 + $0x18c]]
    %s172 = sld [smem:[#allocation6 + $0x18d]]
    %s173 = sld [smem:[#allocation6 + $0x18e]]
    %s174 = sld [smem:[#allocation6 + $0x18f]]
    %s175 = sld [smem:[#allocation6 + $0x190]]
    %s176 = sld [smem:[#allocation6 + $0x191]]
    %s177 = sld [smem:[#allocation6 + $0x192]]
    %s178 = sld [smem:[#allocation6 + $0x193]]
    %s179 = sld [smem:[#allocation6 + $0x194]]
    %s180 = sld [smem:[#allocation6 + $0x195]]
    %s181 = sld [smem:[#allocation6 + $0x196]]
    %s182 = sld [smem:[#allocation6 + $0x197]]
    %s183 = sld [smem:[#allocation6 + $0x198]]
    %s184 = sld [smem:[#allocation6 + $0x199]]
    %s185 = sld [smem:[#allocation6 + $0x19a]]
    %s186 = sld [smem:[#allocation6 + $0x19b]]
    %s187 = sld [smem:[#allocation6 + $0x19c]]
    %s188 = sld [smem:[#allocation6 + $0x19d]]
    %s189 = sld [smem:[#allocation6 + $0x19e]]
    %s190 = sld [smem:[#allocation6 + $0x19f]]
    %s191 = sld [smem:[#allocation6 + $0x200]]
    %s192 = sld [smem:[#allocation6 + $0x201]]
    %s193 = sld [smem:[#allocation6 + $0x202]]
    %s194 = sld [smem:[#allocation6 + $0x203]]
    %s195 = sld [smem:[#allocation6 + $0x204]]
    %s196 = sld [smem:[#allocation6 + $0x205]]
    %s197 = sld [smem:[#allocation6 + $0x206]]
    %s198 = sld [smem:[#allocation6 + $0x207]]
    %s199 = sld [smem:[#allocation6 + $0x208]]
    %s200 = sld [smem:[#allocation6 + $0x209]]
    %s201 = sld [smem:[#allocation6 + $0x20a]]
    %s202 = sld [smem:[#allocation6 + $0x20b]]
    %s203 = sld [smem:[#allocation6 + $0x20c]]
    %s204 = sld [smem:[#allocation6 + $0x20d]]
    %s205 = sld [smem:[#allocation6 + $0x20e]]
    %s206 = sld [smem:[#allocation6 + $0x20f]]
    %s207 = sld [smem:[#allocation6 + $0x210]]
    %s208 = sld [smem:[#allocation6 + $0x211]]
    %s209 = sld [smem:[#allocation6 + $0x212]]
    %s210 = sld [smem:[#allocation6 + $0x213]]
    %s211 = sld [smem:[#allocation6 + $0x214]]
    %s212 = sld [smem:[#allocation6 + $0x215]]
    %s213 = sld [smem:[#allocation6 + $0x216]]
    %s214 = sld [smem:[#allocation6 + $0x217]]
    %s215 = sld [smem:[#allocation6 + $0x218]]
    %s216 = sld [smem:[#allocation6 + $0x219]]
    %s217 = sld [smem:[#allocation6 + $0x21a]]
    %s218 = sld [smem:[#allocation6 + $0x21b]]
    %s219 = sld [smem:[#allocation6 + $0x21c]]
    %s220 = sld [smem:[#allocation6 + $0x21d]]
    %s221 = sld [smem:[#allocation6 + $0x21e]]
    %s222 = sld [smem:[#allocation6 + $0x21f]]
    %s223 = sld [smem:[#allocation6 + $0x280]]
    %s224 = sld [smem:[#allocation6 + $0x281]]
    %s225 = sld [smem:[#allocation6 + $0x282]]
    %s226 = sld [smem:[#allocation6 + $0x283]]
    %s227 = sld [smem:[#allocation6 + $0x284]]
    %s228 = sld [smem:[#allocation6 + $0x285]]
    %s229 = sld [smem:[#allocation6 + $0x286]]
    %s230 = sld [smem:[#allocation6 + $0x287]]
    %s231 = sld [smem:[#allocation6 + $0x288]]
    %s232 = sld [smem:[#allocation6 + $0x289]]
    %s233 = sld [smem:[#allocation6 + $0x28a]]
    %s234 = sld [smem:[#allocation6 + $0x28b]]
    %s235 = sld [smem:[#allocation6 + $0x28c]]
    %s236 = sld [smem:[#allocation6 + $0x28d]]
    %s237 = sld [smem:[#allocation6 + $0x28e]]
    %s238 = sld [smem:[#allocation6 + $0x28f]]
    %s239 = sld [smem:[#allocation6 + $0x290]]
    %s240 = sld [smem:[#allocation6 + $0x291]]
    %s241 = sld [smem:[#allocation6 + $0x292]]
    %s242 = sld [smem:[#allocation6 + $0x293]]
    %s243 = sld [smem:[#allocation6 + $0x294]]
    %s244 = sld [smem:[#allocation6 + $0x295]]
    %s245 = sld [smem:[#allocation6 + $0x296]]
    %s246 = sld [smem:[#allocation6 + $0x297]]
    %s247 = sld [smem:[#allocation6 + $0x298]]
    %s248 = sld [smem:[#allocation6 + $0x299]]
    %s249 = sld [smem:[#allocation6 + $0x29a]]
    %s250 = sld [smem:[#allocation6 + $0x29b]]
    %s251 = sld [smem:[#allocation6 + $0x29c]]
    %s252 = sld [smem:[#allocation6 + $0x29d]]
    %s253 = sld [smem:[#allocation6 + $0x29e]]
    %s254 = sld [smem:[#allocation6 + $0x29f]]
    %v255 = vld [vmem:[#allocation8] sm:$0xff]
    %s256 = sadd.s32 0, 8
    %s257 = scalar_lea.vmem [#allocation8], %s256
    %v258 = vld [vmem:[%s257] sm:$0xff]
    %s259 = sadd.s32 0, 16
    %s260 = scalar_lea.vmem [#allocation8], %s259
    %v261 = vld [vmem:[%s260] sm:$0xff]
    %s262 = sadd.s32 0, 24
    %s263 = scalar_lea.vmem [#allocation8], %s262
    %v264 = vld [vmem:[%s263] sm:$0xff]
    %v265 = vstv %s63
    %v266 = vmul.f32 %v255, %v265
    %v267 = vstv %s95
    %v268 = vmul.f32 %v258, %v267
    %v269 = vadd.f32 %v266, %v268
    %v270 = vstv %s127
    %v271 = vadd.f32 %v269, %v270
    %v272 = vtanh.pop %v271
    %v273 = vmul.f32 %v272, %v272
    %v274 = vstv %s159
    %v275 = vmul.f32 %v272, %v274
    %v276 = vadd.f32 %v275, 0.0
    %v277 = vstv %s191
    %v278 = vmul.f32 %v273, %v277
    %v279 = vadd.f32 %v278, 0.0
    %v280 = vstv %s223
    %v281 = vmul.f32 %v273, %v280
    %v282 = vadd.f32 %v281, 0.0
    %v283 = vstv %s64
    %v284 = vmul.f32 %v255, %v283
    %v285 = vstv %s96
    %v286 = vmul.f32 %v258, %v285
    %v287 = vadd.f32 %v284, %v286
    %v288 = vstv %s128
    %v289 = vadd.f32 %v287, %v288
    %v290 = vtanh.pop %v289
    %v291 = vmul.f32 %v290, %v290
    %v292 = vstv %s160
    %v293 = vmul.f32 %v290, %v292
    %v294 = vadd.f32 %v276, %v293
    %v295 = vstv %s192
    %v296 = vmul.f32 %v291, %v295
    %v297 = vadd.f32 %v279, %v296
    %v298 = vstv %s224
    %v299 = vmul.f32 %v291, %v298
    %v300 = vadd.f32 %v282, %v299
    %v301 = vstv %s65
    %v302 = vmul.f32 %v255, %v301
    %v303 = vstv %s97
    %v304 = vmul.f32 %v258, %v303
    %v305 = vadd.f32 %v302, %v304
    %v306 = vstv %s129
    %v307 = vadd.f32 %v305, %v306
    %v308 = vtanh.pop %v307
    %v309 = vmul.f32 %v308, %v308
    %v310 = vstv %s161
    %v311 = vmul.f32 %v308, %v310
    %v312 = vadd.f32 %v294, %v311
    %v313 = vstv %s193
    %v314 = vmul.f32 %v309, %v313
    %v315 = vadd.f32 %v297, %v314
    %v316 = vstv %s225
    %v317 = vmul.f32 %v309, %v316
    %v318 = vadd.f32 %v300, %v317
    %v319 = vstv %s66
    %v320 = vmul.f32 %v255, %v319
    %v321 = vstv %s98
    %v322 = vmul.f32 %v258, %v321
    %v323 = vadd.f32 %v320, %v322
    %v324 = vstv %s130
    %v325 = vadd.f32 %v323, %v324
    %v326 = vtanh.pop %v325
    %v327 = vmul.f32 %v326, %v326
    %v328 = vstv %s162
    %v329 = vmul.f32 %v326, %v328
    %v330 = vadd.f32 %v312, %v329
    %v331 = vstv %s194
    %v332 = vmul.f32 %v327, %v331
    %v333 = vadd.f32 %v315, %v332
    %v334 = vstv %s226
    %v335 = vmul.f32 %v327, %v334
    %v336 = vadd.f32 %v318, %v335
    %v337 = vstv %s67
    %v338 = vmul.f32 %v255, %v337
    %v339 = vstv %s99
    %v340 = vmul.f32 %v258, %v339
    %v341 = vadd.f32 %v338, %v340
    %v342 = vstv %s131
    %v343 = vadd.f32 %v341, %v342
    %v344 = vtanh.pop %v343
    %v345 = vmul.f32 %v344, %v344
    %v346 = vstv %s163
    %v347 = vmul.f32 %v344, %v346
    %v348 = vadd.f32 %v330, %v347
    %v349 = vstv %s195
    %v350 = vmul.f32 %v345, %v349
    %v351 = vadd.f32 %v333, %v350
    %v352 = vstv %s227
    %v353 = vmul.f32 %v345, %v352
    %v354 = vadd.f32 %v336, %v353
    %v355 = vstv %s68
    %v356 = vmul.f32 %v255, %v355
    %v357 = vstv %s100
    %v358 = vmul.f32 %v258, %v357
    %v359 = vadd.f32 %v356, %v358
    %v360 = vstv %s132
    %v361 = vadd.f32 %v359, %v360
    %v362 = vtanh.pop %v361
    %v363 = vmul.f32 %v362, %v362
    %v364 = vstv %s164
    %v365 = vmul.f32 %v362, %v364
    %v366 = vadd.f32 %v348, %v365
    %v367 = vstv %s196
    %v368 = vmul.f32 %v363, %v367
    %v369 = vadd.f32 %v351, %v368
    %v370 = vstv %s228
    %v371 = vmul.f32 %v363, %v370
    %v372 = vadd.f32 %v354, %v371
    %v373 = vstv %s69
    %v374 = vmul.f32 %v255, %v373
    %v375 = vstv %s101
    %v376 = vmul.f32 %v258, %v375
    %v377 = vadd.f32 %v374, %v376
    %v378 = vstv %s133
    %v379 = vadd.f32 %v377, %v378
    %v380 = vtanh.pop %v379
    %v381 = vmul.f32 %v380, %v380
    %v382 = vstv %s165
    %v383 = vmul.f32 %v380, %v382
    %v384 = vadd.f32 %v366, %v383
    %v385 = vstv %s197
    %v386 = vmul.f32 %v381, %v385
    %v387 = vadd.f32 %v369, %v386
    %v388 = vstv %s229
    %v389 = vmul.f32 %v381, %v388
    %v390 = vadd.f32 %v372, %v389
    %v391 = vstv %s70
    %v392 = vmul.f32 %v255, %v391
    %v393 = vstv %s102
    %v394 = vmul.f32 %v258, %v393
    %v395 = vadd.f32 %v392, %v394
    %v396 = vstv %s134
    %v397 = vadd.f32 %v395, %v396
    %v398 = vtanh.pop %v397
    %v399 = vmul.f32 %v398, %v398
    %v400 = vstv %s166
    %v401 = vmul.f32 %v398, %v400
    %v402 = vadd.f32 %v384, %v401
    %v403 = vstv %s198
    %v404 = vmul.f32 %v399, %v403
    %v405 = vadd.f32 %v387, %v404
    %v406 = vstv %s230
    %v407 = vmul.f32 %v399, %v406
    %v408 = vadd.f32 %v390, %v407
    %v409 = vstv %s71
    %v410 = vmul.f32 %v255, %v409
    %v411 = vstv %s103
    %v412 = vmul.f32 %v258, %v411
    %v413 = vadd.f32 %v410, %v412
    %v414 = vstv %s135
    %v415 = vadd.f32 %v413, %v414
    %v416 = vtanh.pop %v415
    %v417 = vmul.f32 %v416, %v416
    %v418 = vstv %s167
    %v419 = vmul.f32 %v416, %v418
    %v420 = vadd.f32 %v402, %v419
    %v421 = vstv %s199
    %v422 = vmul.f32 %v417, %v421
    %v423 = vadd.f32 %v405, %v422
    %v424 = vstv %s231
    %v425 = vmul.f32 %v417, %v424
    %v426 = vadd.f32 %v408, %v425
    %v427 = vstv %s72
    %v428 = vmul.f32 %v255, %v427
    %v429 = vstv %s104
    %v430 = vmul.f32 %v258, %v429
    %v431 = vadd.f32 %v428, %v430
    %v432 = vstv %s136
    %v433 = vadd.f32 %v431, %v432
    %v434 = vtanh.pop %v433
    %v435 = vmul.f32 %v434, %v434
    %v436 = vstv %s168
    %v437 = vmul.f32 %v434, %v436
    %v438 = vadd.f32 %v420, %v437
    %v439 = vstv %s200
    %v440 = vmul.f32 %v435, %v439
    %v441 = vadd.f32 %v423, %v440
    %v442 = vstv %s232
    %v443 = vmul.f32 %v435, %v442
    %v444 = vadd.f32 %v426, %v443
    %v445 = vstv %s73
    %v446 = vmul.f32 %v255, %v445
    %v447 = vstv %s105
    %v448 = vmul.f32 %v258, %v447
    %v449 = vadd.f32 %v446, %v448
    %v450 = vstv %s137
    %v451 = vadd.f32 %v449, %v450
    %v452 = vtanh.pop %v451
    %v453 = vmul.f32 %v452, %v452
    %v454 = vstv %s169
    %v455 = vmul.f32 %v452, %v454
    %v456 = vadd.f32 %v438, %v455
    %v457 = vstv %s201
    %v458 = vmul.f32 %v453, %v457
    %v459 = vadd.f32 %v441, %v458
    %v460 = vstv %s233
    %v461 = vmul.f32 %v453, %v460
    %v462 = vadd.f32 %v444, %v461
    %v463 = vstv %s74
    %v464 = vmul.f32 %v255, %v463
    %v465 = vstv %s106
    %v466 = vmul.f32 %v258, %v465
    %v467 = vadd.f32 %v464, %v466
    %v468 = vstv %s138
    %v469 = vadd.f32 %v467, %v468
    %v470 = vtanh.pop %v469
    %v471 = vmul.f32 %v470, %v470
    %v472 = vstv %s170
    %v473 = vmul.f32 %v470, %v472
    %v474 = vadd.f32 %v456, %v473
    %v475 = vstv %s202
    %v476 = vmul.f32 %v471, %v475
    %v477 = vadd.f32 %v459, %v476
    %v478 = vstv %s234
    %v479 = vmul.f32 %v471, %v478
    %v480 = vadd.f32 %v462, %v479
    %v481 = vstv %s75
    %v482 = vmul.f32 %v255, %v481
    %v483 = vstv %s107
    %v484 = vmul.f32 %v258, %v483
    %v485 = vadd.f32 %v482, %v484
    %v486 = vstv %s139
    %v487 = vadd.f32 %v485, %v486
    %v488 = vtanh.pop %v487
    %v489 = vmul.f32 %v488, %v488
    %v490 = vstv %s171
    %v491 = vmul.f32 %v488, %v490
    %v492 = vadd.f32 %v474, %v491
    %v493 = vstv %s203
    %v494 = vmul.f32 %v489, %v493
    %v495 = vadd.f32 %v477, %v494
    %v496 = vstv %s235
    %v497 = vmul.f32 %v489, %v496
    %v498 = vadd.f32 %v480, %v497
    %v499 = vstv %s76
    %v500 = vmul.f32 %v255, %v499
    %v501 = vstv %s108
    %v502 = vmul.f32 %v258, %v501
    %v503 = vadd.f32 %v500, %v502
    %v504 = vstv %s140
    %v505 = vadd.f32 %v503, %v504
    %v506 = vtanh.pop %v505
    %v507 = vmul.f32 %v506, %v506
    %v508 = vstv %s172
    %v509 = vmul.f32 %v506, %v508
    %v510 = vadd.f32 %v492, %v509
    %v511 = vstv %s204
    %v512 = vmul.f32 %v507, %v511
    %v513 = vadd.f32 %v495, %v512
    %v514 = vstv %s236
    %v515 = vmul.f32 %v507, %v514
    %v516 = vadd.f32 %v498, %v515
    %v517 = vstv %s77
    %v518 = vmul.f32 %v255, %v517
    %v519 = vstv %s109
    %v520 = vmul.f32 %v258, %v519
    %v521 = vadd.f32 %v518, %v520
    %v522 = vstv %s141
    %v523 = vadd.f32 %v521, %v522
    %v524 = vtanh.pop %v523
    %v525 = vmul.f32 %v524, %v524
    %v526 = vstv %s173
    %v527 = vmul.f32 %v524, %v526
    %v528 = vadd.f32 %v510, %v527
    %v529 = vstv %s205
    %v530 = vmul.f32 %v525, %v529
    %v531 = vadd.f32 %v513, %v530
    %v532 = vstv %s237
    %v533 = vmul.f32 %v525, %v532
    %v534 = vadd.f32 %v516, %v533
    %v535 = vstv %s78
    %v536 = vmul.f32 %v255, %v535
    %v537 = vstv %s110
    %v538 = vmul.f32 %v258, %v537
    %v539 = vadd.f32 %v536, %v538
    %v540 = vstv %s142
    %v541 = vadd.f32 %v539, %v540
    %v542 = vtanh.pop %v541
    %v543 = vmul.f32 %v542, %v542
    %v544 = vstv %s174
    %v545 = vmul.f32 %v542, %v544
    %v546 = vadd.f32 %v528, %v545
    %v547 = vstv %s206
    %v548 = vmul.f32 %v543, %v547
    %v549 = vadd.f32 %v531, %v548
    %v550 = vstv %s238
    %v551 = vmul.f32 %v543, %v550
    %v552 = vadd.f32 %v534, %v551
    %v553 = vstv %s79
    %v554 = vmul.f32 %v255, %v553
    %v555 = vstv %s111
    %v556 = vmul.f32 %v258, %v555
    %v557 = vadd.f32 %v554, %v556
    %v558 = vstv %s143
    %v559 = vadd.f32 %v557, %v558
    %v560 = vtanh.pop %v559
    %v561 = vmul.f32 %v560, %v560
    %v562 = vstv %s175
    %v563 = vmul.f32 %v560, %v562
    %v564 = vadd.f32 %v546, %v563
    %v565 = vstv %s207
    %v566 = vmul.f32 %v561, %v565
    %v567 = vadd.f32 %v549, %v566
    %v568 = vstv %s239
    %v569 = vmul.f32 %v561, %v568
    %v570 = vadd.f32 %v552, %v569
    %v571 = vstv %s80
    %v572 = vmul.f32 %v255, %v571
    %v573 = vstv %s112
    %v574 = vmul.f32 %v258, %v573
    %v575 = vadd.f32 %v572, %v574
    %v576 = vstv %s144
    %v577 = vadd.f32 %v575, %v576
    %v578 = vtanh.pop %v577
    %v579 = vmul.f32 %v578, %v578
    %v580 = vstv %s176
    %v581 = vmul.f32 %v578, %v580
    %v582 = vadd.f32 %v564, %v581
    %v583 = vstv %s208
    %v584 = vmul.f32 %v579, %v583
    %v585 = vadd.f32 %v567, %v584
    %v586 = vstv %s240
    %v587 = vmul.f32 %v579, %v586
    %v588 = vadd.f32 %v570, %v587
    %v589 = vstv %s81
    %v590 = vmul.f32 %v255, %v589
    %v591 = vstv %s113
    %v592 = vmul.f32 %v258, %v591
    %v593 = vadd.f32 %v590, %v592
    %v594 = vstv %s145
    %v595 = vadd.f32 %v593, %v594
    %v596 = vtanh.pop %v595
    %v597 = vmul.f32 %v596, %v596
    %v598 = vstv %s177
    %v599 = vmul.f32 %v596, %v598
    %v600 = vadd.f32 %v582, %v599
    %v601 = vstv %s209
    %v602 = vmul.f32 %v597, %v601
    %v603 = vadd.f32 %v585, %v602
    %v604 = vstv %s241
    %v605 = vmul.f32 %v597, %v604
    %v606 = vadd.f32 %v588, %v605
    %v607 = vstv %s82
    %v608 = vmul.f32 %v255, %v607
    %v609 = vstv %s114
    %v610 = vmul.f32 %v258, %v609
    %v611 = vadd.f32 %v608, %v610
    %v612 = vstv %s146
    %v613 = vadd.f32 %v611, %v612
    %v614 = vtanh.pop %v613
    %v615 = vmul.f32 %v614, %v614
    %v616 = vstv %s178
    %v617 = vmul.f32 %v614, %v616
    %v618 = vadd.f32 %v600, %v617
    %v619 = vstv %s210
    %v620 = vmul.f32 %v615, %v619
    %v621 = vadd.f32 %v603, %v620
    %v622 = vstv %s242
    %v623 = vmul.f32 %v615, %v622
    %v624 = vadd.f32 %v606, %v623
    %v625 = vstv %s83
    %v626 = vmul.f32 %v255, %v625
    %v627 = vstv %s115
    %v628 = vmul.f32 %v258, %v627
    %v629 = vadd.f32 %v626, %v628
    %v630 = vstv %s147
    %v631 = vadd.f32 %v629, %v630
    %v632 = vtanh.pop %v631
    %v633 = vmul.f32 %v632, %v632
    %v634 = vstv %s179
    %v635 = vmul.f32 %v632, %v634
    %v636 = vadd.f32 %v618, %v635
    %v637 = vstv %s211
    %v638 = vmul.f32 %v633, %v637
    %v639 = vadd.f32 %v621, %v638
    %v640 = vstv %s243
    %v641 = vmul.f32 %v633, %v640
    %v642 = vadd.f32 %v624, %v641
    %v643 = vstv %s84
    %v644 = vmul.f32 %v255, %v643
    %v645 = vstv %s116
    %v646 = vmul.f32 %v258, %v645
    %v647 = vadd.f32 %v644, %v646
    %v648 = vstv %s148
    %v649 = vadd.f32 %v647, %v648
    %v650 = vtanh.pop %v649
    %v651 = vmul.f32 %v650, %v650
    %v652 = vstv %s180
    %v653 = vmul.f32 %v650, %v652
    %v654 = vadd.f32 %v636, %v653
    %v655 = vstv %s212
    %v656 = vmul.f32 %v651, %v655
    %v657 = vadd.f32 %v639, %v656
    %v658 = vstv %s244
    %v659 = vmul.f32 %v651, %v658
    %v660 = vadd.f32 %v642, %v659
    %v661 = vstv %s85
    %v662 = vmul.f32 %v255, %v661
    %v663 = vstv %s117
    %v664 = vmul.f32 %v258, %v663
    %v665 = vadd.f32 %v662, %v664
    %v666 = vstv %s149
    %v667 = vadd.f32 %v665, %v666
    %v668 = vtanh.pop %v667
    %v669 = vmul.f32 %v668, %v668
    %v670 = vstv %s181
    %v671 = vmul.f32 %v668, %v670
    %v672 = vadd.f32 %v654, %v671
    %v673 = vstv %s213
    %v674 = vmul.f32 %v669, %v673
    %v675 = vadd.f32 %v657, %v674
    %v676 = vstv %s245
    %v677 = vmul.f32 %v669, %v676
    %v678 = vadd.f32 %v660, %v677
    %v679 = vstv %s86
    %v680 = vmul.f32 %v255, %v679
    %v681 = vstv %s118
    %v682 = vmul.f32 %v258, %v681
    %v683 = vadd.f32 %v680, %v682
    %v684 = vstv %s150
    %v685 = vadd.f32 %v683, %v684
    %v686 = vtanh.pop %v685
    %v687 = vmul.f32 %v686, %v686
    %v688 = vstv %s182
    %v689 = vmul.f32 %v686, %v688
    %v690 = vadd.f32 %v672, %v689
    %v691 = vstv %s214
    %v692 = vmul.f32 %v687, %v691
    %v693 = vadd.f32 %v675, %v692
    %v694 = vstv %s246
    %v695 = vmul.f32 %v687, %v694
    %v696 = vadd.f32 %v678, %v695
    %v697 = vstv %s87
    %v698 = vmul.f32 %v255, %v697
    %v699 = vstv %s119
    %v700 = vmul.f32 %v258, %v699
    %v701 = vadd.f32 %v698, %v700
    %v702 = vstv %s151
    %v703 = vadd.f32 %v701, %v702
    %v704 = vtanh.pop %v703
    %v705 = vmul.f32 %v704, %v704
    %v706 = vstv %s183
    %v707 = vmul.f32 %v704, %v706
    %v708 = vadd.f32 %v690, %v707
    %v709 = vstv %s215
    %v710 = vmul.f32 %v705, %v709
    %v711 = vadd.f32 %v693, %v710
    %v712 = vstv %s247
    %v713 = vmul.f32 %v705, %v712
    %v714 = vadd.f32 %v696, %v713
    %v715 = vstv %s88
    %v716 = vmul.f32 %v255, %v715
    %v717 = vstv %s120
    %v718 = vmul.f32 %v258, %v717
    %v719 = vadd.f32 %v716, %v718
    %v720 = vstv %s152
    %v721 = vadd.f32 %v719, %v720
    %v722 = vtanh.pop %v721
    %v723 = vmul.f32 %v722, %v722
    %v724 = vstv %s184
    %v725 = vmul.f32 %v722, %v724
    %v726 = vadd.f32 %v708, %v725
    %v727 = vstv %s216
    %v728 = vmul.f32 %v723, %v727
    %v729 = vadd.f32 %v711, %v728
    %v730 = vstv %s248
    %v731 = vmul.f32 %v723, %v730
    %v732 = vadd.f32 %v714, %v731
    %v733 = vstv %s89
    %v734 = vmul.f32 %v255, %v733
    %v735 = vstv %s121
    %v736 = vmul.f32 %v258, %v735
    %v737 = vadd.f32 %v734, %v736
    %v738 = vstv %s153
    %v739 = vadd.f32 %v737, %v738
    %v740 = vtanh.pop %v739
    %v741 = vmul.f32 %v740, %v740
    %v742 = vstv %s185
    %v743 = vmul.f32 %v740, %v742
    %v744 = vadd.f32 %v726, %v743
    %v745 = vstv %s217
    %v746 = vmul.f32 %v741, %v745
    %v747 = vadd.f32 %v729, %v746
    %v748 = vstv %s249
    %v749 = vmul.f32 %v741, %v748
    %v750 = vadd.f32 %v732, %v749
    %v751 = vstv %s90
    %v752 = vmul.f32 %v255, %v751
    %v753 = vstv %s122
    %v754 = vmul.f32 %v258, %v753
    %v755 = vadd.f32 %v752, %v754
    %v756 = vstv %s154
    %v757 = vadd.f32 %v755, %v756
    %v758 = vtanh.pop %v757
    %v759 = vmul.f32 %v758, %v758
    %v760 = vstv %s186
    %v761 = vmul.f32 %v758, %v760
    %v762 = vadd.f32 %v744, %v761
    %v763 = vstv %s218
    %v764 = vmul.f32 %v759, %v763
    %v765 = vadd.f32 %v747, %v764
    %v766 = vstv %s250
    %v767 = vmul.f32 %v759, %v766
    %v768 = vadd.f32 %v750, %v767
    %v769 = vstv %s91
    %v770 = vmul.f32 %v255, %v769
    %v771 = vstv %s123
    %v772 = vmul.f32 %v258, %v771
    %v773 = vadd.f32 %v770, %v772
    %v774 = vstv %s155
    %v775 = vadd.f32 %v773, %v774
    %v776 = vtanh.pop %v775
    %v777 = vmul.f32 %v776, %v776
    %v778 = vstv %s187
    %v779 = vmul.f32 %v776, %v778
    %v780 = vadd.f32 %v762, %v779
    %v781 = vstv %s219
    %v782 = vmul.f32 %v777, %v781
    %v783 = vadd.f32 %v765, %v782
    %v784 = vstv %s251
    %v785 = vmul.f32 %v777, %v784
    %v786 = vadd.f32 %v768, %v785
    %v787 = vstv %s92
    %v788 = vmul.f32 %v255, %v787
    %v789 = vstv %s124
    %v790 = vmul.f32 %v258, %v789
    %v791 = vadd.f32 %v788, %v790
    %v792 = vstv %s156
    %v793 = vadd.f32 %v791, %v792
    %v794 = vtanh.pop %v793
    %v795 = vmul.f32 %v794, %v794
    %v796 = vstv %s188
    %v797 = vmul.f32 %v794, %v796
    %v798 = vadd.f32 %v780, %v797
    %v799 = vstv %s220
    %v800 = vmul.f32 %v795, %v799
    %v801 = vadd.f32 %v783, %v800
    %v802 = vstv %s252
    %v803 = vmul.f32 %v795, %v802
    %v804 = vadd.f32 %v786, %v803
    %v805 = vstv %s93
    %v806 = vmul.f32 %v255, %v805
    %v807 = vstv %s125
    %v808 = vmul.f32 %v258, %v807
    %v809 = vadd.f32 %v806, %v808
    %v810 = vstv %s157
    %v811 = vadd.f32 %v809, %v810
    %v812 = vtanh.pop %v811
    %v813 = vmul.f32 %v812, %v812
    %v814 = vstv %s189
    %v815 = vmul.f32 %v812, %v814
    %v816 = vadd.f32 %v798, %v815
    %v817 = vstv %s221
    %v818 = vmul.f32 %v813, %v817
    %v819 = vadd.f32 %v801, %v818
    %v820 = vstv %s253
    %v821 = vmul.f32 %v813, %v820
    %v822 = vadd.f32 %v804, %v821
    %v823 = vstv %s94
    %v824 = vmul.f32 %v255, %v823
    %v825 = vstv %s126
    %v826 = vmul.f32 %v258, %v825
    %v827 = vadd.f32 %v824, %v826
    %v828 = vstv %s158
    %v829 = vadd.f32 %v827, %v828
    %v830 = vtanh.pop %v829
    %v831 = vmul.f32 %v830, %v830
    %v832 = vstv %s190
    %v833 = vmul.f32 %v830, %v832
    %v834 = vadd.f32 %v816, %v833
    %v835 = vstv %s222
    %v836 = vmul.f32 %v831, %v835
    %v837 = vadd.f32 %v819, %v836
    %v838 = vstv %s254
    %v839 = vmul.f32 %v831, %v838
    %v840 = vadd.f32 %v822, %v839
    %v841 = vstv %s60
    %v842 = vadd.f32 %v834, %v841
    %v843 = vstv %s61
    %v844 = vsub.f32 %v843, %v837
    %v845 = vstv %s62
    %v846 = vsub.f32 %v845, %v840
    %v847 = vand.u32 2147483647, %v255
    %vm848 = vcmp.le.f32.partialorder %v847, 0.7853982
    %vm849 = vcmp.lt.s32.totalorder %v255, 0
    %v850 = vand.u32 %v255, 2139095040
    %v851 = vshrl.u32 %v850, 23
    %v852 = vsub.s32 %v851, 127
    %v853 = vand.u32 2147483647, %v255
    %v854 = vand.u32 %v853, 8388607
    %v855 = vor.u32 %v854, 8388608
    %v856 = vsub.s32 0, %v855
    %v857 = vadd.s32 %v852, 1
    %vm858 = vcmp.gt.s32.totalorder %v857, 0
    %v859 = vsel %vm858, %v857, 0
    %v860 = vshrl.u32 %v859, 5
    %v861 = vand.u32 %v859, 31
    %v862 = vsub.s32 32, %v861
    %v863 = vshrl.u32 683565275, %v862
    %v864 = vshll.u32 683565275, %v861
    %v865 = vshrl.u32 2475754826, %v862
    %v866 = vor.u32 %v864, %v865
    %v867 = vshll.u32 2475754826, %v861
    %v868 = vshrl.u32 2131351028, %v862
    %v869 = vor.u32 %v867, %v868
    %v870 = vshll.u32 2131351028, %v861
    %v871 = vshrl.u32 2102212464, %v862
    %v872 = vor.u32 %v870, %v871
    %v873 = vshll.u32 2102212464, %v861
    %v874 = vshrl.u32 920167782, %v862
    %v875 = vor.u32 %v873, %v874
    %v876 = vshll.u32 920167782, %v861
    %v877 = vshrl.u32 1326507024, %v862
    %v878 = vor.u32 %v876, %v877
    %vm879 = vcmp.lt.s32.totalorder %v860, 1
    %vm880 = vcmp.lt.s32.totalorder %v860, 2
    %vm881 = vcmp.lt.s32.totalorder %v860, 3
    %vm882 = vcmp.lt.s32.totalorder %v860, 4
    %v883 = vsel %vm879, %v863, %v866
    %v884 = vsel %vm882, %v872, 2102212464
    %v885 = vsel %vm881, %v869, %v884
    %v886 = vsel %vm880, %v883, %v885
    %v887 = vsel %vm879, %v866, %v869
    %v888 = vsel %vm882, %v875, 920167782
    %v889 = vsel %vm881, %v872, %v888
    %v890 = vsel %vm880, %v887, %v889
    %v891 = vsel %vm879, %v869, %v872
    %v892 = vsel %vm882, %v878, 1326507024
    %v893 = vsel %vm881, %v875, %v892
    %v894 = vsel %vm880, %v891, %v893
    %v895 = vshll.u32 %v855, 8
    %v896 = vand.u32 %v895, 65535
    %v897 = vshrl.u32 %v895, 16
    %v898 = vand.u32 %v894, 65535
    %v899 = vshrl.u32 %v894, 16
    %v900 = vmul.u32 %v896, %v898
    %v901 = vmul.u32 %v896, %v899
    %v902 = vmul.u32 %v897, %v898
    %v903 = vmul.u32 %v897, %v899
    %v904 = vshll.u32 %v901, 16
    %v905 = vshrl.u32 %v901, 16
    %v906 = vshll.u32 %v902, 16
    %v907 = vshrl.u32 %v902, 16
    %vm908 = vc.u32 %v900, %v904
    %v909 = vsel %vm908, 1, 0
    %v910 = vadd.s32 %v900, %v904
    %v911 = vadd.s32 %v903, %v909
    %vm912 = vc.u32 %v910, %v906
    %v913 = vsel %vm912, 1, 0
    %v914 = vadd.s32 %v910, %v906
    %v915 = vadd.s32 %v911, %v913
    %v916 = vadd.s32 %v915, %v905
    %v917 = vadd.s32 %v916, %v907
    %v918 = vand.u32 %v895, 65535
    %v919 = vshrl.u32 %v895, 16
    %v920 = vand.u32 %v890, 65535
    %v921 = vshrl.u32 %v890, 16
    %v922 = vmul.u32 %v918, %v920
    %v923 = vmul.u32 %v918, %v921
    %v924 = vmul.u32 %v919, %v920
    %v925 = vmul.u32 %v919, %v921
    %v926 = vshll.u32 %v923, 16
    %v927 = vshrl.u32 %v923, 16
    %v928 = vshll.u32 %v924, 16
    %v929 = vshrl.u32 %v924, 16
    %vm930 = vc.u32 %v922, %v926
    %v931 = vsel %vm930, 1, 0
    %v932 = vadd.s32 %v922, %v926
    %v933 = vadd.s32 %v925, %v931
    %vm934 = vc.u32 %v932, %v928
    %v935 = vsel %vm934, 1, 0
    %v936 = vadd.s32 %v932, %v928
    %v937 = vadd.s32 %v933, %v935
    %v938 = vadd.s32 %v937, %v927
    %v939 = vadd.s32 %v938, %v929
    %v940 = vmul.u32 %v895, %v886
    %v941 = vadd.s32 %v917, %v936
    %vm942 = vc.u32 %v917, %v936
    %v943 = vadd.s32 %v939, 1
    %v944 = vsel %vm942, %v943, %v939
    %v945 = vadd.s32 %v940, %v944
    %v946 = vadd.s32 %v945, 536870912
    %v947 = vshrl.u32 %v946, 30
    %v948 = vshll.u32 %v947, 30
    %v949 = vsub.s32 %v945, %v948
    %vm950 = vcmp.lt.s32.totalorder %v949, 0
    %v951 = vsub.s32 0, %v949
    %v952 = vsel %vm950, %v951, %v949
    %v953 = vclz %v952
    %v954 = vsub.s32 %v953, 2
    %vm955 = vcmp.gt.s32.totalorder 0, %v954
    %v956 = vsel %vm955, 0, %v954
    %v957 = vsub.s32 32, %v956
    %v958 = vshll.u32 %v949, %v956
    %v959 = vshrl.u32 %v941, %v957
    %v960 = vor.u32 %v958, %v959
    %v961 = vsub.s32 4294967266, %v956
    %v962 = vadd.s32 %v961, 127
    %v963 = vshll.u32 %v962, 23
    %v964 = vor.u32 4788187, %v963
    %v965 = vand.u32 2147483647, %v964
    %v967 = vcvt.s32.f32 %v960
    %v968 = vmul.f32 %v967, %v965
    %v969 = vxor.u32 %v968, 2147483648
    %v970 = vsel %vm849, %v969, %v968
    %v971 = vsub.s32 4, %v947
    %v972 = vsel %vm849, %v971, %v947
    %v973 = vsel %vm848, %v255, %v970
    %v974 = vsel %vm848, 0, %v972
    %v975 = vmul.f32 %v973, %v973
    %v976 = vmul.f32 %v975, -0.001358992
    %v977 = vadd.f32 %v976, 0.041655596
    %v978 = vmul.f32 %v975, %v977
    %v979 = vadd.f32 %v978, -0.4999988
    %v980 = vmul.f32 %v975, %v979
    %v981 = vadd.f32 1.0, %v980
    %v982 = vmul.f32 %v973, %v973
    %v983 = vmul.f32 %v982, -0.00019511016
    %v984 = vadd.f32 %v983, 0.008332121
    %v985 = vmul.f32 %v982, %v984
    %v986 = vadd.f32 %v985, -0.16666654
    %v987 = vmul.f32 %v982, %v986
    %v988 = vadd.f32 %v987, 1.0
    %v989 = vmul.f32 %v988, %v973
    %vm990 = vweird.f32 %v255
    %v991 = vadd.s32 %v974, 3
    %v992 = vand.u32 %v991, 3
    %vm993 = vcmp.lt.s32.totalorder %v992, 2
    %vm994 = vcmp.eq.s32.totalorder %v992, 0
    %v995 = vxor.u32 %v989, 2147483648
    %v996 = vsel %vm994, %v981, %v995
    %vm997 = vcmp.eq.s32.totalorder %v992, 2
    %v998 = vxor.u32 %v981, 2147483648
    %v999 = vsel %vm997, %v998, %v989
    %v1000 = vsel %vm993, %v996, %v999
    %v1001 = vsel %vm990, nan, %v1000
    %v1002 = vand.u32 2147483647, %v255
    %vm1003 = vcmp.le.f32.partialorder %v1002, 0.7853982
    %vm1004 = vcmp.lt.s32.totalorder %v255, 0
    %v1005 = vand.u32 %v255, 2139095040
    %v1006 = vshrl.u32 %v1005, 23
    %v1007 = vsub.s32 %v1006, 127
    %v1008 = vand.u32 2147483647, %v255
    %v1009 = vand.u32 %v1008, 8388607
    %v1010 = vor.u32 %v1009, 8388608
    %v1011 = vsub.s32 0, %v1010
    %v1012 = vadd.s32 %v1007, 1
    %vm1013 = vcmp.gt.s32.totalorder %v1012, 0
    %v1014 = vsel %vm1013, %v1012, 0
    %v1015 = vshrl.u32 %v1014, 5
    %v1016 = vand.u32 %v1014, 31
    %v1017 = vsub.s32 32, %v1016
    %v1018 = vshrl.u32 683565275, %v1017
    %v1019 = vshll.u32 683565275, %v1016
    %v1020 = vshrl.u32 2475754826, %v1017
    %v1021 = vor.u32 %v1019, %v1020
    %v1022 = vshll.u32 2475754826, %v1016
    %v1023 = vshrl.u32 2131351028, %v1017
    %v1024 = vor.u32 %v1022, %v1023
    %v1025 = vshll.u32 2131351028, %v1016
    %v1026 = vshrl.u32 2102212464, %v1017
    %v1027 = vor.u32 %v1025, %v1026
    %v1028 = vshll.u32 2102212464, %v1016
    %v1029 = vshrl.u32 920167782, %v1017
    %v1030 = vor.u32 %v1028, %v1029
    %v1031 = vshll.u32 920167782, %v1016
    %v1032 = vshrl.u32 1326507024, %v1017
    %v1033 = vor.u32 %v1031, %v1032
    %vm1034 = vcmp.lt.s32.totalorder %v1015, 1
    %vm1035 = vcmp.lt.s32.totalorder %v1015, 2
    %vm1036 = vcmp.lt.s32.totalorder %v1015, 3
    %vm1037 = vcmp.lt.s32.totalorder %v1015, 4
    %v1038 = vsel %vm1034, %v1018, %v1021
    %v1039 = vsel %vm1037, %v1027, 2102212464
    %v1040 = vsel %vm1036, %v1024, %v1039
    %v1041 = vsel %vm1035, %v1038, %v1040
    %v1042 = vsel %vm1034, %v1021, %v1024
    %v1043 = vsel %vm1037, %v1030, 920167782
    %v1044 = vsel %vm1036, %v1027, %v1043
    %v1045 = vsel %vm1035, %v1042, %v1044
    %v1046 = vsel %vm1034, %v1024, %v1027
    %v1047 = vsel %vm1037, %v1033, 1326507024
    %v1048 = vsel %vm1036, %v1030, %v1047
    %v1049 = vsel %vm1035, %v1046, %v1048
    %v1050 = vshll.u32 %v1010, 8
    %v1051 = vand.u32 %v1050, 65535
    %v1052 = vshrl.u32 %v1050, 16
    %v1053 = vand.u32 %v1049, 65535
    %v1054 = vshrl.u32 %v1049, 16
    %v1055 = vmul.u32 %v1051, %v1053
    %v1056 = vmul.u32 %v1051, %v1054
    %v1057 = vmul.u32 %v1052, %v1053
    %v1058 = vmul.u32 %v1052, %v1054
    %v1059 = vshll.u32 %v1056, 16
    %v1060 = vshrl.u32 %v1056, 16
    %v1061 = vshll.u32 %v1057, 16
    %v1062 = vshrl.u32 %v1057, 16
    %vm1063 = vc.u32 %v1055, %v1059
    %v1064 = vsel %vm1063, 1, 0
    %v1065 = vadd.s32 %v1055, %v1059
    %v1066 = vadd.s32 %v1058, %v1064
    %vm1067 = vc.u32 %v1065, %v1061
    %v1068 = vsel %vm1067, 1, 0
    %v1069 = vadd.s32 %v1065, %v1061
    %v1070 = vadd.s32 %v1066, %v1068
    %v1071 = vadd.s32 %v1070, %v1060
    %v1072 = vadd.s32 %v1071, %v1062
    %v1073 = vand.u32 %v1050, 65535
    %v1074 = vshrl.u32 %v1050, 16
    %v1075 = vand.u32 %v1045, 65535
    %v1076 = vshrl.u32 %v1045, 16
    %v1077 = vmul.u32 %v1073, %v1075
    %v1078 = vmul.u32 %v1073, %v1076
    %v1079 = vmul.u32 %v1074, %v1075
    %v1080 = vmul.u32 %v1074, %v1076
    %v1081 = vshll.u32 %v1078, 16
    %v1082 = vshrl.u32 %v1078, 16
    %v1083 = vshll.u32 %v1079, 16
    %v1084 = vshrl.u32 %v1079, 16
    %vm1085 = vc.u32 %v1077, %v1081
    %v1086 = vsel %vm1085, 1, 0
    %v1087 = vadd.s32 %v1077, %v1081
    %v1088 = vadd.s32 %v1080, %v1086
    %vm1089 = vc.u32 %v1087, %v1083
    %v1090 = vsel %vm1089, 1, 0
    %v1091 = vadd.s32 %v1087, %v1083
    %v1092 = vadd.s32 %v1088, %v1090
    %v1093 = vadd.s32 %v1092, %v1082
    %v1094 = vadd.s32 %v1093, %v1084
    %v1095 = vmul.u32 %v1050, %v1041
    %v1096 = vadd.s32 %v1072, %v1091
    %vm1097 = vc.u32 %v1072, %v1091
    %v1098 = vadd.s32 %v1094, 1
    %v1099 = vsel %vm1097, %v1098, %v1094
    %v1100 = vadd.s32 %v1095, %v1099
    %v1101 = vadd.s32 %v1100, 536870912
    %v1102 = vshrl.u32 %v1101, 30
    %v1103 = vshll.u32 %v1102, 30
    %v1104 = vsub.s32 %v1100, %v1103
    %vm1105 = vcmp.lt.s32.totalorder %v1104, 0
    %v1106 = vsub.s32 0, %v1104
    %v1107 = vsel %vm1105, %v1106, %v1104
    %v1108 = vclz %v1107
    %v1109 = vsub.s32 %v1108, 2
    %vm1110 = vcmp.gt.s32.totalorder 0, %v1109
    %v1111 = vsel %vm1110, 0, %v1109
    %v1112 = vsub.s32 32, %v1111
    %v1113 = vshll.u32 %v1104, %v1111
    %v1114 = vshrl.u32 %v1096, %v1112
    %v1115 = vor.u32 %v1113, %v1114
    %v1116 = vsub.s32 4294967266, %v1111
    %v1117 = vadd.s32 %v1116, 127
    %v1118 = vshll.u32 %v1117, 23
    %v1119 = vor.u32 4788187, %v1118
    %v1120 = vand.u32 2147483647, %v1119
    %v1122 = vcvt.s32.f32 %v1115
    %v1123 = vmul.f32 %v1122, %v1120
    %v1124 = vxor.u32 %v1123, 2147483648
    %v1125 = vsel %vm1004, %v1124, %v1123
    %v1126 = vsub.s32 4, %v1102
    %v1127 = vsel %vm1004, %v1126, %v1102
    %v1128 = vsel %vm1003, %v255, %v1125
    %v1129 = vsel %vm1003, 0, %v1127
    %v1130 = vmul.f32 %v1128, %v1128
    %v1131 = vmul.f32 %v1130, -0.001358992
    %v1132 = vadd.f32 %v1131, 0.041655596
    %v1133 = vmul.f32 %v1130, %v1132
    %v1134 = vadd.f32 %v1133, -0.4999988
    %v1135 = vmul.f32 %v1130, %v1134
    %v1136 = vadd.f32 1.0, %v1135
    %v1137 = vmul.f32 %v1128, %v1128
    %v1138 = vmul.f32 %v1137, -0.00019511016
    %v1139 = vadd.f32 %v1138, 0.008332121
    %v1140 = vmul.f32 %v1137, %v1139
    %v1141 = vadd.f32 %v1140, -0.16666654
    %v1142 = vmul.f32 %v1137, %v1141
    %v1143 = vadd.f32 %v1142, 1.0
    %v1144 = vmul.f32 %v1143, %v1128
    %vm1145 = vweird.f32 %v255
    %v1146 = vand.u32 %v1129, 3
    %vm1147 = vcmp.lt.s32.totalorder %v1146, 2
    %vm1148 = vcmp.eq.s32.totalorder %v1146, 0
    %v1149 = vxor.u32 %v1144, 2147483648
    %v1150 = vsel %vm1148, %v1136, %v1149
    %vm1151 = vcmp.eq.s32.totalorder %v1146, 2
    %v1152 = vxor.u32 %v1136, 2147483648
    %v1153 = vsel %vm1151, %v1152, %v1144
    %v1154 = vsel %vm1147, %v1150, %v1153
    %v1155 = vsel %vm1145, nan, %v1154
    %v1156 = vand.u32 2147483647, %v258
    %vm1157 = vcmp.le.f32.partialorder %v1156, 0.7853982
    %vm1158 = vcmp.lt.s32.totalorder %v258, 0
    %v1159 = vand.u32 %v258, 2139095040
    %v1160 = vshrl.u32 %v1159, 23
    %v1161 = vsub.s32 %v1160, 127
    %v1162 = vand.u32 2147483647, %v258
    %v1163 = vand.u32 %v1162, 8388607
    %v1164 = vor.u32 %v1163, 8388608
    %v1165 = vsub.s32 0, %v1164
    %v1166 = vadd.s32 %v1161, 1
    %vm1167 = vcmp.gt.s32.totalorder %v1166, 0
    %v1168 = vsel %vm1167, %v1166, 0
    %v1169 = vshrl.u32 %v1168, 5
    %v1170 = vand.u32 %v1168, 31
    %v1171 = vsub.s32 32, %v1170
    %v1172 = vshrl.u32 683565275, %v1171
    %v1173 = vshll.u32 683565275, %v1170
    %v1174 = vshrl.u32 2475754826, %v1171
    %v1175 = vor.u32 %v1173, %v1174
    %v1176 = vshll.u32 2475754826, %v1170
    %v1177 = vshrl.u32 2131351028, %v1171
    %v1178 = vor.u32 %v1176, %v1177
    %v1179 = vshll.u32 2131351028, %v1170
    %v1180 = vshrl.u32 2102212464, %v1171
    %v1181 = vor.u32 %v1179, %v1180
    %v1182 = vshll.u32 2102212464, %v1170
    %v1183 = vshrl.u32 920167782, %v1171
    %v1184 = vor.u32 %v1182, %v1183
    %v1185 = vshll.u32 920167782, %v1170
    %v1186 = vshrl.u32 1326507024, %v1171
    %v1187 = vor.u32 %v1185, %v1186
    %vm1188 = vcmp.lt.s32.totalorder %v1169, 1
    %vm1189 = vcmp.lt.s32.totalorder %v1169, 2
    %vm1190 = vcmp.lt.s32.totalorder %v1169, 3
    %vm1191 = vcmp.lt.s32.totalorder %v1169, 4
    %v1192 = vsel %vm1188, %v1172, %v1175
    %v1193 = vsel %vm1191, %v1181, 2102212464
    %v1194 = vsel %vm1190, %v1178, %v1193
    %v1195 = vsel %vm1189, %v1192, %v1194
    %v1196 = vsel %vm1188, %v1175, %v1178
    %v1197 = vsel %vm1191, %v1184, 920167782
    %v1198 = vsel %vm1190, %v1181, %v1197
    %v1199 = vsel %vm1189, %v1196, %v1198
    %v1200 = vsel %vm1188, %v1178, %v1181
    %v1201 = vsel %vm1191, %v1187, 1326507024
    %v1202 = vsel %vm1190, %v1184, %v1201
    %v1203 = vsel %vm1189, %v1200, %v1202
    %v1204 = vshll.u32 %v1164, 8
    %v1205 = vand.u32 %v1204, 65535
    %v1206 = vshrl.u32 %v1204, 16
    %v1207 = vand.u32 %v1203, 65535
    %v1208 = vshrl.u32 %v1203, 16
    %v1209 = vmul.u32 %v1205, %v1207
    %v1210 = vmul.u32 %v1205, %v1208
    %v1211 = vmul.u32 %v1206, %v1207
    %v1212 = vmul.u32 %v1206, %v1208
    %v1213 = vshll.u32 %v1210, 16
    %v1214 = vshrl.u32 %v1210, 16
    %v1215 = vshll.u32 %v1211, 16
    %v1216 = vshrl.u32 %v1211, 16
    %vm1217 = vc.u32 %v1209, %v1213
    %v1218 = vsel %vm1217, 1, 0
    %v1219 = vadd.s32 %v1209, %v1213
    %v1220 = vadd.s32 %v1212, %v1218
    %vm1221 = vc.u32 %v1219, %v1215
    %v1222 = vsel %vm1221, 1, 0
    %v1223 = vadd.s32 %v1219, %v1215
    %v1224 = vadd.s32 %v1220, %v1222
    %v1225 = vadd.s32 %v1224, %v1214
    %v1226 = vadd.s32 %v1225, %v1216
    %v1227 = vand.u32 %v1204, 65535
    %v1228 = vshrl.u32 %v1204, 16
    %v1229 = vand.u32 %v1199, 65535
    %v1230 = vshrl.u32 %v1199, 16
    %v1231 = vmul.u32 %v1227, %v1229
    %v1232 = vmul.u32 %v1227, %v1230
    %v1233 = vmul.u32 %v1228, %v1229
    %v1234 = vmul.u32 %v1228, %v1230
    %v1235 = vshll.u32 %v1232, 16
    %v1236 = vshrl.u32 %v1232, 16
    %v1237 = vshll.u32 %v1233, 16
    %v1238 = vshrl.u32 %v1233, 16
    %vm1239 = vc.u32 %v1231, %v1235
    %v1240 = vsel %vm1239, 1, 0
    %v1241 = vadd.s32 %v1231, %v1235
    %v1242 = vadd.s32 %v1234, %v1240
    %vm1243 = vc.u32 %v1241, %v1237
    %v1244 = vsel %vm1243, 1, 0
    %v1245 = vadd.s32 %v1241, %v1237
    %v1246 = vadd.s32 %v1242, %v1244
    %v1247 = vadd.s32 %v1246, %v1236
    %v1248 = vadd.s32 %v1247, %v1238
    %v1249 = vmul.u32 %v1204, %v1195
    %v1250 = vadd.s32 %v1226, %v1245
    %vm1251 = vc.u32 %v1226, %v1245
    %v1252 = vadd.s32 %v1248, 1
    %v1253 = vsel %vm1251, %v1252, %v1248
    %v1254 = vadd.s32 %v1249, %v1253
    %v1255 = vadd.s32 %v1254, 536870912
    %v1256 = vshrl.u32 %v1255, 30
    %v1257 = vshll.u32 %v1256, 30
    %v1258 = vsub.s32 %v1254, %v1257
    %vm1259 = vcmp.lt.s32.totalorder %v1258, 0
    %v1260 = vsub.s32 0, %v1258
    %v1261 = vsel %vm1259, %v1260, %v1258
    %v1262 = vclz %v1261
    %v1263 = vsub.s32 %v1262, 2
    %vm1264 = vcmp.gt.s32.totalorder 0, %v1263
    %v1265 = vsel %vm1264, 0, %v1263
    %v1266 = vsub.s32 32, %v1265
    %v1267 = vshll.u32 %v1258, %v1265
    %v1268 = vshrl.u32 %v1250, %v1266
    %v1269 = vor.u32 %v1267, %v1268
    %v1270 = vsub.s32 4294967266, %v1265
    %v1271 = vadd.s32 %v1270, 127
    %v1272 = vshll.u32 %v1271, 23
    %v1273 = vor.u32 4788187, %v1272
    %v1274 = vand.u32 2147483647, %v1273
    %v1276 = vcvt.s32.f32 %v1269
    %v1277 = vmul.f32 %v1276, %v1274
    %v1278 = vxor.u32 %v1277, 2147483648
    %v1279 = vsel %vm1158, %v1278, %v1277
    %v1280 = vsub.s32 4, %v1256
    %v1281 = vsel %vm1158, %v1280, %v1256
    %v1282 = vsel %vm1157, %v258, %v1279
    %v1283 = vsel %vm1157, 0, %v1281
    %v1284 = vmul.f32 %v1282, %v1282
    %v1285 = vmul.f32 %v1284, -0.001358992
    %v1286 = vadd.f32 %v1285, 0.041655596
    %v1287 = vmul.f32 %v1284, %v1286
    %v1288 = vadd.f32 %v1287, -0.4999988
    %v1289 = vmul.f32 %v1284, %v1288
    %v1290 = vadd.f32 1.0, %v1289
    %v1291 = vmul.f32 %v1282, %v1282
    %v1292 = vmul.f32 %v1291, -0.00019511016
    %v1293 = vadd.f32 %v1292, 0.008332121
    %v1294 = vmul.f32 %v1291, %v1293
    %v1295 = vadd.f32 %v1294, -0.16666654
    %v1296 = vmul.f32 %v1291, %v1295
    %v1297 = vadd.f32 %v1296, 1.0
    %v1298 = vmul.f32 %v1297, %v1282
    %vm1299 = vweird.f32 %v258
    %v1300 = vadd.s32 %v1283, 3
    %v1301 = vand.u32 %v1300, 3
    %vm1302 = vcmp.lt.s32.totalorder %v1301, 2
    %vm1303 = vcmp.eq.s32.totalorder %v1301, 0
    %v1304 = vxor.u32 %v1298, 2147483648
    %v1305 = vsel %vm1303, %v1290, %v1304
    %vm1306 = vcmp.eq.s32.totalorder %v1301, 2
    %v1307 = vxor.u32 %v1290, 2147483648
    %v1308 = vsel %vm1306, %v1307, %v1298
    %v1309 = vsel %vm1302, %v1305, %v1308
    %v1310 = vsel %vm1299, nan, %v1309
    %v1311 = vand.u32 2147483647, %v258
    %vm1312 = vcmp.le.f32.partialorder %v1311, 0.7853982
    %vm1313 = vcmp.lt.s32.totalorder %v258, 0
    %v1314 = vand.u32 %v258, 2139095040
    %v1315 = vshrl.u32 %v1314, 23
    %v1316 = vsub.s32 %v1315, 127
    %v1317 = vand.u32 2147483647, %v258
    %v1318 = vand.u32 %v1317, 8388607
    %v1319 = vor.u32 %v1318, 8388608
    %v1320 = vsub.s32 0, %v1319
    %v1321 = vadd.s32 %v1316, 1
    %vm1322 = vcmp.gt.s32.totalorder %v1321, 0
    %v1323 = vsel %vm1322, %v1321, 0
    %v1324 = vshrl.u32 %v1323, 5
    %v1325 = vand.u32 %v1323, 31
    %v1326 = vsub.s32 32, %v1325
    %v1327 = vshrl.u32 683565275, %v1326
    %v1328 = vshll.u32 683565275, %v1325
    %v1329 = vshrl.u32 2475754826, %v1326
    %v1330 = vor.u32 %v1328, %v1329
    %v1331 = vshll.u32 2475754826, %v1325
    %v1332 = vshrl.u32 2131351028, %v1326
    %v1333 = vor.u32 %v1331, %v1332
    %v1334 = vshll.u32 2131351028, %v1325
    %v1335 = vshrl.u32 2102212464, %v1326
    %v1336 = vor.u32 %v1334, %v1335
    %v1337 = vshll.u32 2102212464, %v1325
    %v1338 = vshrl.u32 920167782, %v1326
    %v1339 = vor.u32 %v1337, %v1338
    %v1340 = vshll.u32 920167782, %v1325
    %v1341 = vshrl.u32 1326507024, %v1326
    %v1342 = vor.u32 %v1340, %v1341
    %vm1343 = vcmp.lt.s32.totalorder %v1324, 1
    %vm1344 = vcmp.lt.s32.totalorder %v1324, 2
    %vm1345 = vcmp.lt.s32.totalorder %v1324, 3
    %vm1346 = vcmp.lt.s32.totalorder %v1324, 4
    %v1347 = vsel %vm1343, %v1327, %v1330
    %v1348 = vsel %vm1346, %v1336, 2102212464
    %v1349 = vsel %vm1345, %v1333, %v1348
    %v1350 = vsel %vm1344, %v1347, %v1349
    %v1351 = vsel %vm1343, %v1330, %v1333
    %v1352 = vsel %vm1346, %v1339, 920167782
    %v1353 = vsel %vm1345, %v1336, %v1352
    %v1354 = vsel %vm1344, %v1351, %v1353
    %v1355 = vsel %vm1343, %v1333, %v1336
    %v1356 = vsel %vm1346, %v1342, 1326507024
    %v1357 = vsel %vm1345, %v1339, %v1356
    %v1358 = vsel %vm1344, %v1355, %v1357
    %v1359 = vshll.u32 %v1319, 8
    %v1360 = vand.u32 %v1359, 65535
    %v1361 = vshrl.u32 %v1359, 16
    %v1362 = vand.u32 %v1358, 65535
    %v1363 = vshrl.u32 %v1358, 16
    %v1364 = vmul.u32 %v1360, %v1362
    %v1365 = vmul.u32 %v1360, %v1363
    %v1366 = vmul.u32 %v1361, %v1362
    %v1367 = vmul.u32 %v1361, %v1363
    %v1368 = vshll.u32 %v1365, 16
    %v1369 = vshrl.u32 %v1365, 16
    %v1370 = vshll.u32 %v1366, 16
    %v1371 = vshrl.u32 %v1366, 16
    %vm1372 = vc.u32 %v1364, %v1368
    %v1373 = vsel %vm1372, 1, 0
    %v1374 = vadd.s32 %v1364, %v1368
    %v1375 = vadd.s32 %v1367, %v1373
    %vm1376 = vc.u32 %v1374, %v1370
    %v1377 = vsel %vm1376, 1, 0
    %v1378 = vadd.s32 %v1374, %v1370
    %v1379 = vadd.s32 %v1375, %v1377
    %v1380 = vadd.s32 %v1379, %v1369
    %v1381 = vadd.s32 %v1380, %v1371
    %v1382 = vand.u32 %v1359, 65535
    %v1383 = vshrl.u32 %v1359, 16
    %v1384 = vand.u32 %v1354, 65535
    %v1385 = vshrl.u32 %v1354, 16
    %v1386 = vmul.u32 %v1382, %v1384
    %v1387 = vmul.u32 %v1382, %v1385
    %v1388 = vmul.u32 %v1383, %v1384
    %v1389 = vmul.u32 %v1383, %v1385
    %v1390 = vshll.u32 %v1387, 16
    %v1391 = vshrl.u32 %v1387, 16
    %v1392 = vshll.u32 %v1388, 16
    %v1393 = vshrl.u32 %v1388, 16
    %vm1394 = vc.u32 %v1386, %v1390
    %v1395 = vsel %vm1394, 1, 0
    %v1396 = vadd.s32 %v1386, %v1390
    %v1397 = vadd.s32 %v1389, %v1395
    %vm1398 = vc.u32 %v1396, %v1392
    %v1399 = vsel %vm1398, 1, 0
    %v1400 = vadd.s32 %v1396, %v1392
    %v1401 = vadd.s32 %v1397, %v1399
    %v1402 = vadd.s32 %v1401, %v1391
    %v1403 = vadd.s32 %v1402, %v1393
    %v1404 = vmul.u32 %v1359, %v1350
    %v1405 = vadd.s32 %v1381, %v1400
    %vm1406 = vc.u32 %v1381, %v1400
    %v1407 = vadd.s32 %v1403, 1
    %v1408 = vsel %vm1406, %v1407, %v1403
    %v1409 = vadd.s32 %v1404, %v1408
    %v1410 = vadd.s32 %v1409, 536870912
    %v1411 = vshrl.u32 %v1410, 30
    %v1412 = vshll.u32 %v1411, 30
    %v1413 = vsub.s32 %v1409, %v1412
    %vm1414 = vcmp.lt.s32.totalorder %v1413, 0
    %v1415 = vsub.s32 0, %v1413
    %v1416 = vsel %vm1414, %v1415, %v1413
    %v1417 = vclz %v1416
    %v1418 = vsub.s32 %v1417, 2
    %vm1419 = vcmp.gt.s32.totalorder 0, %v1418
    %v1420 = vsel %vm1419, 0, %v1418
    %v1421 = vsub.s32 32, %v1420
    %v1422 = vshll.u32 %v1413, %v1420
    %v1423 = vshrl.u32 %v1405, %v1421
    %v1424 = vor.u32 %v1422, %v1423
    %v1425 = vsub.s32 4294967266, %v1420
    %v1426 = vadd.s32 %v1425, 127
    %v1427 = vshll.u32 %v1426, 23
    %v1428 = vor.u32 4788187, %v1427
    %v1429 = vand.u32 2147483647, %v1428
    %v1431 = vcvt.s32.f32 %v1424
    %v1432 = vmul.f32 %v1431, %v1429
    %v1433 = vxor.u32 %v1432, 2147483648
    %v1434 = vsel %vm1313, %v1433, %v1432
    %v1435 = vsub.s32 4, %v1411
    %v1436 = vsel %vm1313, %v1435, %v1411
    %v1437 = vsel %vm1312, %v258, %v1434
    %v1438 = vsel %vm1312, 0, %v1436
    %v1439 = vmul.f32 %v1437, %v1437
    %v1440 = vmul.f32 %v1439, -0.001358992
    %v1441 = vadd.f32 %v1440, 0.041655596
    %v1442 = vmul.f32 %v1439, %v1441
    %v1443 = vadd.f32 %v1442, -0.4999988
    %v1444 = vmul.f32 %v1439, %v1443
    %v1445 = vadd.f32 1.0, %v1444
    %v1446 = vmul.f32 %v1437, %v1437
    %v1447 = vmul.f32 %v1446, -0.00019511016
    %v1448 = vadd.f32 %v1447, 0.008332121
    %v1449 = vmul.f32 %v1446, %v1448
    %v1450 = vadd.f32 %v1449, -0.16666654
    %v1451 = vmul.f32 %v1446, %v1450
    %v1452 = vadd.f32 %v1451, 1.0
    %v1453 = vmul.f32 %v1452, %v1437
    %vm1454 = vweird.f32 %v258
    %v1455 = vand.u32 %v1438, 3
    %vm1456 = vcmp.lt.s32.totalorder %v1455, 2
    %vm1457 = vcmp.eq.s32.totalorder %v1455, 0
    %v1458 = vxor.u32 %v1453, 2147483648
    %v1459 = vsel %vm1457, %v1445, %v1458
    %vm1460 = vcmp.eq.s32.totalorder %v1455, 2
    %v1461 = vxor.u32 %v1445, 2147483648
    %v1462 = vsel %vm1460, %v1461, %v1453
    %v1463 = vsel %vm1456, %v1459, %v1462
    %v1464 = vsel %vm1454, nan, %v1463
    %v1465 = vmul.f32 %v1001, %v1464
    %v1466 = vmul.f32 %v1155, %v1310
    %v1467 = vadd.f32 %v1465, %v1466
    %v1468 = vmul.f32 %v1155, %v1464
    %v1469 = vmul.f32 %v1001, %v1310
    %v1470 = vsub.f32 %v1468, %v1469
    %v1471 = vmul.f32 %v1464, 2.0
    %v1472 = vmul.f32 %v1471, %v1464
    %v1473 = vsub.f32 %v1472, 1.0
    %v1474 = vadd.f32 %v1471, 3.0
    %v1475 = vadd.f32 %v1464, 1.0
    %v1476 = vmul.f32 %v1475, %v1475
    %v1477 = vsub.f32 %v1474, %v1476
    %v1478 = vrcp.pop %v1477
    %v1479 = vmul.f32 %v1477, %v1478
    %v1480 = vsub.f32 2.0, %v1479
    %v1481 = vmul.f32 %v1478, %v1480
    %v1482 = vmul.f32 %v1475, %v264
    %v1483 = vsub.f32 %v261, %v1482
    %v1484 = vmul.f32 %v1483, %v1481
    %v1485 = vmul.f32 %v1474, %v264
    %v1486 = vmul.f32 %v1475, %v261
    %v1487 = vsub.f32 %v1485, %v1486
    %v1488 = vmul.f32 %v1487, %v1481
    %v1489 = vmul.f32 %v261, %v1484
    %v1490 = vmul.f32 %v264, %v1488
    %v1491 = vadd.f32 %v1489, %v1490
    %vm1492 = vcmp.gt.f32.partialorder %v1491, 0.0
    %v1493 = vsel %vm1492, %v1491, 1.0
    %v1494 = vrsqrt.pop %v1493
    %v1495 = vmul.f32 %v1494, %v1493
    %v1496 = vmul.f32 %v1495, %v1494
    %v1497 = vmul.f32 0.5, %v1496
    %v1498 = vsub.f32 1.5, %v1497
    %v1499 = vmul.f32 %v1494, %v1498
    %vm1500 = vweird.f32 %v1493
    %vm1501 = vweird.f32 %v1494
    %vm1502 = vmor %vm1500, %vm1501
    %v1503 = vsel %vm1502, %v1494, %v1499
    %v1504 = vmul.f32 %v261, %v1503
    %v1505 = vsel %vm1492, %v1504, %v261
    %v1506 = vmul.f32 %v264, %v1503
    %v1507 = vsel %vm1492, %v1506, %v264
    %v1508 = vsub.f32 1.5707964, %v258
    %v1509 = vmul.f32 %v1155, 2.0
    %v1510 = vadd.f32 %v1470, %v1509
    %v1511 = vmul.f32 %v1510, -9.81
    %v1512 = vmul.f32 %v1508, 0.5
    %v1513 = vmul.f32 %v1512, %v1508
    %v1514 = vadd.f32 %v1511, %v1513
    %v1515 = vmul.f32 %v1491, 0.5
    %v1516 = vadd.f32 %v1514, %v1515
    %v1517 = vadd.f32 %v1516, %v842
    %v1518 = vstv %s58
    %v1519 = vsub.f32 %v1518, %v1517
    %v1520 = vstv %s57
    %v1521 = vmul.f32 %v1520, %v1519
    %v1522 = vmul.f32 %v1521, %v1505
    %v1523 = vsub.f32 %v1522, %v844
    %v1524 = vmul.f32 %v1521, %v1507
    %v1525 = vsub.f32 %v1524, %v846
    %v1526 = vmul.f32 %v1001, 2.0
    %v1527 = vadd.f32 %v1467, %v1526
    %v1528 = vmul.f32 %v1527, -9.81
    %v1529 = vadd.f32 %v1528, %v1523
    %v1530 = vstv %s59
    %v1531 = vmul.f32 %v1530, %v1484
    %v1532 = vsub.f32 %v1529, %v1531
    %v1533 = vmul.f32 %v1310, %v1310
    %v1534 = vadd.f32 %v1533, 1.0
    %v1535 = vmul.f32 %v1534, %v1534
    %v1536 = vmul.f32 %v1481, -1.0
    %v1537 = vmul.f32 %v1536, %v1481
    %v1538 = vmul.f32 %v264, %v264
    %v1539 = vsub.f32 0.0, %v1538
    %v1540 = vmul.f32 %v1539, %v1310
    %v1541 = vmul.f32 %v1540, %v1475
    %v1542 = vadd.f32 %v1464, 2.0
    %v1543 = vmul.f32 %v1541, %v1542
    %v1544 = vmul.f32 %v261, 0.5
    %v1545 = vmul.f32 %v1544, %v264
    %v1546 = vmul.f32 %v1545, %v1310
    %v1547 = vmul.f32 %v1464, 4.0
    %v1548 = vadd.f32 %v1473, 3.0
    %v1549 = vadd.f32 %v1548, 2.0
    %v1550 = vadd.f32 %v1547, %v1549
    %v1551 = vmul.f32 %v1546, %v1550
    %v1552 = vmul.f32 %v1464, %v1310
    %v1553 = vsub.f32 0.0, %v1552
    %v1554 = vmul.f32 %v1553, %v261
    %v1555 = vmul.f32 %v1554, %v261
    %v1556 = vmul.f32 %v1467, 9.81
    %v1557 = vmul.f32 %v258, 2.0
    %v1558 = vsub.f32 3.1415927, %v1557
    %v1559 = vmul.f32 %v1558, 0.5
    %v1560 = vsub.f32 %v1556, %v1559
    %v1561 = vmul.f32 %v1535, %v1560
    %v1562 = vadd.f32 %v1555, %v1561
    %v1563 = vadd.f32 %v1543, %v1551
    %v1564 = vadd.f32 %v1563, %v1562
    %v1565 = vmul.f32 %v1537, %v1564
    %v1566 = vadd.f32 %v1565, %v1525
    %v1567 = vmul.f32 %v1530, %v1488
    %v1568 = vsub.f32 %v1566, %v1567
    %v1569 = vstv %s56
    %v1570 = vmul.f32 %v1569, %v1484
    %1571 = vst [vmem:[#allocation9] sm:$0xff] %v1570
    %v1572 = vmul.f32 %v1569, %v1488
    %s1573 = scalar_lea.vmem [#allocation9], %s256
    %1574 = vst [vmem:[%s1573] sm:$0xff] %v1572
    %v1575 = vmul.f32 %v1569, %v1532
    %s1576 = scalar_lea.vmem [#allocation9], %s259
    %1577 = vst [vmem:[%s1576] sm:$0xff] %v1575
    %v1578 = vmul.f32 %v1569, %v1568
    %s1579 = scalar_lea.vmem [#allocation9], %s262
    %1580 = vst [vmem:[%s1579] sm:$0xff] %v1578
    // Predicated region
    $region26: #{tpu_custom_call.1} parent=1 // pred_check
      _
    $region27: #{tpu_custom_call.1} parent=1 // pred_check_branch
      %1582 = sbr.rel (0) target = $region29
    $region28: #{tpu_custom_call.1} parent=1 // pred_region
      %1584 = vsyncadd [#allocation4], 0
      %s1585 = sshll.u32 [#allocation9], 4
      %s1586 = int_to_ptr.vmem [resolvable:$true] %s1585
      %s1587 = sshll.u32 %s3, 4
      %s1588 = int_to_ptr.hbm [resolvable:$true] %s1587
      %1593 = dma.vmem_to_hbm [thread:$0]  %s1586, 512, %s1588, [#allocation4], 128, 128, 8
    $region29: #{tpu_custom_call.1} parent=1 // pred_fallthru
      _
    // Predicated region
    $region30: #{tpu_custom_call.1} parent=1 // pred_check
      _
    $region31: #{tpu_custom_call.1} parent=1 // pred_check_branch
      %1595 = sbr.rel (0) target = $region33
    $region32: #{tpu_custom_call.1} parent=1 // pred_region
      %1597 = dma.done [#allocation4], 512
    $region33: #{tpu_custom_call.1} parent=1 // pred_fallthru
      _
    %1598 = vsyncpa [#allocation3], 1
    %1599 = vsyncpa [#allocation4], 1
    %1600 = vsyncpa [#allocation5], 1
    %1601 = vsyncpa [#allocation7], 1

</llo_original>
